<compile_context>
chip_gen: v6e
topology: v6e:2x2x1
jax: 0.10.0
libtpu: 0.0.40
codegen_flags: <defaults>
</compile_context>

<pallas_src>
import functools
import math

import jax
import jax.numpy as jnp
from jax.experimental import pallas as pl
from jax.experimental.pallas import tpu as pltpu

# ----------------- small synthetic "BERT" config -----------------
VOCAB = 100
TYPE_VOCAB = 2
MAX_POS = 16
HIDDEN = 32
N_LAYERS = 2
N_HEADS = 2
HEAD_DIM = HIDDEN // N_HEADS
INTER = 64
N_CLASSES = 3
LN_EPS = 1e-12
INIT_STD = 0.02


# ----------------- in-kernel helper math (pure value functions) -----------------
def _ln(x, g, b):
    mu = jnp.mean(x, axis=-1, keepdims=True)
    d = x - mu
    var = jnp.mean(d * d, axis=-1, keepdims=True)
    return d * jax.lax.rsqrt(var + LN_EPS) * g + b


def _gelu(y):
    # tanh-approximation GELU (BERT intermediate activation)
    c = math.sqrt(2.0 / math.pi)
    return 0.5 * y * (1.0 + jnp.tanh(c * (y + 0.044715 * y * y * y)))


def _mha(x, qkv_w, qkv_b, add_mask, B, S):
    """Multi-head self-attention on a [B*S, H] activation, fully in-kernel.

    Head split is a static lane slice; per-(batch, head) matmuls are fully
    unrolled (B*nH = 4 tiny 2-D matmuls), outputs re-packed with concatenate.
    """
    qkv = jnp.dot(x, qkv_w, preferred_element_type=jnp.float32) + qkv_b   # (B*S, 3H)
    q = qkv[:, 0 * HIDDEN:1 * HIDDEN]
    k = qkv[:, 1 * HIDDEN:2 * HIDDEN]
    v = qkv[:, 2 * HIDDEN:3 * HIDDEN]
    scale = 1.0 / math.sqrt(HEAD_DIM)

    rows = []
    for b in range(B):
        qb = q[b * S:(b + 1) * S, :]
        kb = k[b * S:(b + 1) * S, :]
        vb = v[b * S:(b + 1) * S, :]
        mb = add_mask[b:b + 1, :]                                         # (1, S)
        heads = []
        for h in range(N_HEADS):
            lo, hi = h * HEAD_DIM, (h + 1) * HEAD_DIM
            qh, kh, vh = qb[:, lo:hi], kb[:, lo:hi], vb[:, lo:hi]          # (S, dH)
            s = jax.lax.dot_general(qh, kh, (((1,), (1,)), ((), ())),
                                    preferred_element_type=jnp.float32) * scale
            s = s + mb                                                     # (S,S)+(1,S)
            s = s - jnp.max(s, axis=-1, keepdims=True)
            p = jnp.exp(s)
            p = p * pl.reciprocal(jnp.sum(p, axis=-1, keepdims=True), approx=True)
            heads.append(jnp.dot(p, vh, preferred_element_type=jnp.float32))
        rows.append(jnp.concatenate(heads, axis=1))                        # (S, H)
    return jnp.concatenate(rows, axis=0)                                   # (B*S, H)


# ----------------- the single fused kernel -----------------
def _bert_fused_kernel(ids_ref, mask_ref, word_emb_ref, static_emb_ref,
                       emb_g_ref, emb_b_ref,
                       qkv_w_ref, qkv_b_ref, ao_w_ref, ao_b_ref,
                       ln1_g_ref, ln1_b_ref,
                       inter_w_ref, inter_b_ref, ffn_w_ref, ffn_b_ref,
                       ln2_g_ref, ln2_b_ref,
                       pool_w_ref, pool_b_ref, out_w_ref, out_b_ref,
                       logits_ref, *, B, S):
    n = B * S

    # --- embeddings: one-hot gather on MXU + static(pos+type) + LayerNorm ---
    ids = ids_ref[...]                                                    # (n, 1) int32
    iota = jax.lax.broadcasted_iota(jnp.int32, (n, VOCAB), 1)
    onehot = (ids == iota).astype(jnp.float32)
    emb = jnp.dot(onehot, word_emb_ref[...], preferred_element_type=jnp.float32)
    emb = emb + jnp.concatenate([static_emb_ref[...]] * B, axis=0)        # (n, H)
    x = _ln(emb, emb_g_ref[...], emb_b_ref[...])

    # additive attention mask: 0 for attended keys, -10000 for padded keys
    add_mask = (1.0 - mask_ref[...]) * -10000.0                           # (B, S)

    # --- encoder layers (fully unrolled, weights VMEM-resident) ---
    for l in range(N_LAYERS):
        ctx = _mha(x, qkv_w_ref[l], qkv_b_ref[l], add_mask, B, S)
        attn_out = (jnp.dot(ctx, ao_w_ref[l], preferred_element_type=jnp.float32)
                    + ao_b_ref[l])
        x = _ln(x + attn_out, ln1_g_ref[l], ln1_b_ref[l])                 # fused residual+LN

        inter = _gelu(jnp.dot(x, inter_w_ref[l], preferred_element_type=jnp.float32)
                      + inter_b_ref[l])
        ffn = (jnp.dot(inter, ffn_w_ref[l], preferred_element_type=jnp.float32)
               + ffn_b_ref[l])
        x = _ln(x + ffn, ln2_g_ref[l], ln2_b_ref[l])                      # fused residual+LN

    # --- pooler: tanh(W @ hidden[:, 0, :]) ---
    cls = jnp.concatenate([x[b * S:b * S + 1, :] for b in range(B)], axis=0)   # (B, H)
    pooled = jnp.tanh(jnp.dot(cls, pool_w_ref[...], preferred_element_type=jnp.float32)
                      + pool_b_ref[...])

    # --- self.drop = nn.Dropout(0.3): identity in eval/inference mode ---
    # TODO(synk): training-mode dropout would use pltpu.prng_* with inverted-scale masking

    # --- self.out(output) ---
    logits = (jnp.dot(pooled, out_w_ref[...], preferred_element_type=jnp.float32)
              + out_b_ref[...])
    logits_ref[...] = logits.astype(logits_ref.dtype)


def _full_spec(shape):
    nd = len(shape)
    return pl.BlockSpec(shape, lambda i, _nd=nd: (0,) * _nd)


# ----------------- deterministic parameter init (pre-fused layout) -----------------
def _dense(key, fan_in, fan_out):
    w = jax.random.normal(key, (fan_in, fan_out), jnp.float32) * INIT_STD
    b = jnp.zeros((1, fan_out), jnp.float32)
    return w, b


def init_params(key):
    keys = jax.random.split(key, 5 + N_LAYERS)
    params = {
        "word_emb": jax.random.normal(keys[0], (VOCAB, HIDDEN), jnp.float32) * INIT_STD,
        "pos_emb": jax.random.normal(keys[1], (MAX_POS, HIDDEN), jnp.float32) * INIT_STD,
        "type_emb": jax.random.normal(keys[2], (TYPE_VOCAB, HIDDEN), jnp.float32) * INIT_STD,
        "emb_ln_g": jnp.ones((1, HIDDEN), jnp.float32),
        "emb_ln_b": jnp.zeros((1, HIDDEN), jnp.float32),
    }
    params["pool_w"], params["pool_b"] = _dense(keys[3], HIDDEN, HIDDEN)
    params["out_w"], params["out_b"] = _dense(keys[4], HIDDEN, N_CLASSES)

    qkv_w, qkv_b, ao_w, ao_b = [], [], [], []
    ln1_g, ln1_b, inter_w, inter_b = [], [], [], []
    ffn_w, ffn_b, ln2_g, ln2_b = [], [], [], []
    for l in range(N_LAYERS):
        lk = jax.random.split(keys[5 + l], 6)
        qw, qb = _dense(lk[0], HIDDEN, HIDDEN)
        kw, kb = _dense(lk[1], HIDDEN, HIDDEN)
        vw, vb = _dense(lk[2], HIDDEN, HIDDEN)
        qkv_w.append(jnp.concatenate([qw, kw, vw], axis=1))        # (H, 3H) fused QKV
        qkv_b.append(jnp.concatenate([qb, kb, vb], axis=1))        # (1, 3H)
        w, b = _dense(lk[3], HIDDEN, HIDDEN)
        ao_w.append(w); ao_b.append(b)
        ln1_g.append(jnp.ones((1, HIDDEN), jnp.float32))
        ln1_b.append(jnp.zeros((1, HIDDEN), jnp.float32))
        w, b = _dense(lk[4], HIDDEN, INTER)
        inter_w.append(w); inter_b.append(b)
        w, b = _dense(lk[5], INTER, HIDDEN)
        ffn_w.append(w); ffn_b.append(b)
        ln2_g.append(jnp.ones((1, HIDDEN), jnp.float32))
        ln2_b.append(jnp.zeros((1, HIDDEN), jnp.float32))

    stack = lambda xs: jnp.stack(xs, axis=0)
    params.update({
        "qkv_w": stack(qkv_w), "qkv_b": stack(qkv_b),
        "ao_w": stack(ao_w), "ao_b": stack(ao_b),
        "ln1_g": stack(ln1_g), "ln1_b": stack(ln1_b),
        "inter_w": stack(inter_w), "inter_b": stack(inter_b),
        "ffn_w": stack(ffn_w), "ffn_b": stack(ffn_b),
        "ln2_g": stack(ln2_g), "ln2_b": stack(ln2_b),
    })
    return params


# ----------------- forward pass (mirrors SentimentClassifier.forward) -----------------
def sentiment_classifier_forward(params, input_ids, attention_mask):
    B, S = input_ids.shape

    # parameter-only precompute: positional + token-type (all type 0) rows
    static_emb = params["pos_emb"][:S, :] + params["type_emb"][0][None, :]   # (S, H)

    ids2d = input_ids.reshape(B * S, 1).astype(jnp.int32)
    maskf = attention_mask.astype(jnp.float32)

    args = [
        ids2d, maskf, params["word_emb"], static_emb,
        params["emb_ln_g"], params["emb_ln_b"],
        params["qkv_w"], params["qkv_b"], params["ao_w"], params["ao_b"],
        params["ln1_g"], params["ln1_b"],
        params["inter_w"], params["inter_b"], params["ffn_w"], params["ffn_b"],
        params["ln2_g"], params["ln2_b"],
        params["pool_w"], params["pool_b"], params["out_w"], params["out_b"],
    ]

    kernel = functools.partial(_bert_fused_kernel, B=B, S=S)
    logits = pl.pallas_call(
        kernel,
        out_shape=jax.ShapeDtypeStruct((B, N_CLASSES), jnp.float32),
        grid=(1,),
        in_specs=[_full_spec(a.shape) for a in args],
        out_specs=pl.BlockSpec((B, N_CLASSES), lambda i: (0, 0)),
        compiler_params=pltpu.CompilerParams(dimension_semantics=("arbitrary",)),
    )(*args)
    return logits


if __name__ == "__main__":
    key = jax.random.PRNGKey(0)
    k_params, k_ids = jax.random.split(key)

    params = init_params(k_params)

    B, S = 2, 8
    input_ids = jax.random.randint(k_ids, (B, S), 0, VOCAB, dtype=jnp.int32)
    attention_mask = jnp.array([[1, 1, 1, 1, 1, 1, 1, 1],
                                [1, 1, 1, 1, 1, 1, 0, 0]], dtype=jnp.int32)

    logits = sentiment_classifier_forward(params, input_ids, attention_mask)
    logits = jax.block_until_ready(logits)

    assert logits.shape == (B, N_CLASSES)
    assert bool(jnp.all(jnp.isfinite(logits)))
    print("KERNEL_OK")
</pallas_src>

<mosaic_0001>
module attributes {stable_mosaic.version = 11 : i64} {
  func.func @_bert_fused_kernel(%arg0: i32, %arg1: memref<16x1xi32, #tpu.memory_space<vmem>>, %arg2: memref<2x8xf32, #tpu.memory_space<vmem>>, %arg3: memref<100x32xf32, #tpu.memory_space<vmem>>, %arg4: memref<8x32xf32, #tpu.memory_space<vmem>>, %arg5: memref<1x32xf32, #tpu.memory_space<vmem>>, %arg6: memref<1x32xf32, #tpu.memory_space<vmem>>, %arg7: memref<2x32x96xf32, #tpu.memory_space<vmem>>, %arg8: memref<2x1x96xf32, #tpu.memory_space<vmem>>, %arg9: memref<2x32x32xf32, #tpu.memory_space<vmem>>, %arg10: memref<2x1x32xf32, #tpu.memory_space<vmem>>, %arg11: memref<2x1x32xf32, #tpu.memory_space<vmem>>, %arg12: memref<2x1x32xf32, #tpu.memory_space<vmem>>, %arg13: memref<2x32x64xf32, #tpu.memory_space<vmem>>, %arg14: memref<2x1x64xf32, #tpu.memory_space<vmem>>, %arg15: memref<2x64x32xf32, #tpu.memory_space<vmem>>, %arg16: memref<2x1x32xf32, #tpu.memory_space<vmem>>, %arg17: memref<2x1x32xf32, #tpu.memory_space<vmem>>, %arg18: memref<2x1x32xf32, #tpu.memory_space<vmem>>, %arg19: memref<32x32xf32, #tpu.memory_space<vmem>>, %arg20: memref<1x32xf32, #tpu.memory_space<vmem>>, %arg21: memref<32x3xf32, #tpu.memory_space<vmem>>, %arg22: memref<1x3xf32, #tpu.memory_space<vmem>>, %arg23: memref<2x3xf32, #tpu.memory_space<vmem>>) attributes {dimension_semantics = [#tpu.dimension_semantics<arbitrary>], iteration_bounds = array<i64: 1>, scalar_prefetch = 0 : i64, scratch_operands = 0 : i64, tpu.core_type = #tpu.core_type<tc>, window_params = [{pipeline_mode = #tpu.pipeline_mode<synchronous>, transform_indices = @transform_0, window_bounds = array<i64: 16, 1>}, {pipeline_mode = #tpu.pipeline_mode<synchronous>, transform_indices = @transform_1, window_bounds = array<i64: 2, 8>}, {pipeline_mode = #tpu.pipeline_mode<synchronous>, transform_indices = @transform_2, window_bounds = array<i64: 100, 32>}, {pipeline_mode = #tpu.pipeline_mode<synchronous>, transform_indices = @transform_3, window_bounds = array<i64: 8, 32>}, {pipeline_mode = #tpu.pipeline_mode<synchronous>, transform_indices = @transform_4, window_bounds = array<i64: 1, 32>}, {pipeline_mode = #tpu.pipeline_mode<synchronous>, transform_indices = @transform_5, window_bounds = array<i64: 1, 32>}, {pipeline_mode = #tpu.pipeline_mode<synchronous>, transform_indices = @transform_6, window_bounds = array<i64: 2, 32, 96>}, {pipeline_mode = #tpu.pipeline_mode<synchronous>, transform_indices = @transform_7, window_bounds = array<i64: 2, 1, 96>}, {pipeline_mode = #tpu.pipeline_mode<synchronous>, transform_indices = @transform_8, window_bounds = array<i64: 2, 32, 32>}, {pipeline_mode = #tpu.pipeline_mode<synchronous>, transform_indices = @transform_9, window_bounds = array<i64: 2, 1, 32>}, {pipeline_mode = #tpu.pipeline_mode<synchronous>, transform_indices = @transform_10, window_bounds = array<i64: 2, 1, 32>}, {pipeline_mode = #tpu.pipeline_mode<synchronous>, transform_indices = @transform_11, window_bounds = array<i64: 2, 1, 32>}, {pipeline_mode = #tpu.pipeline_mode<synchronous>, transform_indices = @transform_12, window_bounds = array<i64: 2, 32, 64>}, {pipeline_mode = #tpu.pipeline_mode<synchronous>, transform_indices = @transform_13, window_bounds = array<i64: 2, 1, 64>}, {pipeline_mode = #tpu.pipeline_mode<synchronous>, transform_indices = @transform_14, window_bounds = array<i64: 2, 64, 32>}, {pipeline_mode = #tpu.pipeline_mode<synchronous>, transform_indices = @transform_15, window_bounds = array<i64: 2, 1, 32>}, {pipeline_mode = #tpu.pipeline_mode<synchronous>, transform_indices = @transform_16, window_bounds = array<i64: 2, 1, 32>}, {pipeline_mode = #tpu.pipeline_mode<synchronous>, transform_indices = @transform_17, window_bounds = array<i64: 2, 1, 32>}, {pipeline_mode = #tpu.pipeline_mode<synchronous>, transform_indices = @transform_18, window_bounds = array<i64: 32, 32>}, {pipeline_mode = #tpu.pipeline_mode<synchronous>, transform_indices = @transform_19, window_bounds = array<i64: 1, 32>}, {pipeline_mode = #tpu.pipeline_mode<synchronous>, transform_indices = @transform_20, window_bounds = array<i64: 32, 3>}, {pipeline_mode = #tpu.pipeline_mode<synchronous>, transform_indices = @transform_21, window_bounds = array<i64: 1, 3>}, {pipeline_mode = #tpu.pipeline_mode<synchronous>, transform_indices = @transform_22, window_bounds = array<i64: 2, 3>}]} {
    %c0 = arith.constant 0 : index
    %c0_0 = arith.constant 0 : index
    %0 = vector.load %arg1[%c0, %c0_0] : memref<16x1xi32, #tpu.memory_space<vmem>>, vector<16x1xi32>
    %1 = tpu.iota {dimensions = array<i32: 1>} : vector<16x100xi32>
    %2 = vector.broadcast %0 : vector<16x1xi32> to vector<16x100xi32>
    %3 = arith.cmpi eq, %2, %1 : vector<16x100xi32>
    %4 = arith.extui %3 : vector<16x100xi1> to vector<16x100xi32>
    %5 = arith.sitofp %4 : vector<16x100xi32> to vector<16x100xf32>
    %c0_1 = arith.constant 0 : index
    %c0_2 = arith.constant 0 : index
    %6 = vector.load %arg3[%c0_1, %c0_2] : memref<100x32xf32, #tpu.memory_space<vmem>>, vector<100x32xf32>
    %cst = arith.constant dense<0.000000e+00> : vector<16x32xf32>
    %7 = tpu.matmul %5, %6, %cst {dimension_numbers = #tpu.dot_dimension_numbers<[1], [0], [0], [1], [0, 0, 1, 1], [], []>} : vector<16x100xf32>, vector<100x32xf32>, vector<16x32xf32> -> vector<16x32xf32>
    %c0_3 = arith.constant 0 : index
    %c0_4 = arith.constant 0 : index
    %8 = vector.load %arg4[%c0_3, %c0_4] : memref<8x32xf32, #tpu.memory_space<vmem>>, vector<8x32xf32>
    %9 = tpu.concatenate %8, %8 in 0 : vector<8x32xf32>, vector<8x32xf32> -> vector<16x32xf32>
    %10 = arith.addf %7, %9 : vector<16x32xf32>
    %c0_5 = arith.constant 0 : index
    %c0_6 = arith.constant 0 : index
    %11 = vector.load %arg5[%c0_5, %c0_6] : memref<1x32xf32, #tpu.memory_space<vmem>>, vector<1x32xf32>
    %c0_7 = arith.constant 0 : index
    %c0_8 = arith.constant 0 : index
    %12 = vector.load %arg6[%c0_7, %c0_8] : memref<1x32xf32, #tpu.memory_space<vmem>>, vector<1x32xf32>
    %cst_9 = arith.constant dense<0.000000e+00> : vector<16xf32>
    %13 = vector.multi_reduction <add>, %10, %cst_9 [1] : vector<16x32xf32> to vector<16xf32>
    %14 = vector.shape_cast %13 : vector<16xf32> to vector<16x1xf32>
    %cst_10 = arith.constant 3.200000e+01 : f32
    %15 = vector.broadcast %cst_10 : f32 to vector<16x1xf32>
    %16 = arith.divf %14, %15 : vector<16x1xf32>
    %17 = vector.broadcast %16 : vector<16x1xf32> to vector<16x32xf32>
    %18 = arith.subf %10, %17 : vector<16x32xf32>
    %19 = arith.mulf %18, %18 : vector<16x32xf32>
    %cst_11 = arith.constant dense<0.000000e+00> : vector<16xf32>
    %20 = vector.multi_reduction <add>, %19, %cst_11 [1] : vector<16x32xf32> to vector<16xf32>
    %21 = vector.shape_cast %20 : vector<16xf32> to vector<16x1xf32>
    %cst_12 = arith.constant 3.200000e+01 : f32
    %22 = vector.broadcast %cst_12 : f32 to vector<16x1xf32>
    %23 = arith.divf %21, %22 : vector<16x1xf32>
    %cst_13 = arith.constant 9.99999996E-13 : f32
    %24 = vector.broadcast %cst_13 : f32 to vector<16x1xf32>
    %25 = arith.addf %23, %24 : vector<16x1xf32>
    %26 = math.rsqrt %25 : vector<16x1xf32>
    %27 = vector.broadcast %26 : vector<16x1xf32> to vector<16x32xf32>
    %28 = arith.mulf %18, %27 : vector<16x32xf32>
    %29 = vector.broadcast %11 : vector<1x32xf32> to vector<16x32xf32>
    %30 = arith.mulf %28, %29 : vector<16x32xf32>
    %31 = vector.broadcast %12 : vector<1x32xf32> to vector<16x32xf32>
    %32 = arith.addf %30, %31 : vector<16x32xf32>
    %c0_14 = arith.constant 0 : index
    %c0_15 = arith.constant 0 : index
    %33 = vector.load %arg2[%c0_14, %c0_15] : memref<2x8xf32, #tpu.memory_space<vmem>>, vector<2x8xf32>
    %cst_16 = arith.constant 1.000000e+00 : f32
    %34 = vector.broadcast %cst_16 : f32 to vector<2x8xf32>
    %35 = arith.subf %34, %33 : vector<2x8xf32>
    %cst_17 = arith.constant -1.000000e+04 : f32
    %36 = vector.broadcast %cst_17 : f32 to vector<2x8xf32>
    %37 = arith.mulf %35, %36 : vector<2x8xf32>
    %c0_18 = arith.constant 0 : index
    %c0_19 = arith.constant 0 : index
    %c0_20 = arith.constant 0 : index
    %38 = vector.load %arg7[%c0_18, %c0_19, %c0_20] : memref<2x32x96xf32, #tpu.memory_space<vmem>>, vector<1x32x96xf32>
    %39 = vector.shape_cast %38 : vector<1x32x96xf32> to vector<32x96xf32>
    %c0_21 = arith.constant 0 : index
    %c0_22 = arith.constant 0 : index
    %c0_23 = arith.constant 0 : index
    %40 = vector.load %arg8[%c0_21, %c0_22, %c0_23] : memref<2x1x96xf32, #tpu.memory_space<vmem>>, vector<1x1x96xf32>
    %41 = vector.shape_cast %40 : vector<1x1x96xf32> to vector<1x96xf32>
    %cst_24 = arith.constant dense<0.000000e+00> : vector<16x96xf32>
    %42 = tpu.matmul %32, %39, %cst_24 {dimension_numbers = #tpu.dot_dimension_numbers<[1], [0], [0], [1], [0, 0, 1, 1], [], []>} : vector<16x32xf32>, vector<32x96xf32>, vector<16x96xf32> -> vector<16x96xf32>
    %43 = vector.broadcast %41 : vector<1x96xf32> to vector<16x96xf32>
    %44 = arith.addf %42, %43 : vector<16x96xf32>
    %45 = vector.extract_strided_slice %44 {offsets = [0, 0], sizes = [16, 32], strides = [1, 1]} : vector<16x96xf32> to vector<16x32xf32>
    %46 = vector.extract_strided_slice %44 {offsets = [0, 32], sizes = [16, 32], strides = [1, 1]} : vector<16x96xf32> to vector<16x32xf32>
    %47 = vector.extract_strided_slice %44 {offsets = [0, 64], sizes = [16, 32], strides = [1, 1]} : vector<16x96xf32> to vector<16x32xf32>
    %48 = vector.extract_strided_slice %45 {offsets = [0, 0], sizes = [8, 32], strides = [1, 1]} : vector<16x32xf32> to vector<8x32xf32>
    %49 = vector.extract_strided_slice %46 {offsets = [0, 0], sizes = [8, 32], strides = [1, 1]} : vector<16x32xf32> to vector<8x32xf32>
    %50 = vector.extract_strided_slice %47 {offsets = [0, 0], sizes = [8, 32], strides = [1, 1]} : vector<16x32xf32> to vector<8x32xf32>
    %51 = vector.extract_strided_slice %37 {offsets = [0, 0], sizes = [1, 8], strides = [1, 1]} : vector<2x8xf32> to vector<1x8xf32>
    %52 = vector.extract_strided_slice %48 {offsets = [0, 0], sizes = [8, 16], strides = [1, 1]} : vector<8x32xf32> to vector<8x16xf32>
    %53 = vector.extract_strided_slice %49 {offsets = [0, 0], sizes = [8, 16], strides = [1, 1]} : vector<8x32xf32> to vector<8x16xf32>
    %54 = vector.extract_strided_slice %50 {offsets = [0, 0], sizes = [8, 16], strides = [1, 1]} : vector<8x32xf32> to vector<8x16xf32>
    %cst_25 = arith.constant dense<0.000000e+00> : vector<8x8xf32>
    %55 = tpu.matmul %52, %53, %cst_25 {dimension_numbers = #tpu.dot_dimension_numbers<[1], [1], [0], [0], [0, 0, 1, 0], [], []>} : vector<8x16xf32>, vector<8x16xf32>, vector<8x8xf32> -> vector<8x8xf32>
    %cst_26 = arith.constant 2.500000e-01 : f32
    %56 = vector.broadcast %cst_26 : f32 to vector<8x8xf32>
    %57 = arith.mulf %55, %56 : vector<8x8xf32>
    %58 = vector.broadcast %51 : vector<1x8xf32> to vector<8x8xf32>
    %59 = arith.addf %57, %58 : vector<8x8xf32>
    %cst_27 = arith.constant dense<0xFF800000> : vector<8xf32>
    %60 = vector.multi_reduction <maximumf>, %59, %cst_27 [1] : vector<8x8xf32> to vector<8xf32>
    %61 = vector.shape_cast %60 : vector<8xf32> to vector<8x1xf32>
    %62 = vector.broadcast %61 : vector<8x1xf32> to vector<8x8xf32>
    %63 = arith.subf %59, %62 : vector<8x8xf32>
    %64 = math.exp %63 : vector<8x8xf32>
    %cst_28 = arith.constant dense<0.000000e+00> : vector<8xf32>
    %65 = vector.multi_reduction <add>, %64, %cst_28 [1] : vector<8x8xf32> to vector<8xf32>
    %66 = vector.shape_cast %65 : vector<8xf32> to vector<8x1xf32>
    %67 = tpu.reciprocal %66 {approx = true} : vector<8x1xf32> -> vector<8x1xf32>
    %68 = vector.broadcast %67 : vector<8x1xf32> to vector<8x8xf32>
    %69 = arith.mulf %64, %68 : vector<8x8xf32>
    %cst_29 = arith.constant dense<0.000000e+00> : vector<8x16xf32>
    %70 = tpu.matmul %69, %54, %cst_29 {dimension_numbers = #tpu.dot_dimension_numbers<[1], [0], [0], [1], [0, 0, 1, 1], [], []>} : vector<8x8xf32>, vector<8x16xf32>, vector<8x16xf32> -> vector<8x16xf32>
    %71 = vector.extract_strided_slice %48 {offsets = [0, 16], sizes = [8, 16], strides = [1, 1]} : vector<8x32xf32> to vector<8x16xf32>
    %72 = vector.extract_strided_slice %49 {offsets = [0, 16], sizes = [8, 16], strides = [1, 1]} : vector<8x32xf32> to vector<8x16xf32>
    %73 = vector.extract_strided_slice %50 {offsets = [0, 16], sizes = [8, 16], strides = [1, 1]} : vector<8x32xf32> to vector<8x16xf32>
    %cst_30 = arith.constant dense<0.000000e+00> : vector<8x8xf32>
    %74 = tpu.matmul %71, %72, %cst_30 {dimension_numbers = #tpu.dot_dimension_numbers<[1], [1], [0], [0], [0, 0, 1, 0], [], []>} : vector<8x16xf32>, vector<8x16xf32>, vector<8x8xf32> -> vector<8x8xf32>
    %cst_31 = arith.constant 2.500000e-01 : f32
    %75 = vector.broadcast %cst_31 : f32 to vector<8x8xf32>
    %76 = arith.mulf %74, %75 : vector<8x8xf32>
    %77 = vector.broadcast %51 : vector<1x8xf32> to vector<8x8xf32>
    %78 = arith.addf %76, %77 : vector<8x8xf32>
    %cst_32 = arith.constant dense<0xFF800000> : vector<8xf32>
    %79 = vector.multi_reduction <maximumf>, %78, %cst_32 [1] : vector<8x8xf32> to vector<8xf32>
    %80 = vector.shape_cast %79 : vector<8xf32> to vector<8x1xf32>
    %81 = vector.broadcast %80 : vector<8x1xf32> to vector<8x8xf32>
    %82 = arith.subf %78, %81 : vector<8x8xf32>
    %83 = math.exp %82 : vector<8x8xf32>
    %cst_33 = arith.constant dense<0.000000e+00> : vector<8xf32>
    %84 = vector.multi_reduction <add>, %83, %cst_33 [1] : vector<8x8xf32> to vector<8xf32>
    %85 = vector.shape_cast %84 : vector<8xf32> to vector<8x1xf32>
    %86 = tpu.reciprocal %85 {approx = true} : vector<8x1xf32> -> vector<8x1xf32>
    %87 = vector.broadcast %86 : vector<8x1xf32> to vector<8x8xf32>
    %88 = arith.mulf %83, %87 : vector<8x8xf32>
    %cst_34 = arith.constant dense<0.000000e+00> : vector<8x16xf32>
    %89 = tpu.matmul %88, %73, %cst_34 {dimension_numbers = #tpu.dot_dimension_numbers<[1], [0], [0], [1], [0, 0, 1, 1], [], []>} : vector<8x8xf32>, vector<8x16xf32>, vector<8x16xf32> -> vector<8x16xf32>
    %90 = tpu.concatenate %70, %89 in 1 : vector<8x16xf32>, vector<8x16xf32> -> vector<8x32xf32>
    %91 = vector.extract_strided_slice %45 {offsets = [8, 0], sizes = [8, 32], strides = [1, 1]} : vector<16x32xf32> to vector<8x32xf32>
    %92 = vector.extract_strided_slice %46 {offsets = [8, 0], sizes = [8, 32], strides = [1, 1]} : vector<16x32xf32> to vector<8x32xf32>
    %93 = vector.extract_strided_slice %47 {offsets = [8, 0], sizes = [8, 32], strides = [1, 1]} : vector<16x32xf32> to vector<8x32xf32>
    %94 = vector.extract_strided_slice %37 {offsets = [1, 0], sizes = [1, 8], strides = [1, 1]} : vector<2x8xf32> to vector<1x8xf32>
    %95 = vector.extract_strided_slice %91 {offsets = [0, 0], sizes = [8, 16], strides = [1, 1]} : vector<8x32xf32> to vector<8x16xf32>
    %96 = vector.extract_strided_slice %92 {offsets = [0, 0], sizes = [8, 16], strides = [1, 1]} : vector<8x32xf32> to vector<8x16xf32>
    %97 = vector.extract_strided_slice %93 {offsets = [0, 0], sizes = [8, 16], strides = [1, 1]} : vector<8x32xf32> to vector<8x16xf32>
    %cst_35 = arith.constant dense<0.000000e+00> : vector<8x8xf32>
    %98 = tpu.matmul %95, %96, %cst_35 {dimension_numbers = #tpu.dot_dimension_numbers<[1], [1], [0], [0], [0, 0, 1, 0], [], []>} : vector<8x16xf32>, vector<8x16xf32>, vector<8x8xf32> -> vector<8x8xf32>
    %cst_36 = arith.constant 2.500000e-01 : f32
    %99 = vector.broadcast %cst_36 : f32 to vector<8x8xf32>
    %100 = arith.mulf %98, %99 : vector<8x8xf32>
    %101 = vector.broadcast %94 : vector<1x8xf32> to vector<8x8xf32>
    %102 = arith.addf %100, %101 : vector<8x8xf32>
    %cst_37 = arith.constant dense<0xFF800000> : vector<8xf32>
    %103 = vector.multi_reduction <maximumf>, %102, %cst_37 [1] : vector<8x8xf32> to vector<8xf32>
    %104 = vector.shape_cast %103 : vector<8xf32> to vector<8x1xf32>
    %105 = vector.broadcast %104 : vector<8x1xf32> to vector<8x8xf32>
    %106 = arith.subf %102, %105 : vector<8x8xf32>
    %107 = math.exp %106 : vector<8x8xf32>
    %cst_38 = arith.constant dense<0.000000e+00> : vector<8xf32>
    %108 = vector.multi_reduction <add>, %107, %cst_38 [1] : vector<8x8xf32> to vector<8xf32>
    %109 = vector.shape_cast %108 : vector<8xf32> to vector<8x1xf32>
    %110 = tpu.reciprocal %109 {approx = true} : vector<8x1xf32> -> vector<8x1xf32>
    %111 = vector.broadcast %110 : vector<8x1xf32> to vector<8x8xf32>
    %112 = arith.mulf %107, %111 : vector<8x8xf32>
    %cst_39 = arith.constant dense<0.000000e+00> : vector<8x16xf32>
    %113 = tpu.matmul %112, %97, %cst_39 {dimension_numbers = #tpu.dot_dimension_numbers<[1], [0], [0], [1], [0, 0, 1, 1], [], []>} : vector<8x8xf32>, vector<8x16xf32>, vector<8x16xf32> -> vector<8x16xf32>
    %114 = vector.extract_strided_slice %91 {offsets = [0, 16], sizes = [8, 16], strides = [1, 1]} : vector<8x32xf32> to vector<8x16xf32>
    %115 = vector.extract_strided_slice %92 {offsets = [0, 16], sizes = [8, 16], strides = [1, 1]} : vector<8x32xf32> to vector<8x16xf32>
    %116 = vector.extract_strided_slice %93 {offsets = [0, 16], sizes = [8, 16], strides = [1, 1]} : vector<8x32xf32> to vector<8x16xf32>
    %cst_40 = arith.constant dense<0.000000e+00> : vector<8x8xf32>
    %117 = tpu.matmul %114, %115, %cst_40 {dimension_numbers = #tpu.dot_dimension_numbers<[1], [1], [0], [0], [0, 0, 1, 0], [], []>} : vector<8x16xf32>, vector<8x16xf32>, vector<8x8xf32> -> vector<8x8xf32>
    %cst_41 = arith.constant 2.500000e-01 : f32
    %118 = vector.broadcast %cst_41 : f32 to vector<8x8xf32>
    %119 = arith.mulf %117, %118 : vector<8x8xf32>
    %120 = vector.broadcast %94 : vector<1x8xf32> to vector<8x8xf32>
    %121 = arith.addf %119, %120 : vector<8x8xf32>
    %cst_42 = arith.constant dense<0xFF800000> : vector<8xf32>
    %122 = vector.multi_reduction <maximumf>, %121, %cst_42 [1] : vector<8x8xf32> to vector<8xf32>
    %123 = vector.shape_cast %122 : vector<8xf32> to vector<8x1xf32>
    %124 = vector.broadcast %123 : vector<8x1xf32> to vector<8x8xf32>
    %125 = arith.subf %121, %124 : vector<8x8xf32>
    %126 = math.exp %125 : vector<8x8xf32>
    %cst_43 = arith.constant dense<0.000000e+00> : vector<8xf32>
    %127 = vector.multi_reduction <add>, %126, %cst_43 [1] : vector<8x8xf32> to vector<8xf32>
    %128 = vector.shape_cast %127 : vector<8xf32> to vector<8x1xf32>
    %129 = tpu.reciprocal %128 {approx = true} : vector<8x1xf32> -> vector<8x1xf32>
    %130 = vector.broadcast %129 : vector<8x1xf32> to vector<8x8xf32>
    %131 = arith.mulf %126, %130 : vector<8x8xf32>
    %cst_44 = arith.constant dense<0.000000e+00> : vector<8x16xf32>
    %132 = tpu.matmul %131, %116, %cst_44 {dimension_numbers = #tpu.dot_dimension_numbers<[1], [0], [0], [1], [0, 0, 1, 1], [], []>} : vector<8x8xf32>, vector<8x16xf32>, vector<8x16xf32> -> vector<8x16xf32>
    %133 = tpu.concatenate %113, %132 in 1 : vector<8x16xf32>, vector<8x16xf32> -> vector<8x32xf32>
    %134 = tpu.concatenate %90, %133 in 0 : vector<8x32xf32>, vector<8x32xf32> -> vector<16x32xf32>
    %c0_45 = arith.constant 0 : index
    %c0_46 = arith.constant 0 : index
    %c0_47 = arith.constant 0 : index
    %135 = vector.load %arg9[%c0_45, %c0_46, %c0_47] : memref<2x32x32xf32, #tpu.memory_space<vmem>>, vector<1x32x32xf32>
    %136 = vector.shape_cast %135 : vector<1x32x32xf32> to vector<32x32xf32>
    %cst_48 = arith.constant dense<0.000000e+00> : vector<16x32xf32>
    %137 = tpu.matmul %134, %136, %cst_48 {dimension_numbers = #tpu.dot_dimension_numbers<[1], [0], [0], [1], [0, 0, 1, 1], [], []>} : vector<16x32xf32>, vector<32x32xf32>, vector<16x32xf32> -> vector<16x32xf32>
    %c0_49 = arith.constant 0 : index
    %c0_50 = arith.constant 0 : index
    %c0_51 = arith.constant 0 : index
    %138 = vector.load %arg10[%c0_49, %c0_50, %c0_51] : memref<2x1x32xf32, #tpu.memory_space<vmem>>, vector<1x1x32xf32>
    %139 = vector.shape_cast %138 : vector<1x1x32xf32> to vector<1x32xf32>
    %140 = vector.broadcast %139 : vector<1x32xf32> to vector<16x32xf32>
    %141 = arith.addf %137, %140 : vector<16x32xf32>
    %142 = arith.addf %32, %141 : vector<16x32xf32>
    %c0_52 = arith.constant 0 : index
    %c0_53 = arith.constant 0 : index
    %c0_54 = arith.constant 0 : index
    %143 = vector.load %arg11[%c0_52, %c0_53, %c0_54] : memref<2x1x32xf32, #tpu.memory_space<vmem>>, vector<1x1x32xf32>
    %144 = vector.shape_cast %143 : vector<1x1x32xf32> to vector<1x32xf32>
    %c0_55 = arith.constant 0 : index
    %c0_56 = arith.constant 0 : index
    %c0_57 = arith.constant 0 : index
    %145 = vector.load %arg12[%c0_55, %c0_56, %c0_57] : memref<2x1x32xf32, #tpu.memory_space<vmem>>, vector<1x1x32xf32>
    %146 = vector.shape_cast %145 : vector<1x1x32xf32> to vector<1x32xf32>
    %cst_58 = arith.constant dense<0.000000e+00> : vector<16xf32>
    %147 = vector.multi_reduction <add>, %142, %cst_58 [1] : vector<16x32xf32> to vector<16xf32>
    %148 = vector.shape_cast %147 : vector<16xf32> to vector<16x1xf32>
    %cst_59 = arith.constant 3.200000e+01 : f32
    %149 = vector.broadcast %cst_59 : f32 to vector<16x1xf32>
    %150 = arith.divf %148, %149 : vector<16x1xf32>
    %151 = vector.broadcast %150 : vector<16x1xf32> to vector<16x32xf32>
    %152 = arith.subf %142, %151 : vector<16x32xf32>
    %153 = arith.mulf %152, %152 : vector<16x32xf32>
    %cst_60 = arith.constant dense<0.000000e+00> : vector<16xf32>
    %154 = vector.multi_reduction <add>, %153, %cst_60 [1] : vector<16x32xf32> to vector<16xf32>
    %155 = vector.shape_cast %154 : vector<16xf32> to vector<16x1xf32>
    %cst_61 = arith.constant 3.200000e+01 : f32
    %156 = vector.broadcast %cst_61 : f32 to vector<16x1xf32>
    %157 = arith.divf %155, %156 : vector<16x1xf32>
    %cst_62 = arith.constant 9.99999996E-13 : f32
    %158 = vector.broadcast %cst_62 : f32 to vector<16x1xf32>
    %159 = arith.addf %157, %158 : vector<16x1xf32>
    %160 = math.rsqrt %159 : vector<16x1xf32>
    %161 = vector.broadcast %160 : vector<16x1xf32> to vector<16x32xf32>
    %162 = arith.mulf %152, %161 : vector<16x32xf32>
    %163 = vector.broadcast %144 : vector<1x32xf32> to vector<16x32xf32>
    %164 = arith.mulf %162, %163 : vector<16x32xf32>
    %165 = vector.broadcast %146 : vector<1x32xf32> to vector<16x32xf32>
    %166 = arith.addf %164, %165 : vector<16x32xf32>
    %c0_63 = arith.constant 0 : index
    %c0_64 = arith.constant 0 : index
    %c0_65 = arith.constant 0 : index
    %167 = vector.load %arg13[%c0_63, %c0_64, %c0_65] : memref<2x32x64xf32, #tpu.memory_space<vmem>>, vector<1x32x64xf32>
    %168 = vector.shape_cast %167 : vector<1x32x64xf32> to vector<32x64xf32>
    %cst_66 = arith.constant dense<0.000000e+00> : vector<16x64xf32>
    %169 = tpu.matmul %166, %168, %cst_66 {dimension_numbers = #tpu.dot_dimension_numbers<[1], [0], [0], [1], [0, 0, 1, 1], [], []>} : vector<16x32xf32>, vector<32x64xf32>, vector<16x64xf32> -> vector<16x64xf32>
    %c0_67 = arith.constant 0 : index
    %c0_68 = arith.constant 0 : index
    %c0_69 = arith.constant 0 : index
    %170 = vector.load %arg14[%c0_67, %c0_68, %c0_69] : memref<2x1x64xf32, #tpu.memory_space<vmem>>, vector<1x1x64xf32>
    %171 = vector.shape_cast %170 : vector<1x1x64xf32> to vector<1x64xf32>
    %172 = vector.broadcast %171 : vector<1x64xf32> to vector<16x64xf32>
    %173 = arith.addf %169, %172 : vector<16x64xf32>
    %cst_70 = arith.constant 5.000000e-01 : f32
    %174 = vector.broadcast %cst_70 : f32 to vector<16x64xf32>
    %175 = arith.mulf %174, %173 : vector<16x64xf32>
    %cst_71 = arith.constant 4.471500e-02 : f32
    %176 = vector.broadcast %cst_71 : f32 to vector<16x64xf32>
    %177 = arith.mulf %176, %173 : vector<16x64xf32>
    %178 = arith.mulf %177, %173 : vector<16x64xf32>
    %179 = arith.mulf %178, %173 : vector<16x64xf32>
    %180 = arith.addf %173, %179 : vector<16x64xf32>
    %cst_72 = arith.constant 0.797884583 : f32
    %181 = vector.broadcast %cst_72 : f32 to vector<16x64xf32>
    %182 = arith.mulf %181, %180 : vector<16x64xf32>
    %183 = math.tanh %182 : vector<16x64xf32>
    %cst_73 = arith.constant 1.000000e+00 : f32
    %184 = vector.broadcast %cst_73 : f32 to vector<16x64xf32>
    %185 = arith.addf %184, %183 : vector<16x64xf32>
    %186 = arith.mulf %175, %185 : vector<16x64xf32>
    %c0_74 = arith.constant 0 : index
    %c0_75 = arith.constant 0 : index
    %c0_76 = arith.constant 0 : index
    %187 = vector.load %arg15[%c0_74, %c0_75, %c0_76] : memref<2x64x32xf32, #tpu.memory_space<vmem>>, vector<1x64x32xf32>
    %188 = vector.shape_cast %187 : vector<1x64x32xf32> to vector<64x32xf32>
    %cst_77 = arith.constant dense<0.000000e+00> : vector<16x32xf32>
    %189 = tpu.matmul %186, %188, %cst_77 {dimension_numbers = #tpu.dot_dimension_numbers<[1], [0], [0], [1], [0, 0, 1, 1], [], []>} : vector<16x64xf32>, vector<64x32xf32>, vector<16x32xf32> -> vector<16x32xf32>
    %c0_78 = arith.constant 0 : index
    %c0_79 = arith.constant 0 : index
    %c0_80 = arith.constant 0 : index
    %190 = vector.load %arg16[%c0_78, %c0_79, %c0_80] : memref<2x1x32xf32, #tpu.memory_space<vmem>>, vector<1x1x32xf32>
    %191 = vector.shape_cast %190 : vector<1x1x32xf32> to vector<1x32xf32>
    %192 = vector.broadcast %191 : vector<1x32xf32> to vector<16x32xf32>
    %193 = arith.addf %189, %192 : vector<16x32xf32>
    %194 = arith.addf %166, %193 : vector<16x32xf32>
    %c0_81 = arith.constant 0 : index
    %c0_82 = arith.constant 0 : index
    %c0_83 = arith.constant 0 : index
    %195 = vector.load %arg17[%c0_81, %c0_82, %c0_83] : memref<2x1x32xf32, #tpu.memory_space<vmem>>, vector<1x1x32xf32>
    %196 = vector.shape_cast %195 : vector<1x1x32xf32> to vector<1x32xf32>
    %c0_84 = arith.constant 0 : index
    %c0_85 = arith.constant 0 : index
    %c0_86 = arith.constant 0 : index
    %197 = vector.load %arg18[%c0_84, %c0_85, %c0_86] : memref<2x1x32xf32, #tpu.memory_space<vmem>>, vector<1x1x32xf32>
    %198 = vector.shape_cast %197 : vector<1x1x32xf32> to vector<1x32xf32>
    %cst_87 = arith.constant dense<0.000000e+00> : vector<16xf32>
    %199 = vector.multi_reduction <add>, %194, %cst_87 [1] : vector<16x32xf32> to vector<16xf32>
    %200 = vector.shape_cast %199 : vector<16xf32> to vector<16x1xf32>
    %cst_88 = arith.constant 3.200000e+01 : f32
    %201 = vector.broadcast %cst_88 : f32 to vector<16x1xf32>
    %202 = arith.divf %200, %201 : vector<16x1xf32>
    %203 = vector.broadcast %202 : vector<16x1xf32> to vector<16x32xf32>
    %204 = arith.subf %194, %203 : vector<16x32xf32>
    %205 = arith.mulf %204, %204 : vector<16x32xf32>
    %cst_89 = arith.constant dense<0.000000e+00> : vector<16xf32>
    %206 = vector.multi_reduction <add>, %205, %cst_89 [1] : vector<16x32xf32> to vector<16xf32>
    %207 = vector.shape_cast %206 : vector<16xf32> to vector<16x1xf32>
    %cst_90 = arith.constant 3.200000e+01 : f32
    %208 = vector.broadcast %cst_90 : f32 to vector<16x1xf32>
    %209 = arith.divf %207, %208 : vector<16x1xf32>
    %cst_91 = arith.constant 9.99999996E-13 : f32
    %210 = vector.broadcast %cst_91 : f32 to vector<16x1xf32>
    %211 = arith.addf %209, %210 : vector<16x1xf32>
    %212 = math.rsqrt %211 : vector<16x1xf32>
    %213 = vector.broadcast %212 : vector<16x1xf32> to vector<16x32xf32>
    %214 = arith.mulf %204, %213 : vector<16x32xf32>
    %215 = vector.broadcast %196 : vector<1x32xf32> to vector<16x32xf32>
    %216 = arith.mulf %214, %215 : vector<16x32xf32>
    %217 = vector.broadcast %198 : vector<1x32xf32> to vector<16x32xf32>
    %218 = arith.addf %216, %217 : vector<16x32xf32>
    %c1 = arith.constant 1 : index
    %c0_92 = arith.constant 0 : index
    %c0_93 = arith.constant 0 : index
    %219 = vector.load %arg7[%c1, %c0_92, %c0_93] : memref<2x32x96xf32, #tpu.memory_space<vmem>>, vector<1x32x96xf32>
    %220 = vector.shape_cast %219 : vector<1x32x96xf32> to vector<32x96xf32>
    %c1_94 = arith.constant 1 : index
    %c0_95 = arith.constant 0 : index
    %c0_96 = arith.constant 0 : index
    %221 = vector.load %arg8[%c1_94, %c0_95, %c0_96] : memref<2x1x96xf32, #tpu.memory_space<vmem>>, vector<1x1x96xf32>
    %222 = vector.shape_cast %221 : vector<1x1x96xf32> to vector<1x96xf32>
    %cst_97 = arith.constant dense<0.000000e+00> : vector<16x96xf32>
    %223 = tpu.matmul %218, %220, %cst_97 {dimension_numbers = #tpu.dot_dimension_numbers<[1], [0], [0], [1], [0, 0, 1, 1], [], []>} : vector<16x32xf32>, vector<32x96xf32>, vector<16x96xf32> -> vector<16x96xf32>
    %224 = vector.broadcast %222 : vector<1x96xf32> to vector<16x96xf32>
    %225 = arith.addf %223, %224 : vector<16x96xf32>
    %226 = vector.extract_strided_slice %225 {offsets = [0, 0], sizes = [16, 32], strides = [1, 1]} : vector<16x96xf32> to vector<16x32xf32>
    %227 = vector.extract_strided_slice %225 {offsets = [0, 32], sizes = [16, 32], strides = [1, 1]} : vector<16x96xf32> to vector<16x32xf32>
    %228 = vector.extract_strided_slice %225 {offsets = [0, 64], sizes = [16, 32], strides = [1, 1]} : vector<16x96xf32> to vector<16x32xf32>
    %229 = vector.extract_strided_slice %226 {offsets = [0, 0], sizes = [8, 32], strides = [1, 1]} : vector<16x32xf32> to vector<8x32xf32>
    %230 = vector.extract_strided_slice %227 {offsets = [0, 0], sizes = [8, 32], strides = [1, 1]} : vector<16x32xf32> to vector<8x32xf32>
    %231 = vector.extract_strided_slice %228 {offsets = [0, 0], sizes = [8, 32], strides = [1, 1]} : vector<16x32xf32> to vector<8x32xf32>
    %232 = vector.extract_strided_slice %37 {offsets = [0, 0], sizes = [1, 8], strides = [1, 1]} : vector<2x8xf32> to vector<1x8xf32>
    %233 = vector.extract_strided_slice %229 {offsets = [0, 0], sizes = [8, 16], strides = [1, 1]} : vector<8x32xf32> to vector<8x16xf32>
    %234 = vector.extract_strided_slice %230 {offsets = [0, 0], sizes = [8, 16], strides = [1, 1]} : vector<8x32xf32> to vector<8x16xf32>
    %235 = vector.extract_strided_slice %231 {offsets = [0, 0], sizes = [8, 16], strides = [1, 1]} : vector<8x32xf32> to vector<8x16xf32>
    %cst_98 = arith.constant dense<0.000000e+00> : vector<8x8xf32>
    %236 = tpu.matmul %233, %234, %cst_98 {dimension_numbers = #tpu.dot_dimension_numbers<[1], [1], [0], [0], [0, 0, 1, 0], [], []>} : vector<8x16xf32>, vector<8x16xf32>, vector<8x8xf32> -> vector<8x8xf32>
    %cst_99 = arith.constant 2.500000e-01 : f32
    %237 = vector.broadcast %cst_99 : f32 to vector<8x8xf32>
    %238 = arith.mulf %236, %237 : vector<8x8xf32>
    %239 = vector.broadcast %232 : vector<1x8xf32> to vector<8x8xf32>
    %240 = arith.addf %238, %239 : vector<8x8xf32>
    %cst_100 = arith.constant dense<0xFF800000> : vector<8xf32>
    %241 = vector.multi_reduction <maximumf>, %240, %cst_100 [1] : vector<8x8xf32> to vector<8xf32>
    %242 = vector.shape_cast %241 : vector<8xf32> to vector<8x1xf32>
    %243 = vector.broadcast %242 : vector<8x1xf32> to vector<8x8xf32>
    %244 = arith.subf %240, %243 : vector<8x8xf32>
    %245 = math.exp %244 : vector<8x8xf32>
    %cst_101 = arith.constant dense<0.000000e+00> : vector<8xf32>
    %246 = vector.multi_reduction <add>, %245, %cst_101 [1] : vector<8x8xf32> to vector<8xf32>
    %247 = vector.shape_cast %246 : vector<8xf32> to vector<8x1xf32>
    %248 = tpu.reciprocal %247 {approx = true} : vector<8x1xf32> -> vector<8x1xf32>
    %249 = vector.broadcast %248 : vector<8x1xf32> to vector<8x8xf32>
    %250 = arith.mulf %245, %249 : vector<8x8xf32>
    %cst_102 = arith.constant dense<0.000000e+00> : vector<8x16xf32>
    %251 = tpu.matmul %250, %235, %cst_102 {dimension_numbers = #tpu.dot_dimension_numbers<[1], [0], [0], [1], [0, 0, 1, 1], [], []>} : vector<8x8xf32>, vector<8x16xf32>, vector<8x16xf32> -> vector<8x16xf32>
    %252 = vector.extract_strided_slice %229 {offsets = [0, 16], sizes = [8, 16], strides = [1, 1]} : vector<8x32xf32> to vector<8x16xf32>
    %253 = vector.extract_strided_slice %230 {offsets = [0, 16], sizes = [8, 16], strides = [1, 1]} : vector<8x32xf32> to vector<8x16xf32>
    %254 = vector.extract_strided_slice %231 {offsets = [0, 16], sizes = [8, 16], strides = [1, 1]} : vector<8x32xf32> to vector<8x16xf32>
    %cst_103 = arith.constant dense<0.000000e+00> : vector<8x8xf32>
    %255 = tpu.matmul %252, %253, %cst_103 {dimension_numbers = #tpu.dot_dimension_numbers<[1], [1], [0], [0], [0, 0, 1, 0], [], []>} : vector<8x16xf32>, vector<8x16xf32>, vector<8x8xf32> -> vector<8x8xf32>
    %cst_104 = arith.constant 2.500000e-01 : f32
    %256 = vector.broadcast %cst_104 : f32 to vector<8x8xf32>
    %257 = arith.mulf %255, %256 : vector<8x8xf32>
    %258 = vector.broadcast %232 : vector<1x8xf32> to vector<8x8xf32>
    %259 = arith.addf %257, %258 : vector<8x8xf32>
    %cst_105 = arith.constant dense<0xFF800000> : vector<8xf32>
    %260 = vector.multi_reduction <maximumf>, %259, %cst_105 [1] : vector<8x8xf32> to vector<8xf32>
    %261 = vector.shape_cast %260 : vector<8xf32> to vector<8x1xf32>
    %262 = vector.broadcast %261 : vector<8x1xf32> to vector<8x8xf32>
    %263 = arith.subf %259, %262 : vector<8x8xf32>
    %264 = math.exp %263 : vector<8x8xf32>
    %cst_106 = arith.constant dense<0.000000e+00> : vector<8xf32>
    %265 = vector.multi_reduction <add>, %264, %cst_106 [1] : vector<8x8xf32> to vector<8xf32>
    %266 = vector.shape_cast %265 : vector<8xf32> to vector<8x1xf32>
    %267 = tpu.reciprocal %266 {approx = true} : vector<8x1xf32> -> vector<8x1xf32>
    %268 = vector.broadcast %267 : vector<8x1xf32> to vector<8x8xf32>
    %269 = arith.mulf %264, %268 : vector<8x8xf32>
    %cst_107 = arith.constant dense<0.000000e+00> : vector<8x16xf32>
    %270 = tpu.matmul %269, %254, %cst_107 {dimension_numbers = #tpu.dot_dimension_numbers<[1], [0], [0], [1], [0, 0, 1, 1], [], []>} : vector<8x8xf32>, vector<8x16xf32>, vector<8x16xf32> -> vector<8x16xf32>
    %271 = tpu.concatenate %251, %270 in 1 : vector<8x16xf32>, vector<8x16xf32> -> vector<8x32xf32>
    %272 = vector.extract_strided_slice %226 {offsets = [8, 0], sizes = [8, 32], strides = [1, 1]} : vector<16x32xf32> to vector<8x32xf32>
    %273 = vector.extract_strided_slice %227 {offsets = [8, 0], sizes = [8, 32], strides = [1, 1]} : vector<16x32xf32> to vector<8x32xf32>
    %274 = vector.extract_strided_slice %228 {offsets = [8, 0], sizes = [8, 32], strides = [1, 1]} : vector<16x32xf32> to vector<8x32xf32>
    %275 = vector.extract_strided_slice %37 {offsets = [1, 0], sizes = [1, 8], strides = [1, 1]} : vector<2x8xf32> to vector<1x8xf32>
    %276 = vector.extract_strided_slice %272 {offsets = [0, 0], sizes = [8, 16], strides = [1, 1]} : vector<8x32xf32> to vector<8x16xf32>
    %277 = vector.extract_strided_slice %273 {offsets = [0, 0], sizes = [8, 16], strides = [1, 1]} : vector<8x32xf32> to vector<8x16xf32>
    %278 = vector.extract_strided_slice %274 {offsets = [0, 0], sizes = [8, 16], strides = [1, 1]} : vector<8x32xf32> to vector<8x16xf32>
    %cst_108 = arith.constant dense<0.000000e+00> : vector<8x8xf32>
    %279 = tpu.matmul %276, %277, %cst_108 {dimension_numbers = #tpu.dot_dimension_numbers<[1], [1], [0], [0], [0, 0, 1, 0], [], []>} : vector<8x16xf32>, vector<8x16xf32>, vector<8x8xf32> -> vector<8x8xf32>
    %cst_109 = arith.constant 2.500000e-01 : f32
    %280 = vector.broadcast %cst_109 : f32 to vector<8x8xf32>
    %281 = arith.mulf %279, %280 : vector<8x8xf32>
    %282 = vector.broadcast %275 : vector<1x8xf32> to vector<8x8xf32>
    %283 = arith.addf %281, %282 : vector<8x8xf32>
    %cst_110 = arith.constant dense<0xFF800000> : vector<8xf32>
    %284 = vector.multi_reduction <maximumf>, %283, %cst_110 [1] : vector<8x8xf32> to vector<8xf32>
    %285 = vector.shape_cast %284 : vector<8xf32> to vector<8x1xf32>
    %286 = vector.broadcast %285 : vector<8x1xf32> to vector<8x8xf32>
    %287 = arith.subf %283, %286 : vector<8x8xf32>
    %288 = math.exp %287 : vector<8x8xf32>
    %cst_111 = arith.constant dense<0.000000e+00> : vector<8xf32>
    %289 = vector.multi_reduction <add>, %288, %cst_111 [1] : vector<8x8xf32> to vector<8xf32>
    %290 = vector.shape_cast %289 : vector<8xf32> to vector<8x1xf32>
    %291 = tpu.reciprocal %290 {approx = true} : vector<8x1xf32> -> vector<8x1xf32>
    %292 = vector.broadcast %291 : vector<8x1xf32> to vector<8x8xf32>
    %293 = arith.mulf %288, %292 : vector<8x8xf32>
    %cst_112 = arith.constant dense<0.000000e+00> : vector<8x16xf32>
    %294 = tpu.matmul %293, %278, %cst_112 {dimension_numbers = #tpu.dot_dimension_numbers<[1], [0], [0], [1], [0, 0, 1, 1], [], []>} : vector<8x8xf32>, vector<8x16xf32>, vector<8x16xf32> -> vector<8x16xf32>
    %295 = vector.extract_strided_slice %272 {offsets = [0, 16], sizes = [8, 16], strides = [1, 1]} : vector<8x32xf32> to vector<8x16xf32>
    %296 = vector.extract_strided_slice %273 {offsets = [0, 16], sizes = [8, 16], strides = [1, 1]} : vector<8x32xf32> to vector<8x16xf32>
    %297 = vector.extract_strided_slice %274 {offsets = [0, 16], sizes = [8, 16], strides = [1, 1]} : vector<8x32xf32> to vector<8x16xf32>
    %cst_113 = arith.constant dense<0.000000e+00> : vector<8x8xf32>
    %298 = tpu.matmul %295, %296, %cst_113 {dimension_numbers = #tpu.dot_dimension_numbers<[1], [1], [0], [0], [0, 0, 1, 0], [], []>} : vector<8x16xf32>, vector<8x16xf32>, vector<8x8xf32> -> vector<8x8xf32>
    %cst_114 = arith.constant 2.500000e-01 : f32
    %299 = vector.broadcast %cst_114 : f32 to vector<8x8xf32>
    %300 = arith.mulf %298, %299 : vector<8x8xf32>
    %301 = vector.broadcast %275 : vector<1x8xf32> to vector<8x8xf32>
    %302 = arith.addf %300, %301 : vector<8x8xf32>
    %cst_115 = arith.constant dense<0xFF800000> : vector<8xf32>
    %303 = vector.multi_reduction <maximumf>, %302, %cst_115 [1] : vector<8x8xf32> to vector<8xf32>
    %304 = vector.shape_cast %303 : vector<8xf32> to vector<8x1xf32>
    %305 = vector.broadcast %304 : vector<8x1xf32> to vector<8x8xf32>
    %306 = arith.subf %302, %305 : vector<8x8xf32>
    %307 = math.exp %306 : vector<8x8xf32>
    %cst_116 = arith.constant dense<0.000000e+00> : vector<8xf32>
    %308 = vector.multi_reduction <add>, %307, %cst_116 [1] : vector<8x8xf32> to vector<8xf32>
    %309 = vector.shape_cast %308 : vector<8xf32> to vector<8x1xf32>
    %310 = tpu.reciprocal %309 {approx = true} : vector<8x1xf32> -> vector<8x1xf32>
    %311 = vector.broadcast %310 : vector<8x1xf32> to vector<8x8xf32>
    %312 = arith.mulf %307, %311 : vector<8x8xf32>
    %cst_117 = arith.constant dense<0.000000e+00> : vector<8x16xf32>
    %313 = tpu.matmul %312, %297, %cst_117 {dimension_numbers = #tpu.dot_dimension_numbers<[1], [0], [0], [1], [0, 0, 1, 1], [], []>} : vector<8x8xf32>, vector<8x16xf32>, vector<8x16xf32> -> vector<8x16xf32>
    %314 = tpu.concatenate %294, %313 in 1 : vector<8x16xf32>, vector<8x16xf32> -> vector<8x32xf32>
    %315 = tpu.concatenate %271, %314 in 0 : vector<8x32xf32>, vector<8x32xf32> -> vector<16x32xf32>
    %c1_118 = arith.constant 1 : index
    %c0_119 = arith.constant 0 : index
    %c0_120 = arith.constant 0 : index
    %316 = vector.load %arg9[%c1_118, %c0_119, %c0_120] : memref<2x32x32xf32, #tpu.memory_space<vmem>>, vector<1x32x32xf32>
    %317 = vector.shape_cast %316 : vector<1x32x32xf32> to vector<32x32xf32>
    %cst_121 = arith.constant dense<0.000000e+00> : vector<16x32xf32>
    %318 = tpu.matmul %315, %317, %cst_121 {dimension_numbers = #tpu.dot_dimension_numbers<[1], [0], [0], [1], [0, 0, 1, 1], [], []>} : vector<16x32xf32>, vector<32x32xf32>, vector<16x32xf32> -> vector<16x32xf32>
    %c1_122 = arith.constant 1 : index
    %c0_123 = arith.constant 0 : index
    %c0_124 = arith.constant 0 : index
    %319 = vector.load %arg10[%c1_122, %c0_123, %c0_124] : memref<2x1x32xf32, #tpu.memory_space<vmem>>, vector<1x1x32xf32>
    %320 = vector.shape_cast %319 : vector<1x1x32xf32> to vector<1x32xf32>
    %321 = vector.broadcast %320 : vector<1x32xf32> to vector<16x32xf32>
    %322 = arith.addf %318, %321 : vector<16x32xf32>
    %323 = arith.addf %218, %322 : vector<16x32xf32>
    %c1_125 = arith.constant 1 : index
    %c0_126 = arith.constant 0 : index
    %c0_127 = arith.constant 0 : index
    %324 = vector.load %arg11[%c1_125, %c0_126, %c0_127] : memref<2x1x32xf32, #tpu.memory_space<vmem>>, vector<1x1x32xf32>
    %325 = vector.shape_cast %324 : vector<1x1x32xf32> to vector<1x32xf32>
    %c1_128 = arith.constant 1 : index
    %c0_129 = arith.constant 0 : index
    %c0_130 = arith.constant 0 : index
    %326 = vector.load %arg12[%c1_128, %c0_129, %c0_130] : memref<2x1x32xf32, #tpu.memory_space<vmem>>, vector<1x1x32xf32>
    %327 = vector.shape_cast %326 : vector<1x1x32xf32> to vector<1x32xf32>
    %cst_131 = arith.constant dense<0.000000e+00> : vector<16xf32>
    %328 = vector.multi_reduction <add>, %323, %cst_131 [1] : vector<16x32xf32> to vector<16xf32>
    %329 = vector.shape_cast %328 : vector<16xf32> to vector<16x1xf32>
    %cst_132 = arith.constant 3.200000e+01 : f32
    %330 = vector.broadcast %cst_132 : f32 to vector<16x1xf32>
    %331 = arith.divf %329, %330 : vector<16x1xf32>
    %332 = vector.broadcast %331 : vector<16x1xf32> to vector<16x32xf32>
    %333 = arith.subf %323, %332 : vector<16x32xf32>
    %334 = arith.mulf %333, %333 : vector<16x32xf32>
    %cst_133 = arith.constant dense<0.000000e+00> : vector<16xf32>
    %335 = vector.multi_reduction <add>, %334, %cst_133 [1] : vector<16x32xf32> to vector<16xf32>
    %336 = vector.shape_cast %335 : vector<16xf32> to vector<16x1xf32>
    %cst_134 = arith.constant 3.200000e+01 : f32
    %337 = vector.broadcast %cst_134 : f32 to vector<16x1xf32>
    %338 = arith.divf %336, %337 : vector<16x1xf32>
    %cst_135 = arith.constant 9.99999996E-13 : f32
    %339 = vector.broadcast %cst_135 : f32 to vector<16x1xf32>
    %340 = arith.addf %338, %339 : vector<16x1xf32>
    %341 = math.rsqrt %340 : vector<16x1xf32>
    %342 = vector.broadcast %341 : vector<16x1xf32> to vector<16x32xf32>
    %343 = arith.mulf %333, %342 : vector<16x32xf32>
    %344 = vector.broadcast %325 : vector<1x32xf32> to vector<16x32xf32>
    %345 = arith.mulf %343, %344 : vector<16x32xf32>
    %346 = vector.broadcast %327 : vector<1x32xf32> to vector<16x32xf32>
    %347 = arith.addf %345, %346 : vector<16x32xf32>
    %c1_136 = arith.constant 1 : index
    %c0_137 = arith.constant 0 : index
    %c0_138 = arith.constant 0 : index
    %348 = vector.load %arg13[%c1_136, %c0_137, %c0_138] : memref<2x32x64xf32, #tpu.memory_space<vmem>>, vector<1x32x64xf32>
    %349 = vector.shape_cast %348 : vector<1x32x64xf32> to vector<32x64xf32>
    %cst_139 = arith.constant dense<0.000000e+00> : vector<16x64xf32>
    %350 = tpu.matmul %347, %349, %cst_139 {dimension_numbers = #tpu.dot_dimension_numbers<[1], [0], [0], [1], [0, 0, 1, 1], [], []>} : vector<16x32xf32>, vector<32x64xf32>, vector<16x64xf32> -> vector<16x64xf32>
    %c1_140 = arith.constant 1 : index
    %c0_141 = arith.constant 0 : index
    %c0_142 = arith.constant 0 : index
    %351 = vector.load %arg14[%c1_140, %c0_141, %c0_142] : memref<2x1x64xf32, #tpu.memory_space<vmem>>, vector<1x1x64xf32>
    %352 = vector.shape_cast %351 : vector<1x1x64xf32> to vector<1x64xf32>
    %353 = vector.broadcast %352 : vector<1x64xf32> to vector<16x64xf32>
    %354 = arith.addf %350, %353 : vector<16x64xf32>
    %cst_143 = arith.constant 5.000000e-01 : f32
    %355 = vector.broadcast %cst_143 : f32 to vector<16x64xf32>
    %356 = arith.mulf %355, %354 : vector<16x64xf32>
    %cst_144 = arith.constant 4.471500e-02 : f32
    %357 = vector.broadcast %cst_144 : f32 to vector<16x64xf32>
    %358 = arith.mulf %357, %354 : vector<16x64xf32>
    %359 = arith.mulf %358, %354 : vector<16x64xf32>
    %360 = arith.mulf %359, %354 : vector<16x64xf32>
    %361 = arith.addf %354, %360 : vector<16x64xf32>
    %cst_145 = arith.constant 0.797884583 : f32
    %362 = vector.broadcast %cst_145 : f32 to vector<16x64xf32>
    %363 = arith.mulf %362, %361 : vector<16x64xf32>
    %364 = math.tanh %363 : vector<16x64xf32>
    %cst_146 = arith.constant 1.000000e+00 : f32
    %365 = vector.broadcast %cst_146 : f32 to vector<16x64xf32>
    %366 = arith.addf %365, %364 : vector<16x64xf32>
    %367 = arith.mulf %356, %366 : vector<16x64xf32>
    %c1_147 = arith.constant 1 : index
    %c0_148 = arith.constant 0 : index
    %c0_149 = arith.constant 0 : index
    %368 = vector.load %arg15[%c1_147, %c0_148, %c0_149] : memref<2x64x32xf32, #tpu.memory_space<vmem>>, vector<1x64x32xf32>
    %369 = vector.shape_cast %368 : vector<1x64x32xf32> to vector<64x32xf32>
    %cst_150 = arith.constant dense<0.000000e+00> : vector<16x32xf32>
    %370 = tpu.matmul %367, %369, %cst_150 {dimension_numbers = #tpu.dot_dimension_numbers<[1], [0], [0], [1], [0, 0, 1, 1], [], []>} : vector<16x64xf32>, vector<64x32xf32>, vector<16x32xf32> -> vector<16x32xf32>
    %c1_151 = arith.constant 1 : index
    %c0_152 = arith.constant 0 : index
    %c0_153 = arith.constant 0 : index
    %371 = vector.load %arg16[%c1_151, %c0_152, %c0_153] : memref<2x1x32xf32, #tpu.memory_space<vmem>>, vector<1x1x32xf32>
    %372 = vector.shape_cast %371 : vector<1x1x32xf32> to vector<1x32xf32>
    %373 = vector.broadcast %372 : vector<1x32xf32> to vector<16x32xf32>
    %374 = arith.addf %370, %373 : vector<16x32xf32>
    %375 = arith.addf %347, %374 : vector<16x32xf32>
    %c1_154 = arith.constant 1 : index
    %c0_155 = arith.constant 0 : index
    %c0_156 = arith.constant 0 : index
    %376 = vector.load %arg17[%c1_154, %c0_155, %c0_156] : memref<2x1x32xf32, #tpu.memory_space<vmem>>, vector<1x1x32xf32>
    %377 = vector.shape_cast %376 : vector<1x1x32xf32> to vector<1x32xf32>
    %c1_157 = arith.constant 1 : index
    %c0_158 = arith.constant 0 : index
    %c0_159 = arith.constant 0 : index
    %378 = vector.load %arg18[%c1_157, %c0_158, %c0_159] : memref<2x1x32xf32, #tpu.memory_space<vmem>>, vector<1x1x32xf32>
    %379 = vector.shape_cast %378 : vector<1x1x32xf32> to vector<1x32xf32>
    %cst_160 = arith.constant dense<0.000000e+00> : vector<16xf32>
    %380 = vector.multi_reduction <add>, %375, %cst_160 [1] : vector<16x32xf32> to vector<16xf32>
    %381 = vector.shape_cast %380 : vector<16xf32> to vector<16x1xf32>
    %cst_161 = arith.constant 3.200000e+01 : f32
    %382 = vector.broadcast %cst_161 : f32 to vector<16x1xf32>
    %383 = arith.divf %381, %382 : vector<16x1xf32>
    %384 = vector.broadcast %383 : vector<16x1xf32> to vector<16x32xf32>
    %385 = arith.subf %375, %384 : vector<16x32xf32>
    %386 = arith.mulf %385, %385 : vector<16x32xf32>
    %cst_162 = arith.constant dense<0.000000e+00> : vector<16xf32>
    %387 = vector.multi_reduction <add>, %386, %cst_162 [1] : vector<16x32xf32> to vector<16xf32>
    %388 = vector.shape_cast %387 : vector<16xf32> to vector<16x1xf32>
    %cst_163 = arith.constant 3.200000e+01 : f32
    %389 = vector.broadcast %cst_163 : f32 to vector<16x1xf32>
    %390 = arith.divf %388, %389 : vector<16x1xf32>
    %cst_164 = arith.constant 9.99999996E-13 : f32
    %391 = vector.broadcast %cst_164 : f32 to vector<16x1xf32>
    %392 = arith.addf %390, %391 : vector<16x1xf32>
    %393 = math.rsqrt %392 : vector<16x1xf32>
    %394 = vector.broadcast %393 : vector<16x1xf32> to vector<16x32xf32>
    %395 = arith.mulf %385, %394 : vector<16x32xf32>
    %396 = vector.broadcast %377 : vector<1x32xf32> to vector<16x32xf32>
    %397 = arith.mulf %395, %396 : vector<16x32xf32>
    %398 = vector.broadcast %379 : vector<1x32xf32> to vector<16x32xf32>
    %399 = arith.addf %397, %398 : vector<16x32xf32>
    %400 = vector.extract_strided_slice %399 {offsets = [0, 0], sizes = [1, 32], strides = [1, 1]} : vector<16x32xf32> to vector<1x32xf32>
    %401 = vector.extract_strided_slice %399 {offsets = [8, 0], sizes = [1, 32], strides = [1, 1]} : vector<16x32xf32> to vector<1x32xf32>
    %402 = tpu.concatenate %400, %401 in 0 : vector<1x32xf32>, vector<1x32xf32> -> vector<2x32xf32>
    %c0_165 = arith.constant 0 : index
    %c0_166 = arith.constant 0 : index
    %403 = vector.load %arg19[%c0_165, %c0_166] : memref<32x32xf32, #tpu.memory_space<vmem>>, vector<32x32xf32>
    %cst_167 = arith.constant dense<0.000000e+00> : vector<2x32xf32>
    %404 = tpu.matmul %402, %403, %cst_167 {dimension_numbers = #tpu.dot_dimension_numbers<[1], [0], [0], [1], [0, 0, 1, 1], [], []>} : vector<2x32xf32>, vector<32x32xf32>, vector<2x32xf32> -> vector<2x32xf32>
    %c0_168 = arith.constant 0 : index
    %c0_169 = arith.constant 0 : index
    %405 = vector.load %arg20[%c0_168, %c0_169] : memref<1x32xf32, #tpu.memory_space<vmem>>, vector<1x32xf32>
    %406 = vector.broadcast %405 : vector<1x32xf32> to vector<2x32xf32>
    %407 = arith.addf %404, %406 : vector<2x32xf32>
    %408 = math.tanh %407 : vector<2x32xf32>
    %c0_170 = arith.constant 0 : index
    %c0_171 = arith.constant 0 : index
    %409 = vector.load %arg21[%c0_170, %c0_171] : memref<32x3xf32, #tpu.memory_space<vmem>>, vector<32x3xf32>
    %cst_172 = arith.constant dense<0.000000e+00> : vector<2x3xf32>
    %410 = tpu.matmul %408, %409, %cst_172 {dimension_numbers = #tpu.dot_dimension_numbers<[1], [0], [0], [1], [0, 0, 1, 1], [], []>} : vector<2x32xf32>, vector<32x3xf32>, vector<2x3xf32> -> vector<2x3xf32>
    %c0_173 = arith.constant 0 : index
    %c0_174 = arith.constant 0 : index
    %411 = vector.load %arg22[%c0_173, %c0_174] : memref<1x3xf32, #tpu.memory_space<vmem>>, vector<1x3xf32>
    %412 = vector.broadcast %411 : vector<1x3xf32> to vector<2x3xf32>
    %413 = arith.addf %410, %412 : vector<2x3xf32>
    %c0_175 = arith.constant 0 : index
    %c0_176 = arith.constant 0 : index
    %414 = vector.load %arg23[%c0_175, %c0_176] : memref<2x3xf32, #tpu.memory_space<vmem>>, vector<2x3xf32>
    tpu.vector_store %arg23[%c0_175, %c0_176], %413 {strides = array<i32>} : memref<2x3xf32, #tpu.memory_space<vmem>>, vector<2x3xf32>,
    return
  }
  func.func @transform_0(%arg0: i32) -> (i32, i32) {
    %c0_i32 = arith.constant 0 : i32
    %c0_i32_0 = arith.constant 0 : i32
    %c0_i32_1 = arith.constant 0 : i32
    return %c0_i32, %c0_i32_0 : i32, i32
  }
  func.func @transform_1(%arg0: i32) -> (i32, i32) {
    %c0_i32 = arith.constant 0 : i32
    %c0_i32_0 = arith.constant 0 : i32
    %c0_i32_1 = arith.constant 0 : i32
    return %c0_i32, %c0_i32_0 : i32, i32
  }
  func.func @transform_2(%arg0: i32) -> (i32, i32) {
    %c0_i32 = arith.constant 0 : i32
    %c0_i32_0 = arith.constant 0 : i32
    %c0_i32_1 = arith.constant 0 : i32
    return %c0_i32, %c0_i32_0 : i32, i32
  }
  func.func @transform_3(%arg0: i32) -> (i32, i32) {
    %c0_i32 = arith.constant 0 : i32
    %c0_i32_0 = arith.constant 0 : i32
    %c0_i32_1 = arith.constant 0 : i32
    return %c0_i32, %c0_i32_0 : i32, i32
  }
  func.func @transform_4(%arg0: i32) -> (i32, i32) {
    %c0_i32 = arith.constant 0 : i32
    %c0_i32_0 = arith.constant 0 : i32
    %c0_i32_1 = arith.constant 0 : i32
    return %c0_i32, %c0_i32_0 : i32, i32
  }
  func.func @transform_5(%arg0: i32) -> (i32, i32) {
    %c0_i32 = arith.constant 0 : i32
    %c0_i32_0 = arith.constant 0 : i32
    %c0_i32_1 = arith.constant 0 : i32
    return %c0_i32, %c0_i32_0 : i32, i32
  }
  func.func @transform_6(%arg0: i32) -> (i32, i32, i32) {
    %c0_i32 = arith.constant 0 : i32
    %c0_i32_0 = arith.constant 0 : i32
    %c0_i32_1 = arith.constant 0 : i32
    %c0_i32_2 = arith.constant 0 : i32
    return %c0_i32, %c0_i32_0, %c0_i32_1 : i32, i32, i32
  }
  func.func @transform_7(%arg0: i32) -> (i32, i32, i32) {
    %c0_i32 = arith.constant 0 : i32
    %c0_i32_0 = arith.constant 0 : i32
    %c0_i32_1 = arith.constant 0 : i32
    %c0_i32_2 = arith.constant 0 : i32
    return %c0_i32, %c0_i32_0, %c0_i32_1 : i32, i32, i32
  }
  func.func @transform_8(%arg0: i32) -> (i32, i32, i32) {
    %c0_i32 = arith.constant 0 : i32
    %c0_i32_0 = arith.constant 0 : i32
    %c0_i32_1 = arith.constant 0 : i32
    %c0_i32_2 = arith.constant 0 : i32
    return %c0_i32, %c0_i32_0, %c0_i32_1 : i32, i32, i32
  }
  func.func @transform_9(%arg0: i32) -> (i32, i32, i32) {
    %c0_i32 = arith.constant 0 : i32
    %c0_i32_0 = arith.constant 0 : i32
    %c0_i32_1 = arith.constant 0 : i32
    %c0_i32_2 = arith.constant 0 : i32
    return %c0_i32, %c0_i32_0, %c0_i32_1 : i32, i32, i32
  }
  func.func @transform_10(%arg0: i32) -> (i32, i32, i32) {
    %c0_i32 = arith.constant 0 : i32
    %c0_i32_0 = arith.constant 0 : i32
    %c0_i32_1 = arith.constant 0 : i32
    %c0_i32_2 = arith.constant 0 : i32
    return %c0_i32, %c0_i32_0, %c0_i32_1 : i32, i32, i32
  }
  func.func @transform_11(%arg0: i32) -> (i32, i32, i32) {
    %c0_i32 = arith.constant 0 : i32
    %c0_i32_0 = arith.constant 0 : i32
    %c0_i32_1 = arith.constant 0 : i32
    %c0_i32_2 = arith.constant 0 : i32
    return %c0_i32, %c0_i32_0, %c0_i32_1 : i32, i32, i32
  }
  func.func @transform_12(%arg0: i32) -> (i32, i32, i32) {
    %c0_i32 = arith.constant 0 : i32
    %c0_i32_0 = arith.constant 0 : i32
    %c0_i32_1 = arith.constant 0 : i32
    %c0_i32_2 = arith.constant 0 : i32
    return %c0_i32, %c0_i32_0, %c0_i32_1 : i32, i32, i32
  }
  func.func @transform_13(%arg0: i32) -> (i32, i32, i32) {
    %c0_i32 = arith.constant 0 : i32
    %c0_i32_0 = arith.constant 0 : i32
    %c0_i32_1 = arith.constant 0 : i32
    %c0_i32_2 = arith.constant 0 : i32
    return %c0_i32, %c0_i32_0, %c0_i32_1 : i32, i32, i32
  }
  func.func @transform_14(%arg0: i32) -> (i32, i32, i32) {
    %c0_i32 = arith.constant 0 : i32
    %c0_i32_0 = arith.constant 0 : i32
    %c0_i32_1 = arith.constant 0 : i32
    %c0_i32_2 = arith.constant 0 : i32
    return %c0_i32, %c0_i32_0, %c0_i32_1 : i32, i32, i32
  }
  func.func @transform_15(%arg0: i32) -> (i32, i32, i32) {
    %c0_i32 = arith.constant 0 : i32
    %c0_i32_0 = arith.constant 0 : i32
    %c0_i32_1 = arith.constant 0 : i32
    %c0_i32_2 = arith.constant 0 : i32
    return %c0_i32, %c0_i32_0, %c0_i32_1 : i32, i32, i32
  }
  func.func @transform_16(%arg0: i32) -> (i32, i32, i32) {
    %c0_i32 = arith.constant 0 : i32
    %c0_i32_0 = arith.constant 0 : i32
    %c0_i32_1 = arith.constant 0 : i32
    %c0_i32_2 = arith.constant 0 : i32
    return %c0_i32, %c0_i32_0, %c0_i32_1 : i32, i32, i32
  }
  func.func @transform_17(%arg0: i32) -> (i32, i32, i32) {
    %c0_i32 = arith.constant 0 : i32
    %c0_i32_0 = arith.constant 0 : i32
    %c0_i32_1 = arith.constant 0 : i32
    %c0_i32_2 = arith.constant 0 : i32
    return %c0_i32, %c0_i32_0, %c0_i32_1 : i32, i32, i32
  }
  func.func @transform_18(%arg0: i32) -> (i32, i32) {
    %c0_i32 = arith.constant 0 : i32
    %c0_i32_0 = arith.constant 0 : i32
    %c0_i32_1 = arith.constant 0 : i32
    return %c0_i32, %c0_i32_0 : i32, i32
  }
  func.func @transform_19(%arg0: i32) -> (i32, i32) {
    %c0_i32 = arith.constant 0 : i32
    %c0_i32_0 = arith.constant 0 : i32
    %c0_i32_1 = arith.constant 0 : i32
    return %c0_i32, %c0_i32_0 : i32, i32
  }
  func.func @transform_20(%arg0: i32) -> (i32, i32) {
    %c0_i32 = arith.constant 0 : i32
    %c0_i32_0 = arith.constant 0 : i32
    %c0_i32_1 = arith.constant 0 : i32
    return %c0_i32, %c0_i32_0 : i32, i32
  }
  func.func @transform_21(%arg0: i32) -> (i32, i32) {
    %c0_i32 = arith.constant 0 : i32
    %c0_i32_0 = arith.constant 0 : i32
    %c0_i32_1 = arith.constant 0 : i32
    return %c0_i32, %c0_i32_0 : i32, i32
  }
  func.func @transform_22(%arg0: i32) -> (i32, i32) {
    %c0_i32 = arith.constant 0 : i32
    %c0_i32_0 = arith.constant 0 : i32
    %c0_i32_1 = arith.constant 0 : i32
    return %c0_i32, %c0_i32_0 : i32, i32
  }
}

</mosaic_0001>

<llo_original>
// kernel: tpu_custom_call.1
$region0: #{tpu_custom_call.1}
  #allocation0 [shape = 'u32[]', space=smem, size = 0x4, offset = 0x4, fixed_abs, tag = 'smem constant byte address 0x4 - core index']
  #allocation1 [shape = 'u32[144,128]{1,0:T(1,128)}', space=vmem, size = 0x12000, scoped, tag = 'internal scratch']
  %s0 = inlined_call_operand.vmem [shape: s32[16,1], index: 0, kind: input, shape index: {}]
  %s1 = inlined_call_operand.vmem [shape: f32[2,8], index: 1, kind: input, shape index: {}]
  %s2 = inlined_call_operand.vmem [shape: f32[100,32], index: 2, kind: input, shape index: {}]
  %s3 = inlined_call_operand.vmem [shape: f32[8,32], index: 3, kind: input, shape index: {}]
  %s4 = inlined_call_operand.vmem [shape: f32[1,32], index: 4, kind: input, shape index: {}]
  %s5 = inlined_call_operand.vmem [shape: f32[1,32], index: 5, kind: input, shape index: {}]
  %s6 = inlined_call_operand.vmem [shape: f32[2,32,96], index: 6, kind: input, shape index: {}]
  %s7 = inlined_call_operand.vmem [shape: f32[2,1,96], index: 7, kind: input, shape index: {}]
  %s8 = inlined_call_operand.vmem [shape: f32[2,32,32], index: 8, kind: input, shape index: {}]
  %s9 = inlined_call_operand.vmem [shape: f32[2,1,32], index: 9, kind: input, shape index: {}]
  %s10 = inlined_call_operand.vmem [shape: f32[2,1,32], index: 10, kind: input, shape index: {}]
  %s11 = inlined_call_operand.vmem [shape: f32[2,1,32], index: 11, kind: input, shape index: {}]
  %s12 = inlined_call_operand.vmem [shape: f32[2,32,64], index: 12, kind: input, shape index: {}]
  %s13 = inlined_call_operand.vmem [shape: f32[2,1,64], index: 13, kind: input, shape index: {}]
  %s14 = inlined_call_operand.vmem [shape: f32[2,64,32], index: 14, kind: input, shape index: {}]
  %s15 = inlined_call_operand.vmem [shape: f32[2,1,32], index: 15, kind: input, shape index: {}]
  %s16 = inlined_call_operand.vmem [shape: f32[2,1,32], index: 16, kind: input, shape index: {}]
  %s17 = inlined_call_operand.vmem [shape: f32[2,1,32], index: 17, kind: input, shape index: {}]
  %s18 = inlined_call_operand.vmem [shape: f32[32,32], index: 18, kind: input, shape index: {}]
  %s19 = inlined_call_operand.vmem [shape: f32[1,32], index: 19, kind: input, shape index: {}]
  %s20 = inlined_call_operand.vmem [shape: f32[32,3], index: 20, kind: input, shape index: {}]
  %s21 = inlined_call_operand.vmem [shape: f32[1,3], index: 21, kind: input, shape index: {}]
  %s22 = inlined_call_operand.hbm [shape: f32[2,3], index: 22, kind: output, shape index: {}]
  %s23 = sld [smem:[#allocation0]]
  $region98: #{tpu_custom_call.1} parent=0
    _
  %s25 = ssub.s32 1, %s23
  %s26 = scalar_select 0, %s25, %s23
  $region1: #{tpu_custom_call.1} parent=0
    #allocation2 [shape = 'u8[1024]{0}', space=vmem, size = 0x400, scoped, tag = 'output window, operand 0, single buffered']
    #allocation3 [shape = 's32[1]{0}', space=sflag, size = 0x4, scoped, tag = 'scoped memory for tpu_custom_call.1']
    %27 = vsyncpa [#allocation3], 0
    // Predicated region
    $region2: #{tpu_custom_call.1} parent=1 // pred_check
      _
    $region3: #{tpu_custom_call.1} parent=1 // pred_check_branch
      %29 = sbr.rel (0) target = $region5
    $region4: #{tpu_custom_call.1} parent=1 // pred_region
      _
    $region5: #{tpu_custom_call.1} parent=1 // pred_fallthru
      _
    // Predicated region
    $region6: #{tpu_custom_call.1} parent=1 // pred_check
      _
    $region7: #{tpu_custom_call.1} parent=1 // pred_check_branch
      %31 = sbr.rel (0) target = $region9
    $region8: #{tpu_custom_call.1} parent=1 // pred_region
      _
    $region9: #{tpu_custom_call.1} parent=1 // pred_fallthru
      _
    // Predicated region
    $region10: #{tpu_custom_call.1} parent=1 // pred_check
      _
    $region11: #{tpu_custom_call.1} parent=1 // pred_check_branch
      %33 = sbr.rel (0) target = $region13
    $region12: #{tpu_custom_call.1} parent=1 // pred_region
      _
    $region13: #{tpu_custom_call.1} parent=1 // pred_fallthru
      _
    // Predicated region
    $region14: #{tpu_custom_call.1} parent=1 // pred_check
      _
    $region15: #{tpu_custom_call.1} parent=1 // pred_check_branch
      %35 = sbr.rel (0) target = $region17
    $region16: #{tpu_custom_call.1} parent=1 // pred_region
      _
    $region17: #{tpu_custom_call.1} parent=1 // pred_fallthru
      _
    // Predicated region
    $region18: #{tpu_custom_call.1} parent=1 // pred_check
      _
    $region19: #{tpu_custom_call.1} parent=1 // pred_check_branch
      %37 = sbr.rel (0) target = $region21
    $region20: #{tpu_custom_call.1} parent=1 // pred_region
      _
    $region21: #{tpu_custom_call.1} parent=1 // pred_fallthru
      _
    // Predicated region
    $region22: #{tpu_custom_call.1} parent=1 // pred_check
      _
    $region23: #{tpu_custom_call.1} parent=1 // pred_check_branch
      %39 = sbr.rel (0) target = $region25
    $region24: #{tpu_custom_call.1} parent=1 // pred_region
      _
    $region25: #{tpu_custom_call.1} parent=1 // pred_fallthru
      _
    // Predicated region
    $region26: #{tpu_custom_call.1} parent=1 // pred_check
      _
    $region27: #{tpu_custom_call.1} parent=1 // pred_check_branch
      %41 = sbr.rel (0) target = $region29
    $region28: #{tpu_custom_call.1} parent=1 // pred_region
      _
    $region29: #{tpu_custom_call.1} parent=1 // pred_fallthru
      _
    // Predicated region
    $region30: #{tpu_custom_call.1} parent=1 // pred_check
      _
    $region31: #{tpu_custom_call.1} parent=1 // pred_check_branch
      %43 = sbr.rel (0) target = $region33
    $region32: #{tpu_custom_call.1} parent=1 // pred_region
      _
    $region33: #{tpu_custom_call.1} parent=1 // pred_fallthru
      _
    // Predicated region
    $region34: #{tpu_custom_call.1} parent=1 // pred_check
      _
    $region35: #{tpu_custom_call.1} parent=1 // pred_check_branch
      %45 = sbr.rel (0) target = $region37
    $region36: #{tpu_custom_call.1} parent=1 // pred_region
      _
    $region37: #{tpu_custom_call.1} parent=1 // pred_fallthru
      _
    // Predicated region
    $region38: #{tpu_custom_call.1} parent=1 // pred_check
      _
    $region39: #{tpu_custom_call.1} parent=1 // pred_check_branch
      %47 = sbr.rel (0) target = $region41
    $region40: #{tpu_custom_call.1} parent=1 // pred_region
      _
    $region41: #{tpu_custom_call.1} parent=1 // pred_fallthru
      _
    // Predicated region
    $region42: #{tpu_custom_call.1} parent=1 // pred_check
      _
    $region43: #{tpu_custom_call.1} parent=1 // pred_check_branch
      %49 = sbr.rel (0) target = $region45
    $region44: #{tpu_custom_call.1} parent=1 // pred_region
      _
    $region45: #{tpu_custom_call.1} parent=1 // pred_fallthru
      _
    // Predicated region
    $region46: #{tpu_custom_call.1} parent=1 // pred_check
      _
    $region47: #{tpu_custom_call.1} parent=1 // pred_check_branch
      %51 = sbr.rel (0) target = $region49
    $region48: #{tpu_custom_call.1} parent=1 // pred_region
      _
    $region49: #{tpu_custom_call.1} parent=1 // pred_fallthru
      _
    // Predicated region
    $region50: #{tpu_custom_call.1} parent=1 // pred_check
      _
    $region51: #{tpu_custom_call.1} parent=1 // pred_check_branch
      %53 = sbr.rel (0) target = $region53
    $region52: #{tpu_custom_call.1} parent=1 // pred_region
      _
    $region53: #{tpu_custom_call.1} parent=1 // pred_fallthru
      _
    // Predicated region
    $region54: #{tpu_custom_call.1} parent=1 // pred_check
      _
    $region55: #{tpu_custom_call.1} parent=1 // pred_check_branch
      %55 = sbr.rel (0) target = $region57
    $region56: #{tpu_custom_call.1} parent=1 // pred_region
      _
    $region57: #{tpu_custom_call.1} parent=1 // pred_fallthru
      _
    // Predicated region
    $region58: #{tpu_custom_call.1} parent=1 // pred_check
      _
    $region59: #{tpu_custom_call.1} parent=1 // pred_check_branch
      %57 = sbr.rel (0) target = $region61
    $region60: #{tpu_custom_call.1} parent=1 // pred_region
      _
    $region61: #{tpu_custom_call.1} parent=1 // pred_fallthru
      _
    // Predicated region
    $region62: #{tpu_custom_call.1} parent=1 // pred_check
      _
    $region63: #{tpu_custom_call.1} parent=1 // pred_check_branch
      %59 = sbr.rel (0) target = $region65
    $region64: #{tpu_custom_call.1} parent=1 // pred_region
      _
    $region65: #{tpu_custom_call.1} parent=1 // pred_fallthru
      _
    // Predicated region
    $region66: #{tpu_custom_call.1} parent=1 // pred_check
      _
    $region67: #{tpu_custom_call.1} parent=1 // pred_check_branch
      %61 = sbr.rel (0) target = $region69
    $region68: #{tpu_custom_call.1} parent=1 // pred_region
      _
    $region69: #{tpu_custom_call.1} parent=1 // pred_fallthru
      _
    // Predicated region
    $region70: #{tpu_custom_call.1} parent=1 // pred_check
      _
    $region71: #{tpu_custom_call.1} parent=1 // pred_check_branch
      %63 = sbr.rel (0) target = $region73
    $region72: #{tpu_custom_call.1} parent=1 // pred_region
      _
    $region73: #{tpu_custom_call.1} parent=1 // pred_fallthru
      _
    // Predicated region
    $region74: #{tpu_custom_call.1} parent=1 // pred_check
      _
    $region75: #{tpu_custom_call.1} parent=1 // pred_check_branch
      %65 = sbr.rel (0) target = $region77
    $region76: #{tpu_custom_call.1} parent=1 // pred_region
      _
    $region77: #{tpu_custom_call.1} parent=1 // pred_fallthru
      _
    // Predicated region
    $region78: #{tpu_custom_call.1} parent=1 // pred_check
      _
    $region79: #{tpu_custom_call.1} parent=1 // pred_check_branch
      %67 = sbr.rel (0) target = $region81
    $region80: #{tpu_custom_call.1} parent=1 // pred_region
      _
    $region81: #{tpu_custom_call.1} parent=1 // pred_fallthru
      _
    // Predicated region
    $region82: #{tpu_custom_call.1} parent=1 // pred_check
      _
    $region83: #{tpu_custom_call.1} parent=1 // pred_check_branch
      %69 = sbr.rel (0) target = $region85
    $region84: #{tpu_custom_call.1} parent=1 // pred_region
      _
    $region85: #{tpu_custom_call.1} parent=1 // pred_fallthru
      _
    // Predicated region
    $region86: #{tpu_custom_call.1} parent=1 // pred_check
      _
    $region87: #{tpu_custom_call.1} parent=1 // pred_check_branch
      %71 = sbr.rel (0) target = $region89
    $region88: #{tpu_custom_call.1} parent=1 // pred_region
      _
    $region89: #{tpu_custom_call.1} parent=1 // pred_fallthru
      _
    %v72 = vld [vmem:[%s0] sm:$0xff]
    %v73 = vld [vmem:[%s0 + $0x8] sm:$0xff]
    %v74 = vlaneseq
    %v75 = vand.u32 %v74, 127
    %76 = vset.pattern.permute.xlu0 0
    %77 = vperm.xlu0 %76, %v72
    %v78 = vpop.permute.xlu0 %77
    %79 = vset.pattern.permute.xlu0 0
    %80 = vperm.xlu0 %79, %v73
    %v81 = vpop.permute.xlu0 %80
    %vm82 = vcmp.eq.s32.totalorder %v78, %v75
    %vm83 = vcmp.eq.s32.totalorder %v81, %v75
    %v84 = vsel %vm82, 1, 0
    %v85 = vsel %vm83, 1, 0
    %v86 = vcvt.s32.f32 %v84
    %v87 = vcvt.s32.f32 %v85
    %v88 = vld [vmem:[%s2] sm:$0xff]
    %v89 = vld [vmem:[%s2 + $0x8] sm:$0xff]
    %v90 = vld [vmem:[%s2 + $0x10] sm:$0xff]
    %v91 = vld [vmem:[%s2 + $0x18] sm:$0xff]
    %v92 = vld [vmem:[%s2 + $0x20] sm:$0xff]
    %v93 = vld [vmem:[%s2 + $0x28] sm:$0xff]
    %v94 = vld [vmem:[%s2 + $0x30] sm:$0xff]
    %v95 = vld [vmem:[%s2 + $0x38] sm:$0xff]
    %v96 = vld [vmem:[%s2 + $0x40] sm:$0xff]
    %v97 = vld [vmem:[%s2 + $0x48] sm:$0xff]
    %v98 = vld [vmem:[%s2 + $0x50] sm:$0xff]
    %v99 = vld [vmem:[%s2 + $0x58] sm:$0xff]
    %v100 = vld [vmem:[%s2 + $0x60] sm:$0xf]
    %v101 = vld [vmem:[%s3] sm:$0xff]
    %vm102 = vcmask 818176
    %v104 = vsel %vm102, %v86, 0
    %v107 = vsel %vm102, %v87, 0
    %vm109 = vcmask 1043456
    %v111 = vsel %vm109, %v100, 0
    %113 = vmatprep.subr.mxu0 0.0
    %114 = vmatpush1.msra.mxu0 0.0
    %115 = vmatprep.subr.mxu0 0.0
    %116 = vmatpush1.msra.mxu0 0.0
    %117 = vmatprep.subr.mxu0 0.0
    %118 = vmatpush1.msra.mxu0 0.0
    %119 = vmatprep.subr.mxu0 0.0
    %120 = vmatpush1.msra.mxu0 %v111
    %121 = vmatprep.subr.mxu0 0.0
    %122 = vmatpush1.msra.mxu0 %v99
    %123 = vmatprep.subr.mxu0 0.0
    %124 = vmatpush1.msra.mxu0 %v98
    %125 = vmatprep.subr.mxu0 0.0
    %126 = vmatpush1.msra.mxu0 %v97
    %127 = vmatprep.subr.mxu0 0.0
    %128 = vmatpush1.msra.mxu0 %v96
    %129 = vmatprep.subr.mxu0 0.0
    %130 = vmatpush1.msra.mxu0 %v95
    %131 = vmatprep.subr.mxu0 0.0
    %132 = vmatpush1.msra.mxu0 %v94
    %133 = vmatprep.subr.mxu0 0.0
    %134 = vmatpush1.msra.mxu0 %v93
    %135 = vmatprep.subr.mxu0 0.0
    %136 = vmatpush1.msra.mxu0 %v92
    %137 = vmatprep.subr.mxu0 0.0
    %138 = vmatpush1.msra.mxu0 %v91
    %139 = vmatprep.subr.mxu0 0.0
    %140 = vmatpush1.msra.mxu0 %v90
    %141 = vmatprep.subr.mxu0 0.0
    %142 = vmatpush1.msra.mxu0 %v89
    %143 = vmatprep.subr.mxu0 0.0
    %144 = vmatpush1.msra.mxu0 %v88
    %145 = vmatprep.subr.mxu0 0.0
    %146 = vmatpush2.msra.mxu0 0.0
    %147 = vmatprep.subr.mxu0 0.0
    %148 = vmatpush2.msra.mxu0 0.0
    %149 = vmatprep.subr.mxu0 0.0
    %150 = vmatpush2.msra.mxu0 0.0
    %151 = vmatprep.subr.mxu0 0.0
    %152 = vmatpush2.msra.mxu0 0.0
    %153 = vmatprep.subr.mxu0 0.0
    %154 = vmatpush2.msra.mxu0 0.0
    %155 = vmatprep.subr.mxu0 0.0
    %156 = vmatpush2.msra.mxu0 0.0
    %157 = vmatprep.subr.mxu0 0.0
    %158 = vmatpush2.msra.mxu0 0.0
    %159 = vmatprep.subr.mxu0 0.0
    %160 = vmatpush2.msra.mxu0 0.0
    %161 = vmatprep.subr.mxu0 0.0
    %162 = vmatpush2.msra.mxu0 0.0
    %163 = vmatprep.subr.mxu0 0.0
    %164 = vmatpush2.msra.mxu0 0.0
    %165 = vmatprep.subr.mxu0 0.0
    %166 = vmatpush2.msra.mxu0 0.0
    %167 = vmatprep.subr.mxu0 0.0
    %168 = vmatpush2.msra.mxu0 0.0
    %169 = vmatprep.subr.mxu0 0.0
    %170 = vmatpush2.msra.mxu0 0.0
    %171 = vmatprep.subr.mxu0 0.0
    %172 = vmatpush2.msra.mxu0 0.0
    %173 = vmatprep.subr.mxu0 0.0
    %174 = vmatpush2.msra.mxu0 0.0
    %175 = vmatprep.subr.mxu0 0.0
    %176 = vmatpush2.msra.mxu0 0.0
    %177 = vmatprep.mubr.f32.mxu0 0.0
    %178 = vmatmul.mubr.f32.gmra.mxu0 %v104
    %v179 = vpop.f32.mrf.mxu0
    %v180 = vadd.f32 %v101, %v179
    %v181 = vpop.f32.mrf.mxu0
    %182 = vmatprep.mubr.f32.mxu0 0.0
    %183 = vmatmul.mubr.f32.gmra.mxu0 %v107
    %v184 = vpop.f32.mrf.mxu0
    %v185 = vadd.f32 %v101, %v184
    %v186 = vpop.f32.mrf.mxu0
    %187 = vdwg.mxu0
    %v188 = vld [vmem:[%s4] sm:$0x1]
    %v189 = vld [vmem:[%s5] sm:$0x1]
    %vm190 = vcmask 261120
    %v191 = vsel %vm190, %v180, 0.0
    %192 = vadd.xlane.f32.xlu0 %v191
    %v193 = vpop.xlane.xlu0 %192
    %v194 = vsel %vm190, %v185, 0.0
    %195 = vadd.xlane.f32.xlu0 %v194
    %v196 = vpop.xlane.xlu0 %195
    %v197 = vrcp.pop 32.0
    %v198 = vmul.f32 %v193, %v197
    %v199 = vmul.f32 %v196, %v197
    %v200 = vsub.f32 %v180, %v198
    %v201 = vsub.f32 %v185, %v199
    %v202 = vmul.f32 %v200, %v200
    %v203 = vmul.f32 %v201, %v201
    %v204 = vsel %vm190, %v202, 0.0
    %205 = vadd.xlane.f32.xlu0 %v204
    %v206 = vpop.xlane.xlu0 %205
    %v207 = vsel %vm190, %v203, 0.0
    %208 = vadd.xlane.f32.xlu0 %v207
    %v209 = vpop.xlane.xlu0 %208
    %v210 = vmul.f32 %v206, %v197
    %v211 = vmul.f32 %v209, %v197
    %v212 = vadd.f32 %v210, 1e-12
    %v213 = vadd.f32 %v211, 1e-12
    %v214 = vrsqrt.pop %v212
    %v215 = vrsqrt.pop %v213
    %v216 = vmul.f32 %v200, %v214
    %v217 = vmul.f32 %v201, %v215
    %v219 = vlaneseq
    %v220 = vshrl.u32 %v219, 7
    %v221 = vsub.s32 0, %v220
    %v222 = vrot.slane %v188, %v221
    %v224 = vmul.f32 %v216, %v222
    %v225 = vmul.f32 %v217, %v222
    %v227 = vlaneseq
    %v228 = vshrl.u32 %v227, 7
    %v229 = vsub.s32 0, %v228
    %v230 = vrot.slane %v189, %v229
    %v232 = vadd.f32 %v224, %v230
    %v233 = vadd.f32 %v225, %v230
    %v234 = vld [vmem:[%s1] sm:$0x3]
    %v235 = vsub.f32 1.0, %v234
    %v236 = vmul.f32 %v235, -10000.0
    %v237 = vld [vmem:[%s6] sm:$0xff]
    %v238 = vld [vmem:[%s6 + $0x8] sm:$0xff]
    %v239 = vld [vmem:[%s6 + $0x10] sm:$0xff]
    %v240 = vld [vmem:[%s6 + $0x18] sm:$0xff]
    %v241 = vld [vmem:[%s7] sm:$0x1]
    %v243 = vlaneseq
    %v244 = vshrl.u32 %v243, 7
    %v245 = vsub.s32 0, %v244
    %v246 = vrot.slane %v241, %v245
    %v249 = vsel %vm190, %v232, 0
    %v252 = vsel %vm190, %v233, 0
    %254 = vmatprep.subr.mxu0 0.0
    %255 = vmatpush1.msra.mxu0 0.0
    %256 = vmatprep.subr.mxu0 0.0
    %257 = vmatpush1.msra.mxu0 0.0
    %258 = vmatprep.subr.mxu0 0.0
    %259 = vmatpush1.msra.mxu0 0.0
    %260 = vmatprep.subr.mxu0 0.0
    %261 = vmatpush1.msra.mxu0 0.0
    %262 = vmatprep.subr.mxu0 0.0
    %263 = vmatpush1.msra.mxu0 0.0
    %264 = vmatprep.subr.mxu0 0.0
    %265 = vmatpush1.msra.mxu0 0.0
    %266 = vmatprep.subr.mxu0 0.0
    %267 = vmatpush1.msra.mxu0 0.0
    %268 = vmatprep.subr.mxu0 0.0
    %269 = vmatpush1.msra.mxu0 0.0
    %270 = vmatprep.subr.mxu0 0.0
    %271 = vmatpush1.msra.mxu0 0.0
    %272 = vmatprep.subr.mxu0 0.0
    %273 = vmatpush1.msra.mxu0 0.0
    %274 = vmatprep.subr.mxu0 0.0
    %275 = vmatpush1.msra.mxu0 0.0
    %276 = vmatprep.subr.mxu0 0.0
    %277 = vmatpush1.msra.mxu0 0.0
    %278 = vmatprep.subr.mxu0 0.0
    %279 = vmatpush1.msra.mxu0 %v240
    %280 = vmatprep.subr.mxu0 0.0
    %281 = vmatpush1.msra.mxu0 %v239
    %282 = vmatprep.subr.mxu0 0.0
    %283 = vmatpush1.msra.mxu0 %v238
    %284 = vmatprep.subr.mxu0 0.0
    %285 = vmatpush1.msra.mxu0 %v237
    %286 = vmatprep.subr.mxu0 0.0
    %287 = vmatpush2.msra.mxu0 0.0
    %288 = vmatprep.subr.mxu0 0.0
    %289 = vmatpush2.msra.mxu0 0.0
    %290 = vmatprep.subr.mxu0 0.0
    %291 = vmatpush2.msra.mxu0 0.0
    %292 = vmatprep.subr.mxu0 0.0
    %293 = vmatpush2.msra.mxu0 0.0
    %294 = vmatprep.subr.mxu0 0.0
    %295 = vmatpush2.msra.mxu0 0.0
    %296 = vmatprep.subr.mxu0 0.0
    %297 = vmatpush2.msra.mxu0 0.0
    %298 = vmatprep.subr.mxu0 0.0
    %299 = vmatpush2.msra.mxu0 0.0
    %300 = vmatprep.subr.mxu0 0.0
    %301 = vmatpush2.msra.mxu0 0.0
    %302 = vmatprep.subr.mxu0 0.0
    %303 = vmatpush2.msra.mxu0 0.0
    %304 = vmatprep.subr.mxu0 0.0
    %305 = vmatpush2.msra.mxu0 0.0
    %306 = vmatprep.subr.mxu0 0.0
    %307 = vmatpush2.msra.mxu0 0.0
    %308 = vmatprep.subr.mxu0 0.0
    %309 = vmatpush2.msra.mxu0 0.0
    %310 = vmatprep.subr.mxu0 0.0
    %311 = vmatpush2.msra.mxu0 0.0
    %312 = vmatprep.subr.mxu0 0.0
    %313 = vmatpush2.msra.mxu0 0.0
    %314 = vmatprep.subr.mxu0 0.0
    %315 = vmatpush2.msra.mxu0 0.0
    %316 = vmatprep.subr.mxu0 0.0
    %317 = vmatpush2.msra.mxu0 0.0
    %318 = vmatprep.mubr.f32.mxu0 0.0
    %319 = vmatmul.mubr.f32.gmra.mxu0 %v249
    %v320 = vpop.f32.mrf.mxu0
    %v321 = vadd.f32 %v246, %v320
    %v322 = vpop.f32.mrf.mxu0
    %323 = vmatprep.mubr.f32.mxu0 0.0
    %324 = vmatmul.mubr.f32.gmra.mxu0 %v252
    %v325 = vpop.f32.mrf.mxu0
    %v326 = vadd.f32 %v246, %v325
    %v327 = vpop.f32.mrf.mxu0
    %328 = vdwg.mxu0
    %330 = vrot.lane.b32.xlu0 %v321, 96
    %v331 = vpop.permute.xlu0 %330
    %vm332 = vcmask 130048
    %v333 = vsel %vm332, %v321, 0
    %v335 = vsel %vm332, %v331, 0
    %337 = vmatprep.subr.mxu0 0.0
    %338 = vmatpush1.xpose.msra.mxu0 0.0
    %339 = vmatprep.subr.mxu0 0.0
    %340 = vmatpush1.xpose.msra.mxu0 0.0
    %341 = vmatprep.subr.mxu0 0.0
    %342 = vmatpush1.xpose.msra.mxu0 0.0
    %343 = vmatprep.subr.mxu0 0.0
    %344 = vmatpush1.xpose.msra.mxu0 0.0
    %345 = vmatprep.subr.mxu0 0.0
    %346 = vmatpush1.xpose.msra.mxu0 0.0
    %347 = vmatprep.subr.mxu0 0.0
    %348 = vmatpush1.xpose.msra.mxu0 0.0
    %349 = vmatprep.subr.mxu0 0.0
    %350 = vmatpush1.xpose.msra.mxu0 0.0
    %351 = vmatprep.subr.mxu0 0.0
    %352 = vmatpush1.xpose.msra.mxu0 0.0
    %353 = vmatprep.subr.mxu0 0.0
    %354 = vmatpush1.xpose.msra.mxu0 0.0
    %355 = vmatprep.subr.mxu0 0.0
    %356 = vmatpush1.xpose.msra.mxu0 0.0
    %357 = vmatprep.subr.mxu0 0.0
    %358 = vmatpush1.xpose.msra.mxu0 0.0
    %359 = vmatprep.subr.mxu0 0.0
    %360 = vmatpush1.xpose.msra.mxu0 0.0
    %361 = vmatprep.subr.mxu0 0.0
    %362 = vmatpush1.xpose.msra.mxu0 0.0
    %363 = vmatprep.subr.mxu0 0.0
    %364 = vmatpush1.xpose.msra.mxu0 0.0
    %365 = vmatprep.subr.mxu0 0.0
    %366 = vmatpush1.xpose.msra.mxu0 0.0
    %367 = vmatprep.subr.mxu0 0.0
    %368 = vmatpush1.xpose.msra.mxu0 %v335
    %369 = vmatprep.subr.mxu0 0.0
    %370 = vmatpush2.xpose.msra.mxu0 0.0
    %371 = vmatprep.subr.mxu0 0.0
    %372 = vmatpush2.xpose.msra.mxu0 0.0
    %373 = vmatprep.subr.mxu0 0.0
    %374 = vmatpush2.xpose.msra.mxu0 0.0
    %375 = vmatprep.subr.mxu0 0.0
    %376 = vmatpush2.xpose.msra.mxu0 0.0
    %377 = vmatprep.subr.mxu0 0.0
    %378 = vmatpush2.xpose.msra.mxu0 0.0
    %379 = vmatprep.subr.mxu0 0.0
    %380 = vmatpush2.xpose.msra.mxu0 0.0
    %381 = vmatprep.subr.mxu0 0.0
    %382 = vmatpush2.xpose.msra.mxu0 0.0
    %383 = vmatprep.subr.mxu0 0.0
    %384 = vmatpush2.xpose.msra.mxu0 0.0
    %385 = vmatprep.subr.mxu0 0.0
    %386 = vmatpush2.xpose.msra.mxu0 0.0
    %387 = vmatprep.subr.mxu0 0.0
    %388 = vmatpush2.xpose.msra.mxu0 0.0
    %389 = vmatprep.subr.mxu0 0.0
    %390 = vmatpush2.xpose.msra.mxu0 0.0
    %391 = vmatprep.subr.mxu0 0.0
    %392 = vmatpush2.xpose.msra.mxu0 0.0
    %393 = vmatprep.subr.mxu0 0.0
    %394 = vmatpush2.xpose.msra.mxu0 0.0
    %395 = vmatprep.subr.mxu0 0.0
    %396 = vmatpush2.xpose.msra.mxu0 0.0
    %397 = vmatprep.subr.mxu0 0.0
    %398 = vmatpush2.xpose.msra.mxu0 0.0
    %399 = vmatprep.subr.mxu0 0.0
    %400 = vmatpush2.xpose.msra.mxu0 0.0
    %401 = vmatprep.mubr.f32.mxu0 0.0
    %402 = vmatmul.mubr.f32.gmra.mxu0 %v333
    %v403 = vpop.f32.mrf.mxu0
    %v404 = vadd.f32 0.0, %v403
    %v405 = vpop.f32.mrf.mxu0
    %406 = vdwg.mxu0
    %v407 = vmul.f32 %v404, 0.25
    %v408 = vlaneseq
    %v409 = vshrl.u32 %v408, 7
    %v410 = vsub.s32 0, %v409
    %v411 = vrot.slane %v236, %v410
    %v412 = vadd.f32 %v407, %v411
    %vm413 = vcmask 64512
    %v414 = vsel %vm413, %v412, -inf
    %415 = vmax.xlane.f32.xlu0 %v414
    %v416 = vpop.xlane.xlu0 %415
    %v417 = vsub.f32 %v412, %v416
    %v418 = vmul.f32 %v417, 1.442695
    %v419 = vpow.pop %v418
    %v420 = vsel %vm413, %v419, 0.0
    %421 = vadd.xlane.f32.xlu0 %v420
    %v422 = vpop.xlane.xlu0 %421
    %v423 = vrcp.pop %v422
    %v424 = vmul.f32 %v419, %v423
    %425 = vrot.lane.b32.xlu0 %v321, 64
    %v426 = vpop.permute.xlu0 %425
    %v429 = vsel %vm413, %v424, 0
    %431 = vmatprep.subr.mxu0 0.0
    %432 = vmatpush1.msra.mxu0 0.0
    %433 = vmatprep.subr.mxu0 0.0
    %434 = vmatpush1.msra.mxu0 0.0
    %435 = vmatprep.subr.mxu0 0.0
    %436 = vmatpush1.msra.mxu0 0.0
    %437 = vmatprep.subr.mxu0 0.0
    %438 = vmatpush1.msra.mxu0 0.0
    %439 = vmatprep.subr.mxu0 0.0
    %440 = vmatpush1.msra.mxu0 0.0
    %441 = vmatprep.subr.mxu0 0.0
    %442 = vmatpush1.msra.mxu0 0.0
    %443 = vmatprep.subr.mxu0 0.0
    %444 = vmatpush1.msra.mxu0 0.0
    %445 = vmatprep.subr.mxu0 0.0
    %446 = vmatpush1.msra.mxu0 0.0
    %447 = vmatprep.subr.mxu0 0.0
    %448 = vmatpush1.msra.mxu0 0.0
    %449 = vmatprep.subr.mxu0 0.0
    %450 = vmatpush1.msra.mxu0 0.0
    %451 = vmatprep.subr.mxu0 0.0
    %452 = vmatpush1.msra.mxu0 0.0
    %453 = vmatprep.subr.mxu0 0.0
    %454 = vmatpush1.msra.mxu0 0.0
    %455 = vmatprep.subr.mxu0 0.0
    %456 = vmatpush1.msra.mxu0 0.0
    %457 = vmatprep.subr.mxu0 0.0
    %458 = vmatpush1.msra.mxu0 0.0
    %459 = vmatprep.subr.mxu0 0.0
    %460 = vmatpush1.msra.mxu0 0.0
    %461 = vmatprep.subr.mxu0 0.0
    %462 = vmatpush1.msra.mxu0 %v426
    %463 = vmatprep.subr.mxu0 0.0
    %464 = vmatpush2.msra.mxu0 0.0
    %465 = vmatprep.subr.mxu0 0.0
    %466 = vmatpush2.msra.mxu0 0.0
    %467 = vmatprep.subr.mxu0 0.0
    %468 = vmatpush2.msra.mxu0 0.0
    %469 = vmatprep.subr.mxu0 0.0
    %470 = vmatpush2.msra.mxu0 0.0
    %471 = vmatprep.subr.mxu0 0.0
    %472 = vmatpush2.msra.mxu0 0.0
    %473 = vmatprep.subr.mxu0 0.0
    %474 = vmatpush2.msra.mxu0 0.0
    %475 = vmatprep.subr.mxu0 0.0
    %476 = vmatpush2.msra.mxu0 0.0
    %477 = vmatprep.subr.mxu0 0.0
    %478 = vmatpush2.msra.mxu0 0.0
    %479 = vmatprep.subr.mxu0 0.0
    %480 = vmatpush2.msra.mxu0 0.0
    %481 = vmatprep.subr.mxu0 0.0
    %482 = vmatpush2.msra.mxu0 0.0
    %483 = vmatprep.subr.mxu0 0.0
    %484 = vmatpush2.msra.mxu0 0.0
    %485 = vmatprep.subr.mxu0 0.0
    %486 = vmatpush2.msra.mxu0 0.0
    %487 = vmatprep.subr.mxu0 0.0
    %488 = vmatpush2.msra.mxu0 0.0
    %489 = vmatprep.subr.mxu0 0.0
    %490 = vmatpush2.msra.mxu0 0.0
    %491 = vmatprep.subr.mxu0 0.0
    %492 = vmatpush2.msra.mxu0 0.0
    %493 = vmatprep.subr.mxu0 0.0
    %494 = vmatpush2.msra.mxu0 0.0
    %495 = vmatprep.mubr.f32.mxu0 0.0
    %496 = vmatmul.mubr.f32.gmra.mxu0 %v429
    %v497 = vpop.f32.mrf.mxu0
    %v498 = vadd.f32 0.0, %v497
    %v499 = vpop.f32.mrf.mxu0
    %500 = vdwg.mxu0
    %501 = vrot.lane.b32.xlu0 %v321, 112
    %v502 = vpop.permute.xlu0 %501
    %503 = vrot.lane.b32.xlu0 %v321, 80
    %v504 = vpop.permute.xlu0 %503
    %v505 = vsel %vm332, %v502, 0
    %v507 = vsel %vm332, %v504, 0
    %509 = vmatprep.subr.mxu0 0.0
    %510 = vmatpush1.xpose.msra.mxu0 0.0
    %511 = vmatprep.subr.mxu0 0.0
    %512 = vmatpush1.xpose.msra.mxu0 0.0
    %513 = vmatprep.subr.mxu0 0.0
    %514 = vmatpush1.xpose.msra.mxu0 0.0
    %515 = vmatprep.subr.mxu0 0.0
    %516 = vmatpush1.xpose.msra.mxu0 0.0
    %517 = vmatprep.subr.mxu0 0.0
    %518 = vmatpush1.xpose.msra.mxu0 0.0
    %519 = vmatprep.subr.mxu0 0.0
    %520 = vmatpush1.xpose.msra.mxu0 0.0
    %521 = vmatprep.subr.mxu0 0.0
    %522 = vmatpush1.xpose.msra.mxu0 0.0
    %523 = vmatprep.subr.mxu0 0.0
    %524 = vmatpush1.xpose.msra.mxu0 0.0
    %525 = vmatprep.subr.mxu0 0.0
    %526 = vmatpush1.xpose.msra.mxu0 0.0
    %527 = vmatprep.subr.mxu0 0.0
    %528 = vmatpush1.xpose.msra.mxu0 0.0
    %529 = vmatprep.subr.mxu0 0.0
    %530 = vmatpush1.xpose.msra.mxu0 0.0
    %531 = vmatprep.subr.mxu0 0.0
    %532 = vmatpush1.xpose.msra.mxu0 0.0
    %533 = vmatprep.subr.mxu0 0.0
    %534 = vmatpush1.xpose.msra.mxu0 0.0
    %535 = vmatprep.subr.mxu0 0.0
    %536 = vmatpush1.xpose.msra.mxu0 0.0
    %537 = vmatprep.subr.mxu0 0.0
    %538 = vmatpush1.xpose.msra.mxu0 0.0
    %539 = vmatprep.subr.mxu0 0.0
    %540 = vmatpush1.xpose.msra.mxu0 %v507
    %541 = vmatprep.subr.mxu0 0.0
    %542 = vmatpush2.xpose.msra.mxu0 0.0
    %543 = vmatprep.subr.mxu0 0.0
    %544 = vmatpush2.xpose.msra.mxu0 0.0
    %545 = vmatprep.subr.mxu0 0.0
    %546 = vmatpush2.xpose.msra.mxu0 0.0
    %547 = vmatprep.subr.mxu0 0.0
    %548 = vmatpush2.xpose.msra.mxu0 0.0
    %549 = vmatprep.subr.mxu0 0.0
    %550 = vmatpush2.xpose.msra.mxu0 0.0
    %551 = vmatprep.subr.mxu0 0.0
    %552 = vmatpush2.xpose.msra.mxu0 0.0
    %553 = vmatprep.subr.mxu0 0.0
    %554 = vmatpush2.xpose.msra.mxu0 0.0
    %555 = vmatprep.subr.mxu0 0.0
    %556 = vmatpush2.xpose.msra.mxu0 0.0
    %557 = vmatprep.subr.mxu0 0.0
    %558 = vmatpush2.xpose.msra.mxu0 0.0
    %559 = vmatprep.subr.mxu0 0.0
    %560 = vmatpush2.xpose.msra.mxu0 0.0
    %561 = vmatprep.subr.mxu0 0.0
    %562 = vmatpush2.xpose.msra.mxu0 0.0
    %563 = vmatprep.subr.mxu0 0.0
    %564 = vmatpush2.xpose.msra.mxu0 0.0
    %565 = vmatprep.subr.mxu0 0.0
    %566 = vmatpush2.xpose.msra.mxu0 0.0
    %567 = vmatprep.subr.mxu0 0.0
    %568 = vmatpush2.xpose.msra.mxu0 0.0
    %569 = vmatprep.subr.mxu0 0.0
    %570 = vmatpush2.xpose.msra.mxu0 0.0
    %571 = vmatprep.subr.mxu0 0.0
    %572 = vmatpush2.xpose.msra.mxu0 0.0
    %573 = vmatprep.mubr.f32.mxu0 0.0
    %574 = vmatmul.mubr.f32.gmra.mxu0 %v505
    %v575 = vpop.f32.mrf.mxu0
    %v576 = vadd.f32 0.0, %v575
    %v577 = vpop.f32.mrf.mxu0
    %578 = vdwg.mxu0
    %v579 = vmul.f32 %v576, 0.25
    %v580 = vadd.f32 %v579, %v411
    %v581 = vsel %vm413, %v580, -inf
    %582 = vmax.xlane.f32.xlu0 %v581
    %v583 = vpop.xlane.xlu0 %582
    %v584 = vsub.f32 %v580, %v583
    %v585 = vmul.f32 %v584, 1.442695
    %v586 = vpow.pop %v585
    %v587 = vsel %vm413, %v586, 0.0
    %588 = vadd.xlane.f32.xlu0 %v587
    %v589 = vpop.xlane.xlu0 %588
    %v590 = vrcp.pop %v589
    %v591 = vmul.f32 %v586, %v590
    %592 = vrot.lane.b32.xlu0 %v321, 48
    %v593 = vpop.permute.xlu0 %592
    %v596 = vsel %vm413, %v591, 0
    %598 = vmatprep.subr.mxu0 0.0
    %599 = vmatpush1.msra.mxu0 0.0
    %600 = vmatprep.subr.mxu0 0.0
    %601 = vmatpush1.msra.mxu0 0.0
    %602 = vmatprep.subr.mxu0 0.0
    %603 = vmatpush1.msra.mxu0 0.0
    %604 = vmatprep.subr.mxu0 0.0
    %605 = vmatpush1.msra.mxu0 0.0
    %606 = vmatprep.subr.mxu0 0.0
    %607 = vmatpush1.msra.mxu0 0.0
    %608 = vmatprep.subr.mxu0 0.0
    %609 = vmatpush1.msra.mxu0 0.0
    %610 = vmatprep.subr.mxu0 0.0
    %611 = vmatpush1.msra.mxu0 0.0
    %612 = vmatprep.subr.mxu0 0.0
    %613 = vmatpush1.msra.mxu0 0.0
    %614 = vmatprep.subr.mxu0 0.0
    %615 = vmatpush1.msra.mxu0 0.0
    %616 = vmatprep.subr.mxu0 0.0
    %617 = vmatpush1.msra.mxu0 0.0
    %618 = vmatprep.subr.mxu0 0.0
    %619 = vmatpush1.msra.mxu0 0.0
    %620 = vmatprep.subr.mxu0 0.0
    %621 = vmatpush1.msra.mxu0 0.0
    %622 = vmatprep.subr.mxu0 0.0
    %623 = vmatpush1.msra.mxu0 0.0
    %624 = vmatprep.subr.mxu0 0.0
    %625 = vmatpush1.msra.mxu0 0.0
    %626 = vmatprep.subr.mxu0 0.0
    %627 = vmatpush1.msra.mxu0 0.0
    %628 = vmatprep.subr.mxu0 0.0
    %629 = vmatpush1.msra.mxu0 %v593
    %630 = vmatprep.subr.mxu0 0.0
    %631 = vmatpush2.msra.mxu0 0.0
    %632 = vmatprep.subr.mxu0 0.0
    %633 = vmatpush2.msra.mxu0 0.0
    %634 = vmatprep.subr.mxu0 0.0
    %635 = vmatpush2.msra.mxu0 0.0
    %636 = vmatprep.subr.mxu0 0.0
    %637 = vmatpush2.msra.mxu0 0.0
    %638 = vmatprep.subr.mxu0 0.0
    %639 = vmatpush2.msra.mxu0 0.0
    %640 = vmatprep.subr.mxu0 0.0
    %641 = vmatpush2.msra.mxu0 0.0
    %642 = vmatprep.subr.mxu0 0.0
    %643 = vmatpush2.msra.mxu0 0.0
    %644 = vmatprep.subr.mxu0 0.0
    %645 = vmatpush2.msra.mxu0 0.0
    %646 = vmatprep.subr.mxu0 0.0
    %647 = vmatpush2.msra.mxu0 0.0
    %648 = vmatprep.subr.mxu0 0.0
    %649 = vmatpush2.msra.mxu0 0.0
    %650 = vmatprep.subr.mxu0 0.0
    %651 = vmatpush2.msra.mxu0 0.0
    %652 = vmatprep.subr.mxu0 0.0
    %653 = vmatpush2.msra.mxu0 0.0
    %654 = vmatprep.subr.mxu0 0.0
    %655 = vmatpush2.msra.mxu0 0.0
    %656 = vmatprep.subr.mxu0 0.0
    %657 = vmatpush2.msra.mxu0 0.0
    %658 = vmatprep.subr.mxu0 0.0
    %659 = vmatpush2.msra.mxu0 0.0
    %660 = vmatprep.subr.mxu0 0.0
    %661 = vmatpush2.msra.mxu0 0.0
    %662 = vmatprep.mubr.f32.mxu0 0.0
    %663 = vmatmul.mubr.f32.gmra.mxu0 %v596
    %v664 = vpop.f32.mrf.mxu0
    %v665 = vadd.f32 0.0, %v664
    %v666 = vpop.f32.mrf.mxu0
    %667 = vdwg.mxu0
    %669 = vrot.lane.b32.xlu0 %v665, 16
    %v670 = vpop.permute.xlu0 %669
    %v672 = vsel %vm332, %v498, %v670
    %674 = vrot.lane.b32.xlu0 %v326, 96
    %v675 = vpop.permute.xlu0 %674
    %v676 = vsel %vm332, %v326, 0
    %v678 = vsel %vm332, %v675, 0
    %680 = vmatprep.subr.mxu0 0.0
    %681 = vmatpush1.xpose.msra.mxu0 0.0
    %682 = vmatprep.subr.mxu0 0.0
    %683 = vmatpush1.xpose.msra.mxu0 0.0
    %684 = vmatprep.subr.mxu0 0.0
    %685 = vmatpush1.xpose.msra.mxu0 0.0
    %686 = vmatprep.subr.mxu0 0.0
    %687 = vmatpush1.xpose.msra.mxu0 0.0
    %688 = vmatprep.subr.mxu0 0.0
    %689 = vmatpush1.xpose.msra.mxu0 0.0
    %690 = vmatprep.subr.mxu0 0.0
    %691 = vmatpush1.xpose.msra.mxu0 0.0
    %692 = vmatprep.subr.mxu0 0.0
    %693 = vmatpush1.xpose.msra.mxu0 0.0
    %694 = vmatprep.subr.mxu0 0.0
    %695 = vmatpush1.xpose.msra.mxu0 0.0
    %696 = vmatprep.subr.mxu0 0.0
    %697 = vmatpush1.xpose.msra.mxu0 0.0
    %698 = vmatprep.subr.mxu0 0.0
    %699 = vmatpush1.xpose.msra.mxu0 0.0
    %700 = vmatprep.subr.mxu0 0.0
    %701 = vmatpush1.xpose.msra.mxu0 0.0
    %702 = vmatprep.subr.mxu0 0.0
    %703 = vmatpush1.xpose.msra.mxu0 0.0
    %704 = vmatprep.subr.mxu0 0.0
    %705 = vmatpush1.xpose.msra.mxu0 0.0
    %706 = vmatprep.subr.mxu0 0.0
    %707 = vmatpush1.xpose.msra.mxu0 0.0
    %708 = vmatprep.subr.mxu0 0.0
    %709 = vmatpush1.xpose.msra.mxu0 0.0
    %710 = vmatprep.subr.mxu0 0.0
    %711 = vmatpush1.xpose.msra.mxu0 %v678
    %712 = vmatprep.subr.mxu0 0.0
    %713 = vmatpush2.xpose.msra.mxu0 0.0
    %714 = vmatprep.subr.mxu0 0.0
    %715 = vmatpush2.xpose.msra.mxu0 0.0
    %716 = vmatprep.subr.mxu0 0.0
    %717 = vmatpush2.xpose.msra.mxu0 0.0
    %718 = vmatprep.subr.mxu0 0.0
    %719 = vmatpush2.xpose.msra.mxu0 0.0
    %720 = vmatprep.subr.mxu0 0.0
    %721 = vmatpush2.xpose.msra.mxu0 0.0
    %722 = vmatprep.subr.mxu0 0.0
    %723 = vmatpush2.xpose.msra.mxu0 0.0
    %724 = vmatprep.subr.mxu0 0.0
    %725 = vmatpush2.xpose.msra.mxu0 0.0
    %726 = vmatprep.subr.mxu0 0.0
    %727 = vmatpush2.xpose.msra.mxu0 0.0
    %728 = vmatprep.subr.mxu0 0.0
    %729 = vmatpush2.xpose.msra.mxu0 0.0
    %730 = vmatprep.subr.mxu0 0.0
    %731 = vmatpush2.xpose.msra.mxu0 0.0
    %732 = vmatprep.subr.mxu0 0.0
    %733 = vmatpush2.xpose.msra.mxu0 0.0
    %734 = vmatprep.subr.mxu0 0.0
    %735 = vmatpush2.xpose.msra.mxu0 0.0
    %736 = vmatprep.subr.mxu0 0.0
    %737 = vmatpush2.xpose.msra.mxu0 0.0
    %738 = vmatprep.subr.mxu0 0.0
    %739 = vmatpush2.xpose.msra.mxu0 0.0
    %740 = vmatprep.subr.mxu0 0.0
    %741 = vmatpush2.xpose.msra.mxu0 0.0
    %742 = vmatprep.subr.mxu0 0.0
    %743 = vmatpush2.xpose.msra.mxu0 0.0
    %744 = vmatprep.mubr.f32.mxu0 0.0
    %745 = vmatmul.mubr.f32.gmra.mxu0 %v676
    %v746 = vpop.f32.mrf.mxu0
    %v747 = vadd.f32 0.0, %v746
    %v748 = vpop.f32.mrf.mxu0
    %749 = vdwg.mxu0
    %v750 = vmul.f32 %v747, 0.25
    %v751 = vlaneseq
    %v752 = vshrl.u32 %v751, 7
    %v753 = vsub.s32 1, %v752
    %v754 = vrot.slane %v236, %v753
    %v755 = vadd.f32 %v750, %v754
    %v756 = vsel %vm413, %v755, -inf
    %757 = vmax.xlane.f32.xlu0 %v756
    %v758 = vpop.xlane.xlu0 %757
    %v759 = vsub.f32 %v755, %v758
    %v760 = vmul.f32 %v759, 1.442695
    %v761 = vpow.pop %v760
    %v762 = vsel %vm413, %v761, 0.0
    %763 = vadd.xlane.f32.xlu0 %v762
    %v764 = vpop.xlane.xlu0 %763
    %v765 = vrcp.pop %v764
    %v766 = vmul.f32 %v761, %v765
    %767 = vrot.lane.b32.xlu0 %v326, 64
    %v768 = vpop.permute.xlu0 %767
    %v771 = vsel %vm413, %v766, 0
    %773 = vmatprep.subr.mxu0 0.0
    %774 = vmatpush1.msra.mxu0 0.0
    %775 = vmatprep.subr.mxu0 0.0
    %776 = vmatpush1.msra.mxu0 0.0
    %777 = vmatprep.subr.mxu0 0.0
    %778 = vmatpush1.msra.mxu0 0.0
    %779 = vmatprep.subr.mxu0 0.0
    %780 = vmatpush1.msra.mxu0 0.0
    %781 = vmatprep.subr.mxu0 0.0
    %782 = vmatpush1.msra.mxu0 0.0
    %783 = vmatprep.subr.mxu0 0.0
    %784 = vmatpush1.msra.mxu0 0.0
    %785 = vmatprep.subr.mxu0 0.0
    %786 = vmatpush1.msra.mxu0 0.0
    %787 = vmatprep.subr.mxu0 0.0
    %788 = vmatpush1.msra.mxu0 0.0
    %789 = vmatprep.subr.mxu0 0.0
    %790 = vmatpush1.msra.mxu0 0.0
    %791 = vmatprep.subr.mxu0 0.0
    %792 = vmatpush1.msra.mxu0 0.0
    %793 = vmatprep.subr.mxu0 0.0
    %794 = vmatpush1.msra.mxu0 0.0
    %795 = vmatprep.subr.mxu0 0.0
    %796 = vmatpush1.msra.mxu0 0.0
    %797 = vmatprep.subr.mxu0 0.0
    %798 = vmatpush1.msra.mxu0 0.0
    %799 = vmatprep.subr.mxu0 0.0
    %800 = vmatpush1.msra.mxu0 0.0
    %801 = vmatprep.subr.mxu0 0.0
    %802 = vmatpush1.msra.mxu0 0.0
    %803 = vmatprep.subr.mxu0 0.0
    %804 = vmatpush1.msra.mxu0 %v768
    %805 = vmatprep.subr.mxu0 0.0
    %806 = vmatpush2.msra.mxu0 0.0
    %807 = vmatprep.subr.mxu0 0.0
    %808 = vmatpush2.msra.mxu0 0.0
    %809 = vmatprep.subr.mxu0 0.0
    %810 = vmatpush2.msra.mxu0 0.0
    %811 = vmatprep.subr.mxu0 0.0
    %812 = vmatpush2.msra.mxu0 0.0
    %813 = vmatprep.subr.mxu0 0.0
    %814 = vmatpush2.msra.mxu0 0.0
    %815 = vmatprep.subr.mxu0 0.0
    %816 = vmatpush2.msra.mxu0 0.0
    %817 = vmatprep.subr.mxu0 0.0
    %818 = vmatpush2.msra.mxu0 0.0
    %819 = vmatprep.subr.mxu0 0.0
    %820 = vmatpush2.msra.mxu0 0.0
    %821 = vmatprep.subr.mxu0 0.0
    %822 = vmatpush2.msra.mxu0 0.0
    %823 = vmatprep.subr.mxu0 0.0
    %824 = vmatpush2.msra.mxu0 0.0
    %825 = vmatprep.subr.mxu0 0.0
    %826 = vmatpush2.msra.mxu0 0.0
    %827 = vmatprep.subr.mxu0 0.0
    %828 = vmatpush2.msra.mxu0 0.0
    %829 = vmatprep.subr.mxu0 0.0
    %830 = vmatpush2.msra.mxu0 0.0
    %831 = vmatprep.subr.mxu0 0.0
    %832 = vmatpush2.msra.mxu0 0.0
    %833 = vmatprep.subr.mxu0 0.0
    %834 = vmatpush2.msra.mxu0 0.0
    %835 = vmatprep.subr.mxu0 0.0
    %836 = vmatpush2.msra.mxu0 0.0
    %837 = vmatprep.mubr.f32.mxu0 0.0
    %838 = vmatmul.mubr.f32.gmra.mxu0 %v771
    %v839 = vpop.f32.mrf.mxu0
    %v840 = vadd.f32 0.0, %v839
    %v841 = vpop.f32.mrf.mxu0
    %842 = vdwg.mxu0
    %843 = vrot.lane.b32.xlu0 %v326, 112
    %v844 = vpop.permute.xlu0 %843
    %845 = vrot.lane.b32.xlu0 %v326, 80
    %v846 = vpop.permute.xlu0 %845
    %v847 = vsel %vm332, %v844, 0
    %v849 = vsel %vm332, %v846, 0
    %851 = vmatprep.subr.mxu0 0.0
    %852 = vmatpush1.xpose.msra.mxu0 0.0
    %853 = vmatprep.subr.mxu0 0.0
    %854 = vmatpush1.xpose.msra.mxu0 0.0
    %855 = vmatprep.subr.mxu0 0.0
    %856 = vmatpush1.xpose.msra.mxu0 0.0
    %857 = vmatprep.subr.mxu0 0.0
    %858 = vmatpush1.xpose.msra.mxu0 0.0
    %859 = vmatprep.subr.mxu0 0.0
    %860 = vmatpush1.xpose.msra.mxu0 0.0
    %861 = vmatprep.subr.mxu0 0.0
    %862 = vmatpush1.xpose.msra.mxu0 0.0
    %863 = vmatprep.subr.mxu0 0.0
    %864 = vmatpush1.xpose.msra.mxu0 0.0
    %865 = vmatprep.subr.mxu0 0.0
    %866 = vmatpush1.xpose.msra.mxu0 0.0
    %867 = vmatprep.subr.mxu0 0.0
    %868 = vmatpush1.xpose.msra.mxu0 0.0
    %869 = vmatprep.subr.mxu0 0.0
    %870 = vmatpush1.xpose.msra.mxu0 0.0
    %871 = vmatprep.subr.mxu0 0.0
    %872 = vmatpush1.xpose.msra.mxu0 0.0
    %873 = vmatprep.subr.mxu0 0.0
    %874 = vmatpush1.xpose.msra.mxu0 0.0
    %875 = vmatprep.subr.mxu0 0.0
    %876 = vmatpush1.xpose.msra.mxu0 0.0
    %877 = vmatprep.subr.mxu0 0.0
    %878 = vmatpush1.xpose.msra.mxu0 0.0
    %879 = vmatprep.subr.mxu0 0.0
    %880 = vmatpush1.xpose.msra.mxu0 0.0
    %881 = vmatprep.subr.mxu0 0.0
    %882 = vmatpush1.xpose.msra.mxu0 %v849
    %883 = vmatprep.subr.mxu0 0.0
    %884 = vmatpush2.xpose.msra.mxu0 0.0
    %885 = vmatprep.subr.mxu0 0.0
    %886 = vmatpush2.xpose.msra.mxu0 0.0
    %887 = vmatprep.subr.mxu0 0.0
    %888 = vmatpush2.xpose.msra.mxu0 0.0
    %889 = vmatprep.subr.mxu0 0.0
    %890 = vmatpush2.xpose.msra.mxu0 0.0
    %891 = vmatprep.subr.mxu0 0.0
    %892 = vmatpush2.xpose.msra.mxu0 0.0
    %893 = vmatprep.subr.mxu0 0.0
    %894 = vmatpush2.xpose.msra.mxu0 0.0
    %895 = vmatprep.subr.mxu0 0.0
    %896 = vmatpush2.xpose.msra.mxu0 0.0
    %897 = vmatprep.subr.mxu0 0.0
    %898 = vmatpush2.xpose.msra.mxu0 0.0
    %899 = vmatprep.subr.mxu0 0.0
    %900 = vmatpush2.xpose.msra.mxu0 0.0
    %901 = vmatprep.subr.mxu0 0.0
    %902 = vmatpush2.xpose.msra.mxu0 0.0
    %903 = vmatprep.subr.mxu0 0.0
    %904 = vmatpush2.xpose.msra.mxu0 0.0
    %905 = vmatprep.subr.mxu0 0.0
    %906 = vmatpush2.xpose.msra.mxu0 0.0
    %907 = vmatprep.subr.mxu0 0.0
    %908 = vmatpush2.xpose.msra.mxu0 0.0
    %909 = vmatprep.subr.mxu0 0.0
    %910 = vmatpush2.xpose.msra.mxu0 0.0
    %911 = vmatprep.subr.mxu0 0.0
    %912 = vmatpush2.xpose.msra.mxu0 0.0
    %913 = vmatprep.subr.mxu0 0.0
    %914 = vmatpush2.xpose.msra.mxu0 0.0
    %915 = vmatprep.mubr.f32.mxu0 0.0
    %916 = vmatmul.mubr.f32.gmra.mxu0 %v847
    %v917 = vpop.f32.mrf.mxu0
    %v918 = vadd.f32 0.0, %v917
    %v919 = vpop.f32.mrf.mxu0
    %920 = vdwg.mxu0
    %v921 = vmul.f32 %v918, 0.25
    %v922 = vadd.f32 %v921, %v754
    %v923 = vsel %vm413, %v922, -inf
    %924 = vmax.xlane.f32.xlu0 %v923
    %v925 = vpop.xlane.xlu0 %924
    %v926 = vsub.f32 %v922, %v925
    %v927 = vmul.f32 %v926, 1.442695
    %v928 = vpow.pop %v927
    %v929 = vsel %vm413, %v928, 0.0
    %930 = vadd.xlane.f32.xlu0 %v929
    %v931 = vpop.xlane.xlu0 %930
    %v932 = vrcp.pop %v931
    %v933 = vmul.f32 %v928, %v932
    %934 = vrot.lane.b32.xlu0 %v326, 48
    %v935 = vpop.permute.xlu0 %934
    %v938 = vsel %vm413, %v933, 0
    %940 = vmatprep.subr.mxu0 0.0
    %941 = vmatpush1.msra.mxu0 0.0
    %942 = vmatprep.subr.mxu0 0.0
    %943 = vmatpush1.msra.mxu0 0.0
    %944 = vmatprep.subr.mxu0 0.0
    %945 = vmatpush1.msra.mxu0 0.0
    %946 = vmatprep.subr.mxu0 0.0
    %947 = vmatpush1.msra.mxu0 0.0
    %948 = vmatprep.subr.mxu0 0.0
    %949 = vmatpush1.msra.mxu0 0.0
    %950 = vmatprep.subr.mxu0 0.0
    %951 = vmatpush1.msra.mxu0 0.0
    %952 = vmatprep.subr.mxu0 0.0
    %953 = vmatpush1.msra.mxu0 0.0
    %954 = vmatprep.subr.mxu0 0.0
    %955 = vmatpush1.msra.mxu0 0.0
    %956 = vmatprep.subr.mxu0 0.0
    %957 = vmatpush1.msra.mxu0 0.0
    %958 = vmatprep.subr.mxu0 0.0
    %959 = vmatpush1.msra.mxu0 0.0
    %960 = vmatprep.subr.mxu0 0.0
    %961 = vmatpush1.msra.mxu0 0.0
    %962 = vmatprep.subr.mxu0 0.0
    %963 = vmatpush1.msra.mxu0 0.0
    %964 = vmatprep.subr.mxu0 0.0
    %965 = vmatpush1.msra.mxu0 0.0
    %966 = vmatprep.subr.mxu0 0.0
    %967 = vmatpush1.msra.mxu0 0.0
    %968 = vmatprep.subr.mxu0 0.0
    %969 = vmatpush1.msra.mxu0 0.0
    %970 = vmatprep.subr.mxu0 0.0
    %971 = vmatpush1.msra.mxu0 %v935
    %972 = vmatprep.subr.mxu0 0.0
    %973 = vmatpush2.msra.mxu0 0.0
    %974 = vmatprep.subr.mxu0 0.0
    %975 = vmatpush2.msra.mxu0 0.0
    %976 = vmatprep.subr.mxu0 0.0
    %977 = vmatpush2.msra.mxu0 0.0
    %978 = vmatprep.subr.mxu0 0.0
    %979 = vmatpush2.msra.mxu0 0.0
    %980 = vmatprep.subr.mxu0 0.0
    %981 = vmatpush2.msra.mxu0 0.0
    %982 = vmatprep.subr.mxu0 0.0
    %983 = vmatpush2.msra.mxu0 0.0
    %984 = vmatprep.subr.mxu0 0.0
    %985 = vmatpush2.msra.mxu0 0.0
    %986 = vmatprep.subr.mxu0 0.0
    %987 = vmatpush2.msra.mxu0 0.0
    %988 = vmatprep.subr.mxu0 0.0
    %989 = vmatpush2.msra.mxu0 0.0
    %990 = vmatprep.subr.mxu0 0.0
    %991 = vmatpush2.msra.mxu0 0.0
    %992 = vmatprep.subr.mxu0 0.0
    %993 = vmatpush2.msra.mxu0 0.0
    %994 = vmatprep.subr.mxu0 0.0
    %995 = vmatpush2.msra.mxu0 0.0
    %996 = vmatprep.subr.mxu0 0.0
    %997 = vmatpush2.msra.mxu0 0.0
    %998 = vmatprep.subr.mxu0 0.0
    %999 = vmatpush2.msra.mxu0 0.0
    %1000 = vmatprep.subr.mxu0 0.0
    %1001 = vmatpush2.msra.mxu0 0.0
    %1002 = vmatprep.subr.mxu0 0.0
    %1003 = vmatpush2.msra.mxu0 0.0
    %1004 = vmatprep.mubr.f32.mxu0 0.0
    %1005 = vmatmul.mubr.f32.gmra.mxu0 %v938
    %v1006 = vpop.f32.mrf.mxu0
    %v1007 = vadd.f32 0.0, %v1006
    %v1008 = vpop.f32.mrf.mxu0
    %1009 = vdwg.mxu0
    %1011 = vrot.lane.b32.xlu0 %v1007, 16
    %v1012 = vpop.permute.xlu0 %1011
    %v1014 = vsel %vm332, %v840, %v1012
    %v1015 = vld [vmem:[%s8] sm:$0xff]
    %v1016 = vld [vmem:[%s8 + $0x8] sm:$0xff]
    %v1017 = vld [vmem:[%s8 + $0x10] sm:$0xff]
    %v1018 = vld [vmem:[%s8 + $0x18] sm:$0xff]
    %v1019 = vld [vmem:[%s9] sm:$0x1]
    %v1021 = vlaneseq
    %v1022 = vshrl.u32 %v1021, 7
    %v1023 = vsub.s32 0, %v1022
    %v1024 = vrot.slane %v1019, %v1023
    %v1027 = vsel %vm190, %v672, 0
    %v1030 = vsel %vm190, %v1014, 0
    %1032 = vmatprep.subr.mxu0 0.0
    %1033 = vmatpush1.msra.mxu0 0.0
    %1034 = vmatprep.subr.mxu0 0.0
    %1035 = vmatpush1.msra.mxu0 0.0
    %1036 = vmatprep.subr.mxu0 0.0
    %1037 = vmatpush1.msra.mxu0 0.0
    %1038 = vmatprep.subr.mxu0 0.0
    %1039 = vmatpush1.msra.mxu0 0.0
    %1040 = vmatprep.subr.mxu0 0.0
    %1041 = vmatpush1.msra.mxu0 0.0
    %1042 = vmatprep.subr.mxu0 0.0
    %1043 = vmatpush1.msra.mxu0 0.0
    %1044 = vmatprep.subr.mxu0 0.0
    %1045 = vmatpush1.msra.mxu0 0.0
    %1046 = vmatprep.subr.mxu0 0.0
    %1047 = vmatpush1.msra.mxu0 0.0
    %1048 = vmatprep.subr.mxu0 0.0
    %1049 = vmatpush1.msra.mxu0 0.0
    %1050 = vmatprep.subr.mxu0 0.0
    %1051 = vmatpush1.msra.mxu0 0.0
    %1052 = vmatprep.subr.mxu0 0.0
    %1053 = vmatpush1.msra.mxu0 0.0
    %1054 = vmatprep.subr.mxu0 0.0
    %1055 = vmatpush1.msra.mxu0 0.0
    %1056 = vmatprep.subr.mxu0 0.0
    %1057 = vmatpush1.msra.mxu0 %v1018
    %1058 = vmatprep.subr.mxu0 0.0
    %1059 = vmatpush1.msra.mxu0 %v1017
    %1060 = vmatprep.subr.mxu0 0.0
    %1061 = vmatpush1.msra.mxu0 %v1016
    %1062 = vmatprep.subr.mxu0 0.0
    %1063 = vmatpush1.msra.mxu0 %v1015
    %1064 = vmatprep.subr.mxu0 0.0
    %1065 = vmatpush2.msra.mxu0 0.0
    %1066 = vmatprep.subr.mxu0 0.0
    %1067 = vmatpush2.msra.mxu0 0.0
    %1068 = vmatprep.subr.mxu0 0.0
    %1069 = vmatpush2.msra.mxu0 0.0
    %1070 = vmatprep.subr.mxu0 0.0
    %1071 = vmatpush2.msra.mxu0 0.0
    %1072 = vmatprep.subr.mxu0 0.0
    %1073 = vmatpush2.msra.mxu0 0.0
    %1074 = vmatprep.subr.mxu0 0.0
    %1075 = vmatpush2.msra.mxu0 0.0
    %1076 = vmatprep.subr.mxu0 0.0
    %1077 = vmatpush2.msra.mxu0 0.0
    %1078 = vmatprep.subr.mxu0 0.0
    %1079 = vmatpush2.msra.mxu0 0.0
    %1080 = vmatprep.subr.mxu0 0.0
    %1081 = vmatpush2.msra.mxu0 0.0
    %1082 = vmatprep.subr.mxu0 0.0
    %1083 = vmatpush2.msra.mxu0 0.0
    %1084 = vmatprep.subr.mxu0 0.0
    %1085 = vmatpush2.msra.mxu0 0.0
    %1086 = vmatprep.subr.mxu0 0.0
    %1087 = vmatpush2.msra.mxu0 0.0
    %1088 = vmatprep.subr.mxu0 0.0
    %1089 = vmatpush2.msra.mxu0 0.0
    %1090 = vmatprep.subr.mxu0 0.0
    %1091 = vmatpush2.msra.mxu0 0.0
    %1092 = vmatprep.subr.mxu0 0.0
    %1093 = vmatpush2.msra.mxu0 0.0
    %1094 = vmatprep.subr.mxu0 0.0
    %1095 = vmatpush2.msra.mxu0 0.0
    %1096 = vmatprep.mubr.f32.mxu0 0.0
    %1097 = vmatmul.mubr.f32.gmra.mxu0 %v1027
    %v1098 = vpop.f32.mrf.mxu0
    %v1099 = vadd.f32 %v1024, %v1098
    %v1100 = vpop.f32.mrf.mxu0
    %1101 = vmatprep.mubr.f32.mxu0 0.0
    %1102 = vmatmul.mubr.f32.gmra.mxu0 %v1030
    %v1103 = vpop.f32.mrf.mxu0
    %v1104 = vadd.f32 %v1024, %v1103
    %v1105 = vpop.f32.mrf.mxu0
    %1106 = vdwg.mxu0
    %v1107 = vadd.f32 %v232, %v1099
    %v1108 = vadd.f32 %v233, %v1104
    %v1109 = vld [vmem:[%s10] sm:$0x1]
    %v1110 = vld [vmem:[%s11] sm:$0x1]
    %v1111 = vsel %vm190, %v1107, 0.0
    %1112 = vadd.xlane.f32.xlu0 %v1111
    %v1113 = vpop.xlane.xlu0 %1112
    %v1114 = vsel %vm190, %v1108, 0.0
    %1115 = vadd.xlane.f32.xlu0 %v1114
    %v1116 = vpop.xlane.xlu0 %1115
    %v1117 = vmul.f32 %v1113, %v197
    %v1118 = vmul.f32 %v1116, %v197
    %v1119 = vsub.f32 %v1107, %v1117
    %v1120 = vsub.f32 %v1108, %v1118
    %v1121 = vmul.f32 %v1119, %v1119
    %v1122 = vmul.f32 %v1120, %v1120
    %v1123 = vsel %vm190, %v1121, 0.0
    %1124 = vadd.xlane.f32.xlu0 %v1123
    %v1125 = vpop.xlane.xlu0 %1124
    %v1126 = vsel %vm190, %v1122, 0.0
    %1127 = vadd.xlane.f32.xlu0 %v1126
    %v1128 = vpop.xlane.xlu0 %1127
    %v1129 = vmul.f32 %v1125, %v197
    %v1130 = vmul.f32 %v1128, %v197
    %v1131 = vadd.f32 %v1129, 1e-12
    %v1132 = vadd.f32 %v1130, 1e-12
    %v1133 = vrsqrt.pop %v1131
    %v1134 = vrsqrt.pop %v1132
    %v1135 = vmul.f32 %v1119, %v1133
    %v1136 = vmul.f32 %v1120, %v1134
    %v1138 = vlaneseq
    %v1139 = vshrl.u32 %v1138, 7
    %v1140 = vsub.s32 0, %v1139
    %v1141 = vrot.slane %v1109, %v1140
    %v1143 = vmul.f32 %v1135, %v1141
    %v1144 = vmul.f32 %v1136, %v1141
    %v1146 = vlaneseq
    %v1147 = vshrl.u32 %v1146, 7
    %v1148 = vsub.s32 0, %v1147
    %v1149 = vrot.slane %v1110, %v1148
    %v1151 = vadd.f32 %v1143, %v1149
    %v1152 = vadd.f32 %v1144, %v1149
    %v1153 = vld [vmem:[%s12] sm:$0xff]
    %v1154 = vld [vmem:[%s12 + $0x8] sm:$0xff]
    %v1155 = vld [vmem:[%s12 + $0x10] sm:$0xff]
    %v1156 = vld [vmem:[%s12 + $0x18] sm:$0xff]
    %v1157 = vld [vmem:[%s13] sm:$0x1]
    %v1159 = vlaneseq
    %v1160 = vshrl.u32 %v1159, 7
    %v1161 = vsub.s32 0, %v1160
    %v1162 = vrot.slane %v1157, %v1161
    %v1165 = vsel %vm190, %v1151, 0
    %v1168 = vsel %vm190, %v1152, 0
    %1170 = vmatprep.subr.mxu0 0.0
    %1171 = vmatpush1.msra.mxu0 0.0
    %1172 = vmatprep.subr.mxu0 0.0
    %1173 = vmatpush1.msra.mxu0 0.0
    %1174 = vmatprep.subr.mxu0 0.0
    %1175 = vmatpush1.msra.mxu0 0.0
    %1176 = vmatprep.subr.mxu0 0.0
    %1177 = vmatpush1.msra.mxu0 0.0
    %1178 = vmatprep.subr.mxu0 0.0
    %1179 = vmatpush1.msra.mxu0 0.0
    %1180 = vmatprep.subr.mxu0 0.0
    %1181 = vmatpush1.msra.mxu0 0.0
    %1182 = vmatprep.subr.mxu0 0.0
    %1183 = vmatpush1.msra.mxu0 0.0
    %1184 = vmatprep.subr.mxu0 0.0
    %1185 = vmatpush1.msra.mxu0 0.0
    %1186 = vmatprep.subr.mxu0 0.0
    %1187 = vmatpush1.msra.mxu0 0.0
    %1188 = vmatprep.subr.mxu0 0.0
    %1189 = vmatpush1.msra.mxu0 0.0
    %1190 = vmatprep.subr.mxu0 0.0
    %1191 = vmatpush1.msra.mxu0 0.0
    %1192 = vmatprep.subr.mxu0 0.0
    %1193 = vmatpush1.msra.mxu0 0.0
    %1194 = vmatprep.subr.mxu0 0.0
    %1195 = vmatpush1.msra.mxu0 %v1156
    %1196 = vmatprep.subr.mxu0 0.0
    %1197 = vmatpush1.msra.mxu0 %v1155
    %1198 = vmatprep.subr.mxu0 0.0
    %1199 = vmatpush1.msra.mxu0 %v1154
    %1200 = vmatprep.subr.mxu0 0.0
    %1201 = vmatpush1.msra.mxu0 %v1153
    %1202 = vmatprep.subr.mxu0 0.0
    %1203 = vmatpush2.msra.mxu0 0.0
    %1204 = vmatprep.subr.mxu0 0.0
    %1205 = vmatpush2.msra.mxu0 0.0
    %1206 = vmatprep.subr.mxu0 0.0
    %1207 = vmatpush2.msra.mxu0 0.0
    %1208 = vmatprep.subr.mxu0 0.0
    %1209 = vmatpush2.msra.mxu0 0.0
    %1210 = vmatprep.subr.mxu0 0.0
    %1211 = vmatpush2.msra.mxu0 0.0
    %1212 = vmatprep.subr.mxu0 0.0
    %1213 = vmatpush2.msra.mxu0 0.0
    %1214 = vmatprep.subr.mxu0 0.0
    %1215 = vmatpush2.msra.mxu0 0.0
    %1216 = vmatprep.subr.mxu0 0.0
    %1217 = vmatpush2.msra.mxu0 0.0
    %1218 = vmatprep.subr.mxu0 0.0
    %1219 = vmatpush2.msra.mxu0 0.0
    %1220 = vmatprep.subr.mxu0 0.0
    %1221 = vmatpush2.msra.mxu0 0.0
    %1222 = vmatprep.subr.mxu0 0.0
    %1223 = vmatpush2.msra.mxu0 0.0
    %1224 = vmatprep.subr.mxu0 0.0
    %1225 = vmatpush2.msra.mxu0 0.0
    %1226 = vmatprep.subr.mxu0 0.0
    %1227 = vmatpush2.msra.mxu0 0.0
    %1228 = vmatprep.subr.mxu0 0.0
    %1229 = vmatpush2.msra.mxu0 0.0
    %1230 = vmatprep.subr.mxu0 0.0
    %1231 = vmatpush2.msra.mxu0 0.0
    %1232 = vmatprep.subr.mxu0 0.0
    %1233 = vmatpush2.msra.mxu0 0.0
    %1234 = vmatprep.mubr.f32.mxu0 0.0
    %1235 = vmatmul.mubr.f32.gmra.mxu0 %v1165
    %v1236 = vpop.f32.mrf.mxu0
    %v1237 = vadd.f32 %v1162, %v1236
    %v1238 = vpop.f32.mrf.mxu0
    %1239 = vmatprep.mubr.f32.mxu0 0.0
    %1240 = vmatmul.mubr.f32.gmra.mxu0 %v1168
    %v1241 = vpop.f32.mrf.mxu0
    %v1242 = vadd.f32 %v1162, %v1241
    %v1243 = vpop.f32.mrf.mxu0
    %1244 = vdwg.mxu0
    %v1245 = vmul.f32 %v1237, 0.5
    %v1246 = vmul.f32 %v1242, 0.5
    %v1247 = vmul.f32 %v1237, 0.044715
    %v1248 = vmul.f32 %v1242, 0.044715
    %v1249 = vmul.f32 %v1247, %v1237
    %v1250 = vmul.f32 %v1248, %v1242
    %v1251 = vmul.f32 %v1249, %v1237
    %v1252 = vmul.f32 %v1250, %v1242
    %v1253 = vadd.f32 %v1237, %v1251
    %v1254 = vadd.f32 %v1242, %v1252
    %v1255 = vmul.f32 %v1253, 0.7978846
    %v1256 = vmul.f32 %v1254, 0.7978846
    %v1257 = vtanh.pop %v1255
    %v1258 = vtanh.pop %v1256
    %v1259 = vadd.f32 %v1257, 1.0
    %v1260 = vadd.f32 %v1258, 1.0
    %v1261 = vmul.f32 %v1245, %v1259
    %v1262 = vmul.f32 %v1246, %v1260
    %v1263 = vld [vmem:[%s14] sm:$0xff]
    %v1264 = vld [vmem:[%s14 + $0x8] sm:$0xff]
    %v1265 = vld [vmem:[%s14 + $0x10] sm:$0xff]
    %v1266 = vld [vmem:[%s14 + $0x18] sm:$0xff]
    %v1267 = vld [vmem:[%s14 + $0x20] sm:$0xff]
    %v1268 = vld [vmem:[%s14 + $0x28] sm:$0xff]
    %v1269 = vld [vmem:[%s14 + $0x30] sm:$0xff]
    %v1270 = vld [vmem:[%s14 + $0x38] sm:$0xff]
    %v1271 = vld [vmem:[%s15] sm:$0x1]
    %v1273 = vlaneseq
    %v1274 = vshrl.u32 %v1273, 7
    %v1275 = vsub.s32 0, %v1274
    %v1276 = vrot.slane %v1271, %v1275
    %vm1278 = vcmask 523264
    %v1280 = vsel %vm1278, %v1261, 0
    %v1283 = vsel %vm1278, %v1262, 0
    %1285 = vmatprep.subr.mxu0 0.0
    %1286 = vmatpush1.msra.mxu0 0.0
    %1287 = vmatprep.subr.mxu0 0.0
    %1288 = vmatpush1.msra.mxu0 0.0
    %1289 = vmatprep.subr.mxu0 0.0
    %1290 = vmatpush1.msra.mxu0 0.0
    %1291 = vmatprep.subr.mxu0 0.0
    %1292 = vmatpush1.msra.mxu0 0.0
    %1293 = vmatprep.subr.mxu0 0.0
    %1294 = vmatpush1.msra.mxu0 0.0
    %1295 = vmatprep.subr.mxu0 0.0
    %1296 = vmatpush1.msra.mxu0 0.0
    %1297 = vmatprep.subr.mxu0 0.0
    %1298 = vmatpush1.msra.mxu0 0.0
    %1299 = vmatprep.subr.mxu0 0.0
    %1300 = vmatpush1.msra.mxu0 0.0
    %1301 = vmatprep.subr.mxu0 0.0
    %1302 = vmatpush1.msra.mxu0 %v1270
    %1303 = vmatprep.subr.mxu0 0.0
    %1304 = vmatpush1.msra.mxu0 %v1269
    %1305 = vmatprep.subr.mxu0 0.0
    %1306 = vmatpush1.msra.mxu0 %v1268
    %1307 = vmatprep.subr.mxu0 0.0
    %1308 = vmatpush1.msra.mxu0 %v1267
    %1309 = vmatprep.subr.mxu0 0.0
    %1310 = vmatpush1.msra.mxu0 %v1266
    %1311 = vmatprep.subr.mxu0 0.0
    %1312 = vmatpush1.msra.mxu0 %v1265
    %1313 = vmatprep.subr.mxu0 0.0
    %1314 = vmatpush1.msra.mxu0 %v1264
    %1315 = vmatprep.subr.mxu0 0.0
    %1316 = vmatpush1.msra.mxu0 %v1263
    %1317 = vmatprep.subr.mxu0 0.0
    %1318 = vmatpush2.msra.mxu0 0.0
    %1319 = vmatprep.subr.mxu0 0.0
    %1320 = vmatpush2.msra.mxu0 0.0
    %1321 = vmatprep.subr.mxu0 0.0
    %1322 = vmatpush2.msra.mxu0 0.0
    %1323 = vmatprep.subr.mxu0 0.0
    %1324 = vmatpush2.msra.mxu0 0.0
    %1325 = vmatprep.subr.mxu0 0.0
    %1326 = vmatpush2.msra.mxu0 0.0
    %1327 = vmatprep.subr.mxu0 0.0
    %1328 = vmatpush2.msra.mxu0 0.0
    %1329 = vmatprep.subr.mxu0 0.0
    %1330 = vmatpush2.msra.mxu0 0.0
    %1331 = vmatprep.subr.mxu0 0.0
    %1332 = vmatpush2.msra.mxu0 0.0
    %1333 = vmatprep.subr.mxu0 0.0
    %1334 = vmatpush2.msra.mxu0 0.0
    %1335 = vmatprep.subr.mxu0 0.0
    %1336 = vmatpush2.msra.mxu0 0.0
    %1337 = vmatprep.subr.mxu0 0.0
    %1338 = vmatpush2.msra.mxu0 0.0
    %1339 = vmatprep.subr.mxu0 0.0
    %1340 = vmatpush2.msra.mxu0 0.0
    %1341 = vmatprep.subr.mxu0 0.0
    %1342 = vmatpush2.msra.mxu0 0.0
    %1343 = vmatprep.subr.mxu0 0.0
    %1344 = vmatpush2.msra.mxu0 0.0
    %1345 = vmatprep.subr.mxu0 0.0
    %1346 = vmatpush2.msra.mxu0 0.0
    %1347 = vmatprep.subr.mxu0 0.0
    %1348 = vmatpush2.msra.mxu0 0.0
    %1349 = vmatprep.mubr.f32.mxu0 0.0
    %1350 = vmatmul.mubr.f32.gmra.mxu0 %v1280
    %v1351 = vpop.f32.mrf.mxu0
    %v1352 = vadd.f32 %v1276, %v1351
    %v1353 = vpop.f32.mrf.mxu0
    %1354 = vmatprep.mubr.f32.mxu0 0.0
    %1355 = vmatmul.mubr.f32.gmra.mxu0 %v1283
    %v1356 = vpop.f32.mrf.mxu0
    %v1357 = vadd.f32 %v1276, %v1356
    %v1358 = vpop.f32.mrf.mxu0
    %1359 = vdwg.mxu0
    %v1360 = vadd.f32 %v1151, %v1352
    %v1361 = vadd.f32 %v1152, %v1357
    %v1362 = vld [vmem:[%s16] sm:$0x1]
    %v1363 = vld [vmem:[%s17] sm:$0x1]
    %v1364 = vsel %vm190, %v1360, 0.0
    %1365 = vadd.xlane.f32.xlu0 %v1364
    %v1366 = vpop.xlane.xlu0 %1365
    %v1367 = vsel %vm190, %v1361, 0.0
    %1368 = vadd.xlane.f32.xlu0 %v1367
    %v1369 = vpop.xlane.xlu0 %1368
    %v1370 = vmul.f32 %v1366, %v197
    %v1371 = vmul.f32 %v1369, %v197
    %v1372 = vsub.f32 %v1360, %v1370
    %v1373 = vsub.f32 %v1361, %v1371
    %v1374 = vmul.f32 %v1372, %v1372
    %v1375 = vmul.f32 %v1373, %v1373
    %v1376 = vsel %vm190, %v1374, 0.0
    %1377 = vadd.xlane.f32.xlu0 %v1376
    %v1378 = vpop.xlane.xlu0 %1377
    %v1379 = vsel %vm190, %v1375, 0.0
    %1380 = vadd.xlane.f32.xlu0 %v1379
    %v1381 = vpop.xlane.xlu0 %1380
    %v1382 = vmul.f32 %v1378, %v197
    %v1383 = vmul.f32 %v1381, %v197
    %v1384 = vadd.f32 %v1382, 1e-12
    %v1385 = vadd.f32 %v1383, 1e-12
    %v1386 = vrsqrt.pop %v1384
    %v1387 = vrsqrt.pop %v1385
    %v1388 = vmul.f32 %v1372, %v1386
    %v1389 = vmul.f32 %v1373, %v1387
    %v1391 = vlaneseq
    %v1392 = vshrl.u32 %v1391, 7
    %v1393 = vsub.s32 0, %v1392
    %v1394 = vrot.slane %v1362, %v1393
    %v1396 = vmul.f32 %v1388, %v1394
    %v1397 = vmul.f32 %v1389, %v1394
    %v1399 = vlaneseq
    %v1400 = vshrl.u32 %v1399, 7
    %v1401 = vsub.s32 0, %v1400
    %v1402 = vrot.slane %v1363, %v1401
    %v1404 = vadd.f32 %v1396, %v1402
    %v1405 = vadd.f32 %v1397, %v1402
    %s1406 = scalar_lea.vmem %s6, 32
    %v1407 = vld [vmem:[%s1406] sm:$0xff]
    %v1408 = vld [vmem:[%s1406 + $0x8] sm:$0xff]
    %v1409 = vld [vmem:[%s1406 + $0x10] sm:$0xff]
    %v1410 = vld [vmem:[%s1406 + $0x18] sm:$0xff]
    %s1411 = scalar_lea.vmem %s7, 1
    %v1412 = vld [vmem:[%s1411] sm:$0x1]
    %v1414 = vlaneseq
    %v1415 = vshrl.u32 %v1414, 7
    %v1416 = vsub.s32 0, %v1415
    %v1417 = vrot.slane %v1412, %v1416
    %v1420 = vsel %vm190, %v1404, 0
    %v1423 = vsel %vm190, %v1405, 0
    %1425 = vmatprep.subr.mxu0 0.0
    %1426 = vmatpush1.msra.mxu0 0.0
    %1427 = vmatprep.subr.mxu0 0.0
    %1428 = vmatpush1.msra.mxu0 0.0
    %1429 = vmatprep.subr.mxu0 0.0
    %1430 = vmatpush1.msra.mxu0 0.0
    %1431 = vmatprep.subr.mxu0 0.0
    %1432 = vmatpush1.msra.mxu0 0.0
    %1433 = vmatprep.subr.mxu0 0.0
    %1434 = vmatpush1.msra.mxu0 0.0
    %1435 = vmatprep.subr.mxu0 0.0
    %1436 = vmatpush1.msra.mxu0 0.0
    %1437 = vmatprep.subr.mxu0 0.0
    %1438 = vmatpush1.msra.mxu0 0.0
    %1439 = vmatprep.subr.mxu0 0.0
    %1440 = vmatpush1.msra.mxu0 0.0
    %1441 = vmatprep.subr.mxu0 0.0
    %1442 = vmatpush1.msra.mxu0 0.0
    %1443 = vmatprep.subr.mxu0 0.0
    %1444 = vmatpush1.msra.mxu0 0.0
    %1445 = vmatprep.subr.mxu0 0.0
    %1446 = vmatpush1.msra.mxu0 0.0
    %1447 = vmatprep.subr.mxu0 0.0
    %1448 = vmatpush1.msra.mxu0 0.0
    %1449 = vmatprep.subr.mxu0 0.0
    %1450 = vmatpush1.msra.mxu0 %v1410
    %1451 = vmatprep.subr.mxu0 0.0
    %1452 = vmatpush1.msra.mxu0 %v1409
    %1453 = vmatprep.subr.mxu0 0.0
    %1454 = vmatpush1.msra.mxu0 %v1408
    %1455 = vmatprep.subr.mxu0 0.0
    %1456 = vmatpush1.msra.mxu0 %v1407
    %1457 = vmatprep.subr.mxu0 0.0
    %1458 = vmatpush2.msra.mxu0 0.0
    %1459 = vmatprep.subr.mxu0 0.0
    %1460 = vmatpush2.msra.mxu0 0.0
    %1461 = vmatprep.subr.mxu0 0.0
    %1462 = vmatpush2.msra.mxu0 0.0
    %1463 = vmatprep.subr.mxu0 0.0
    %1464 = vmatpush2.msra.mxu0 0.0
    %1465 = vmatprep.subr.mxu0 0.0
    %1466 = vmatpush2.msra.mxu0 0.0
    %1467 = vmatprep.subr.mxu0 0.0
    %1468 = vmatpush2.msra.mxu0 0.0
    %1469 = vmatprep.subr.mxu0 0.0
    %1470 = vmatpush2.msra.mxu0 0.0
    %1471 = vmatprep.subr.mxu0 0.0
    %1472 = vmatpush2.msra.mxu0 0.0
    %1473 = vmatprep.subr.mxu0 0.0
    %1474 = vmatpush2.msra.mxu0 0.0
    %1475 = vmatprep.subr.mxu0 0.0
    %1476 = vmatpush2.msra.mxu0 0.0
    %1477 = vmatprep.subr.mxu0 0.0
    %1478 = vmatpush2.msra.mxu0 0.0
    %1479 = vmatprep.subr.mxu0 0.0
    %1480 = vmatpush2.msra.mxu0 0.0
    %1481 = vmatprep.subr.mxu0 0.0
    %1482 = vmatpush2.msra.mxu0 0.0
    %1483 = vmatprep.subr.mxu0 0.0
    %1484 = vmatpush2.msra.mxu0 0.0
    %1485 = vmatprep.subr.mxu0 0.0
    %1486 = vmatpush2.msra.mxu0 0.0
    %1487 = vmatprep.subr.mxu0 0.0
    %1488 = vmatpush2.msra.mxu0 0.0
    %1489 = vmatprep.mubr.f32.mxu0 0.0
    %1490 = vmatmul.mubr.f32.gmra.mxu0 %v1420
    %v1491 = vpop.f32.mrf.mxu0
    %v1492 = vadd.f32 %v1417, %v1491
    %v1493 = vpop.f32.mrf.mxu0
    %1494 = vmatprep.mubr.f32.mxu0 0.0
    %1495 = vmatmul.mubr.f32.gmra.mxu0 %v1423
    %v1496 = vpop.f32.mrf.mxu0
    %v1497 = vadd.f32 %v1417, %v1496
    %v1498 = vpop.f32.mrf.mxu0
    %1499 = vdwg.mxu0
    %1501 = vrot.lane.b32.xlu0 %v1492, 96
    %v1502 = vpop.permute.xlu0 %1501
    %v1503 = vsel %vm332, %v1492, 0
    %v1505 = vsel %vm332, %v1502, 0
    %1507 = vmatprep.subr.mxu0 0.0
    %1508 = vmatpush1.xpose.msra.mxu0 0.0
    %1509 = vmatprep.subr.mxu0 0.0
    %1510 = vmatpush1.xpose.msra.mxu0 0.0
    %1511 = vmatprep.subr.mxu0 0.0
    %1512 = vmatpush1.xpose.msra.mxu0 0.0
    %1513 = vmatprep.subr.mxu0 0.0
    %1514 = vmatpush1.xpose.msra.mxu0 0.0
    %1515 = vmatprep.subr.mxu0 0.0
    %1516 = vmatpush1.xpose.msra.mxu0 0.0
    %1517 = vmatprep.subr.mxu0 0.0
    %1518 = vmatpush1.xpose.msra.mxu0 0.0
    %1519 = vmatprep.subr.mxu0 0.0
    %1520 = vmatpush1.xpose.msra.mxu0 0.0
    %1521 = vmatprep.subr.mxu0 0.0
    %1522 = vmatpush1.xpose.msra.mxu0 0.0
    %1523 = vmatprep.subr.mxu0 0.0
    %1524 = vmatpush1.xpose.msra.mxu0 0.0
    %1525 = vmatprep.subr.mxu0 0.0
    %1526 = vmatpush1.xpose.msra.mxu0 0.0
    %1527 = vmatprep.subr.mxu0 0.0
    %1528 = vmatpush1.xpose.msra.mxu0 0.0
    %1529 = vmatprep.subr.mxu0 0.0
    %1530 = vmatpush1.xpose.msra.mxu0 0.0
    %1531 = vmatprep.subr.mxu0 0.0
    %1532 = vmatpush1.xpose.msra.mxu0 0.0
    %1533 = vmatprep.subr.mxu0 0.0
    %1534 = vmatpush1.xpose.msra.mxu0 0.0
    %1535 = vmatprep.subr.mxu0 0.0
    %1536 = vmatpush1.xpose.msra.mxu0 0.0
    %1537 = vmatprep.subr.mxu0 0.0
    %1538 = vmatpush1.xpose.msra.mxu0 %v1505
    %1539 = vmatprep.subr.mxu0 0.0
    %1540 = vmatpush2.xpose.msra.mxu0 0.0
    %1541 = vmatprep.subr.mxu0 0.0
    %1542 = vmatpush2.xpose.msra.mxu0 0.0
    %1543 = vmatprep.subr.mxu0 0.0
    %1544 = vmatpush2.xpose.msra.mxu0 0.0
    %1545 = vmatprep.subr.mxu0 0.0
    %1546 = vmatpush2.xpose.msra.mxu0 0.0
    %1547 = vmatprep.subr.mxu0 0.0
    %1548 = vmatpush2.xpose.msra.mxu0 0.0
    %1549 = vmatprep.subr.mxu0 0.0
    %1550 = vmatpush2.xpose.msra.mxu0 0.0
    %1551 = vmatprep.subr.mxu0 0.0
    %1552 = vmatpush2.xpose.msra.mxu0 0.0
    %1553 = vmatprep.subr.mxu0 0.0
    %1554 = vmatpush2.xpose.msra.mxu0 0.0
    %1555 = vmatprep.subr.mxu0 0.0
    %1556 = vmatpush2.xpose.msra.mxu0 0.0
    %1557 = vmatprep.subr.mxu0 0.0
    %1558 = vmatpush2.xpose.msra.mxu0 0.0
    %1559 = vmatprep.subr.mxu0 0.0
    %1560 = vmatpush2.xpose.msra.mxu0 0.0
    %1561 = vmatprep.subr.mxu0 0.0
    %1562 = vmatpush2.xpose.msra.mxu0 0.0
    %1563 = vmatprep.subr.mxu0 0.0
    %1564 = vmatpush2.xpose.msra.mxu0 0.0
    %1565 = vmatprep.subr.mxu0 0.0
    %1566 = vmatpush2.xpose.msra.mxu0 0.0
    %1567 = vmatprep.subr.mxu0 0.0
    %1568 = vmatpush2.xpose.msra.mxu0 0.0
    %1569 = vmatprep.subr.mxu0 0.0
    %1570 = vmatpush2.xpose.msra.mxu0 0.0
    %1571 = vmatprep.mubr.f32.mxu0 0.0
    %1572 = vmatmul.mubr.f32.gmra.mxu0 %v1503
    %v1573 = vpop.f32.mrf.mxu0
    %v1574 = vadd.f32 0.0, %v1573
    %v1575 = vpop.f32.mrf.mxu0
    %1576 = vdwg.mxu0
    %v1577 = vmul.f32 %v1574, 0.25
    %v1578 = vadd.f32 %v1577, %v411
    %v1579 = vsel %vm413, %v1578, -inf
    %1580 = vmax.xlane.f32.xlu0 %v1579
    %v1581 = vpop.xlane.xlu0 %1580
    %v1582 = vsub.f32 %v1578, %v1581
    %v1583 = vmul.f32 %v1582, 1.442695
    %v1584 = vpow.pop %v1583
    %v1585 = vsel %vm413, %v1584, 0.0
    %1586 = vadd.xlane.f32.xlu0 %v1585
    %v1587 = vpop.xlane.xlu0 %1586
    %v1588 = vrcp.pop %v1587
    %v1589 = vmul.f32 %v1584, %v1588
    %1590 = vrot.lane.b32.xlu0 %v1492, 64
    %v1591 = vpop.permute.xlu0 %1590
    %v1594 = vsel %vm413, %v1589, 0
    %1596 = vmatprep.subr.mxu0 0.0
    %1597 = vmatpush1.msra.mxu0 0.0
    %1598 = vmatprep.subr.mxu0 0.0
    %1599 = vmatpush1.msra.mxu0 0.0
    %1600 = vmatprep.subr.mxu0 0.0
    %1601 = vmatpush1.msra.mxu0 0.0
    %1602 = vmatprep.subr.mxu0 0.0
    %1603 = vmatpush1.msra.mxu0 0.0
    %1604 = vmatprep.subr.mxu0 0.0
    %1605 = vmatpush1.msra.mxu0 0.0
    %1606 = vmatprep.subr.mxu0 0.0
    %1607 = vmatpush1.msra.mxu0 0.0
    %1608 = vmatprep.subr.mxu0 0.0
    %1609 = vmatpush1.msra.mxu0 0.0
    %1610 = vmatprep.subr.mxu0 0.0
    %1611 = vmatpush1.msra.mxu0 0.0
    %1612 = vmatprep.subr.mxu0 0.0
    %1613 = vmatpush1.msra.mxu0 0.0
    %1614 = vmatprep.subr.mxu0 0.0
    %1615 = vmatpush1.msra.mxu0 0.0
    %1616 = vmatprep.subr.mxu0 0.0
    %1617 = vmatpush1.msra.mxu0 0.0
    %1618 = vmatprep.subr.mxu0 0.0
    %1619 = vmatpush1.msra.mxu0 0.0
    %1620 = vmatprep.subr.mxu0 0.0
    %1621 = vmatpush1.msra.mxu0 0.0
    %1622 = vmatprep.subr.mxu0 0.0
    %1623 = vmatpush1.msra.mxu0 0.0
    %1624 = vmatprep.subr.mxu0 0.0
    %1625 = vmatpush1.msra.mxu0 0.0
    %1626 = vmatprep.subr.mxu0 0.0
    %1627 = vmatpush1.msra.mxu0 %v1591
    %1628 = vmatprep.subr.mxu0 0.0
    %1629 = vmatpush2.msra.mxu0 0.0
    %1630 = vmatprep.subr.mxu0 0.0
    %1631 = vmatpush2.msra.mxu0 0.0
    %1632 = vmatprep.subr.mxu0 0.0
    %1633 = vmatpush2.msra.mxu0 0.0
    %1634 = vmatprep.subr.mxu0 0.0
    %1635 = vmatpush2.msra.mxu0 0.0
    %1636 = vmatprep.subr.mxu0 0.0
    %1637 = vmatpush2.msra.mxu0 0.0
    %1638 = vmatprep.subr.mxu0 0.0
    %1639 = vmatpush2.msra.mxu0 0.0
    %1640 = vmatprep.subr.mxu0 0.0
    %1641 = vmatpush2.msra.mxu0 0.0
    %1642 = vmatprep.subr.mxu0 0.0
    %1643 = vmatpush2.msra.mxu0 0.0
    %1644 = vmatprep.subr.mxu0 0.0
    %1645 = vmatpush2.msra.mxu0 0.0
    %1646 = vmatprep.subr.mxu0 0.0
    %1647 = vmatpush2.msra.mxu0 0.0
    %1648 = vmatprep.subr.mxu0 0.0
    %1649 = vmatpush2.msra.mxu0 0.0
    %1650 = vmatprep.subr.mxu0 0.0
    %1651 = vmatpush2.msra.mxu0 0.0
    %1652 = vmatprep.subr.mxu0 0.0
    %1653 = vmatpush2.msra.mxu0 0.0
    %1654 = vmatprep.subr.mxu0 0.0
    %1655 = vmatpush2.msra.mxu0 0.0
    %1656 = vmatprep.subr.mxu0 0.0
    %1657 = vmatpush2.msra.mxu0 0.0
    %1658 = vmatprep.subr.mxu0 0.0
    %1659 = vmatpush2.msra.mxu0 0.0
    %1660 = vmatprep.mubr.f32.mxu0 0.0
    %1661 = vmatmul.mubr.f32.gmra.mxu0 %v1594
    %v1662 = vpop.f32.mrf.mxu0
    %v1663 = vadd.f32 0.0, %v1662
    %v1664 = vpop.f32.mrf.mxu0
    %1665 = vdwg.mxu0
    %1666 = vrot.lane.b32.xlu0 %v1492, 112
    %v1667 = vpop.permute.xlu0 %1666
    %1668 = vrot.lane.b32.xlu0 %v1492, 80
    %v1669 = vpop.permute.xlu0 %1668
    %v1670 = vsel %vm332, %v1667, 0
    %v1672 = vsel %vm332, %v1669, 0
    %1674 = vmatprep.subr.mxu0 0.0
    %1675 = vmatpush1.xpose.msra.mxu0 0.0
    %1676 = vmatprep.subr.mxu0 0.0
    %1677 = vmatpush1.xpose.msra.mxu0 0.0
    %1678 = vmatprep.subr.mxu0 0.0
    %1679 = vmatpush1.xpose.msra.mxu0 0.0
    %1680 = vmatprep.subr.mxu0 0.0
    %1681 = vmatpush1.xpose.msra.mxu0 0.0
    %1682 = vmatprep.subr.mxu0 0.0
    %1683 = vmatpush1.xpose.msra.mxu0 0.0
    %1684 = vmatprep.subr.mxu0 0.0
    %1685 = vmatpush1.xpose.msra.mxu0 0.0
    %1686 = vmatprep.subr.mxu0 0.0
    %1687 = vmatpush1.xpose.msra.mxu0 0.0
    %1688 = vmatprep.subr.mxu0 0.0
    %1689 = vmatpush1.xpose.msra.mxu0 0.0
    %1690 = vmatprep.subr.mxu0 0.0
    %1691 = vmatpush1.xpose.msra.mxu0 0.0
    %1692 = vmatprep.subr.mxu0 0.0
    %1693 = vmatpush1.xpose.msra.mxu0 0.0
    %1694 = vmatprep.subr.mxu0 0.0
    %1695 = vmatpush1.xpose.msra.mxu0 0.0
    %1696 = vmatprep.subr.mxu0 0.0
    %1697 = vmatpush1.xpose.msra.mxu0 0.0
    %1698 = vmatprep.subr.mxu0 0.0
    %1699 = vmatpush1.xpose.msra.mxu0 0.0
    %1700 = vmatprep.subr.mxu0 0.0
    %1701 = vmatpush1.xpose.msra.mxu0 0.0
    %1702 = vmatprep.subr.mxu0 0.0
    %1703 = vmatpush1.xpose.msra.mxu0 0.0
    %1704 = vmatprep.subr.mxu0 0.0
    %1705 = vmatpush1.xpose.msra.mxu0 %v1672
    %1706 = vmatprep.subr.mxu0 0.0
    %1707 = vmatpush2.xpose.msra.mxu0 0.0
    %1708 = vmatprep.subr.mxu0 0.0
    %1709 = vmatpush2.xpose.msra.mxu0 0.0
    %1710 = vmatprep.subr.mxu0 0.0
    %1711 = vmatpush2.xpose.msra.mxu0 0.0
    %1712 = vmatprep.subr.mxu0 0.0
    %1713 = vmatpush2.xpose.msra.mxu0 0.0
    %1714 = vmatprep.subr.mxu0 0.0
    %1715 = vmatpush2.xpose.msra.mxu0 0.0
    %1716 = vmatprep.subr.mxu0 0.0
    %1717 = vmatpush2.xpose.msra.mxu0 0.0
    %1718 = vmatprep.subr.mxu0 0.0
    %1719 = vmatpush2.xpose.msra.mxu0 0.0
    %1720 = vmatprep.subr.mxu0 0.0
    %1721 = vmatpush2.xpose.msra.mxu0 0.0
    %1722 = vmatprep.subr.mxu0 0.0
    %1723 = vmatpush2.xpose.msra.mxu0 0.0
    %1724 = vmatprep.subr.mxu0 0.0
    %1725 = vmatpush2.xpose.msra.mxu0 0.0
    %1726 = vmatprep.subr.mxu0 0.0
    %1727 = vmatpush2.xpose.msra.mxu0 0.0
    %1728 = vmatprep.subr.mxu0 0.0
    %1729 = vmatpush2.xpose.msra.mxu0 0.0
    %1730 = vmatprep.subr.mxu0 0.0
    %1731 = vmatpush2.xpose.msra.mxu0 0.0
    %1732 = vmatprep.subr.mxu0 0.0
    %1733 = vmatpush2.xpose.msra.mxu0 0.0
    %1734 = vmatprep.subr.mxu0 0.0
    %1735 = vmatpush2.xpose.msra.mxu0 0.0
    %1736 = vmatprep.subr.mxu0 0.0
    %1737 = vmatpush2.xpose.msra.mxu0 0.0
    %1738 = vmatprep.mubr.f32.mxu0 0.0
    %1739 = vmatmul.mubr.f32.gmra.mxu0 %v1670
    %v1740 = vpop.f32.mrf.mxu0
    %v1741 = vadd.f32 0.0, %v1740
    %v1742 = vpop.f32.mrf.mxu0
    %1743 = vdwg.mxu0
    %v1744 = vmul.f32 %v1741, 0.25
    %v1745 = vadd.f32 %v1744, %v411
    %v1746 = vsel %vm413, %v1745, -inf
    %1747 = vmax.xlane.f32.xlu0 %v1746
    %v1748 = vpop.xlane.xlu0 %1747
    %v1749 = vsub.f32 %v1745, %v1748
    %v1750 = vmul.f32 %v1749, 1.442695
    %v1751 = vpow.pop %v1750
    %v1752 = vsel %vm413, %v1751, 0.0
    %1753 = vadd.xlane.f32.xlu0 %v1752
    %v1754 = vpop.xlane.xlu0 %1753
    %v1755 = vrcp.pop %v1754
    %v1756 = vmul.f32 %v1751, %v1755
    %1757 = vrot.lane.b32.xlu0 %v1492, 48
    %v1758 = vpop.permute.xlu0 %1757
    %v1761 = vsel %vm413, %v1756, 0
    %1763 = vmatprep.subr.mxu0 0.0
    %1764 = vmatpush1.msra.mxu0 0.0
    %1765 = vmatprep.subr.mxu0 0.0
    %1766 = vmatpush1.msra.mxu0 0.0
    %1767 = vmatprep.subr.mxu0 0.0
    %1768 = vmatpush1.msra.mxu0 0.0
    %1769 = vmatprep.subr.mxu0 0.0
    %1770 = vmatpush1.msra.mxu0 0.0
    %1771 = vmatprep.subr.mxu0 0.0
    %1772 = vmatpush1.msra.mxu0 0.0
    %1773 = vmatprep.subr.mxu0 0.0
    %1774 = vmatpush1.msra.mxu0 0.0
    %1775 = vmatprep.subr.mxu0 0.0
    %1776 = vmatpush1.msra.mxu0 0.0
    %1777 = vmatprep.subr.mxu0 0.0
    %1778 = vmatpush1.msra.mxu0 0.0
    %1779 = vmatprep.subr.mxu0 0.0
    %1780 = vmatpush1.msra.mxu0 0.0
    %1781 = vmatprep.subr.mxu0 0.0
    %1782 = vmatpush1.msra.mxu0 0.0
    %1783 = vmatprep.subr.mxu0 0.0
    %1784 = vmatpush1.msra.mxu0 0.0
    %1785 = vmatprep.subr.mxu0 0.0
    %1786 = vmatpush1.msra.mxu0 0.0
    %1787 = vmatprep.subr.mxu0 0.0
    %1788 = vmatpush1.msra.mxu0 0.0
    %1789 = vmatprep.subr.mxu0 0.0
    %1790 = vmatpush1.msra.mxu0 0.0
    %1791 = vmatprep.subr.mxu0 0.0
    %1792 = vmatpush1.msra.mxu0 0.0
    %1793 = vmatprep.subr.mxu0 0.0
    %1794 = vmatpush1.msra.mxu0 %v1758
    %1795 = vmatprep.subr.mxu0 0.0
    %1796 = vmatpush2.msra.mxu0 0.0
    %1797 = vmatprep.subr.mxu0 0.0
    %1798 = vmatpush2.msra.mxu0 0.0
    %1799 = vmatprep.subr.mxu0 0.0
    %1800 = vmatpush2.msra.mxu0 0.0
    %1801 = vmatprep.subr.mxu0 0.0
    %1802 = vmatpush2.msra.mxu0 0.0
    %1803 = vmatprep.subr.mxu0 0.0
    %1804 = vmatpush2.msra.mxu0 0.0
    %1805 = vmatprep.subr.mxu0 0.0
    %1806 = vmatpush2.msra.mxu0 0.0
    %1807 = vmatprep.subr.mxu0 0.0
    %1808 = vmatpush2.msra.mxu0 0.0
    %1809 = vmatprep.subr.mxu0 0.0
    %1810 = vmatpush2.msra.mxu0 0.0
    %1811 = vmatprep.subr.mxu0 0.0
    %1812 = vmatpush2.msra.mxu0 0.0
    %1813 = vmatprep.subr.mxu0 0.0
    %1814 = vmatpush2.msra.mxu0 0.0
    %1815 = vmatprep.subr.mxu0 0.0
    %1816 = vmatpush2.msra.mxu0 0.0
    %1817 = vmatprep.subr.mxu0 0.0
    %1818 = vmatpush2.msra.mxu0 0.0
    %1819 = vmatprep.subr.mxu0 0.0
    %1820 = vmatpush2.msra.mxu0 0.0
    %1821 = vmatprep.subr.mxu0 0.0
    %1822 = vmatpush2.msra.mxu0 0.0
    %1823 = vmatprep.subr.mxu0 0.0
    %1824 = vmatpush2.msra.mxu0 0.0
    %1825 = vmatprep.subr.mxu0 0.0
    %1826 = vmatpush2.msra.mxu0 0.0
    %1827 = vmatprep.mubr.f32.mxu0 0.0
    %1828 = vmatmul.mubr.f32.gmra.mxu0 %v1761
    %v1829 = vpop.f32.mrf.mxu0
    %v1830 = vadd.f32 0.0, %v1829
    %v1831 = vpop.f32.mrf.mxu0
    %1832 = vdwg.mxu0
    %1834 = vrot.lane.b32.xlu0 %v1830, 16
    %v1835 = vpop.permute.xlu0 %1834
    %v1837 = vsel %vm332, %v1663, %v1835
    %1839 = vrot.lane.b32.xlu0 %v1497, 96
    %v1840 = vpop.permute.xlu0 %1839
    %v1841 = vsel %vm332, %v1497, 0
    %v1843 = vsel %vm332, %v1840, 0
    %1845 = vmatprep.subr.mxu0 0.0
    %1846 = vmatpush1.xpose.msra.mxu0 0.0
    %1847 = vmatprep.subr.mxu0 0.0
    %1848 = vmatpush1.xpose.msra.mxu0 0.0
    %1849 = vmatprep.subr.mxu0 0.0
    %1850 = vmatpush1.xpose.msra.mxu0 0.0
    %1851 = vmatprep.subr.mxu0 0.0
    %1852 = vmatpush1.xpose.msra.mxu0 0.0
    %1853 = vmatprep.subr.mxu0 0.0
    %1854 = vmatpush1.xpose.msra.mxu0 0.0
    %1855 = vmatprep.subr.mxu0 0.0
    %1856 = vmatpush1.xpose.msra.mxu0 0.0
    %1857 = vmatprep.subr.mxu0 0.0
    %1858 = vmatpush1.xpose.msra.mxu0 0.0
    %1859 = vmatprep.subr.mxu0 0.0
    %1860 = vmatpush1.xpose.msra.mxu0 0.0
    %1861 = vmatprep.subr.mxu0 0.0
    %1862 = vmatpush1.xpose.msra.mxu0 0.0
    %1863 = vmatprep.subr.mxu0 0.0
    %1864 = vmatpush1.xpose.msra.mxu0 0.0
    %1865 = vmatprep.subr.mxu0 0.0
    %1866 = vmatpush1.xpose.msra.mxu0 0.0
    %1867 = vmatprep.subr.mxu0 0.0
    %1868 = vmatpush1.xpose.msra.mxu0 0.0
    %1869 = vmatprep.subr.mxu0 0.0
    %1870 = vmatpush1.xpose.msra.mxu0 0.0
    %1871 = vmatprep.subr.mxu0 0.0
    %1872 = vmatpush1.xpose.msra.mxu0 0.0
    %1873 = vmatprep.subr.mxu0 0.0
    %1874 = vmatpush1.xpose.msra.mxu0 0.0
    %1875 = vmatprep.subr.mxu0 0.0
    %1876 = vmatpush1.xpose.msra.mxu0 %v1843
    %1877 = vmatprep.subr.mxu0 0.0
    %1878 = vmatpush2.xpose.msra.mxu0 0.0
    %1879 = vmatprep.subr.mxu0 0.0
    %1880 = vmatpush2.xpose.msra.mxu0 0.0
    %1881 = vmatprep.subr.mxu0 0.0
    %1882 = vmatpush2.xpose.msra.mxu0 0.0
    %1883 = vmatprep.subr.mxu0 0.0
    %1884 = vmatpush2.xpose.msra.mxu0 0.0
    %1885 = vmatprep.subr.mxu0 0.0
    %1886 = vmatpush2.xpose.msra.mxu0 0.0
    %1887 = vmatprep.subr.mxu0 0.0
    %1888 = vmatpush2.xpose.msra.mxu0 0.0
    %1889 = vmatprep.subr.mxu0 0.0
    %1890 = vmatpush2.xpose.msra.mxu0 0.0
    %1891 = vmatprep.subr.mxu0 0.0
    %1892 = vmatpush2.xpose.msra.mxu0 0.0
    %1893 = vmatprep.subr.mxu0 0.0
    %1894 = vmatpush2.xpose.msra.mxu0 0.0
    %1895 = vmatprep.subr.mxu0 0.0
    %1896 = vmatpush2.xpose.msra.mxu0 0.0
    %1897 = vmatprep.subr.mxu0 0.0
    %1898 = vmatpush2.xpose.msra.mxu0 0.0
    %1899 = vmatprep.subr.mxu0 0.0
    %1900 = vmatpush2.xpose.msra.mxu0 0.0
    %1901 = vmatprep.subr.mxu0 0.0
    %1902 = vmatpush2.xpose.msra.mxu0 0.0
    %1903 = vmatprep.subr.mxu0 0.0
    %1904 = vmatpush2.xpose.msra.mxu0 0.0
    %1905 = vmatprep.subr.mxu0 0.0
    %1906 = vmatpush2.xpose.msra.mxu0 0.0
    %1907 = vmatprep.subr.mxu0 0.0
    %1908 = vmatpush2.xpose.msra.mxu0 0.0
    %1909 = vmatprep.mubr.f32.mxu0 0.0
    %1910 = vmatmul.mubr.f32.gmra.mxu0 %v1841
    %v1911 = vpop.f32.mrf.mxu0
    %v1912 = vadd.f32 0.0, %v1911
    %v1913 = vpop.f32.mrf.mxu0
    %1914 = vdwg.mxu0
    %v1915 = vmul.f32 %v1912, 0.25
    %v1916 = vadd.f32 %v1915, %v754
    %v1917 = vsel %vm413, %v1916, -inf
    %1918 = vmax.xlane.f32.xlu0 %v1917
    %v1919 = vpop.xlane.xlu0 %1918
    %v1920 = vsub.f32 %v1916, %v1919
    %v1921 = vmul.f32 %v1920, 1.442695
    %v1922 = vpow.pop %v1921
    %v1923 = vsel %vm413, %v1922, 0.0
    %1924 = vadd.xlane.f32.xlu0 %v1923
    %v1925 = vpop.xlane.xlu0 %1924
    %v1926 = vrcp.pop %v1925
    %v1927 = vmul.f32 %v1922, %v1926
    %1928 = vrot.lane.b32.xlu0 %v1497, 64
    %v1929 = vpop.permute.xlu0 %1928
    %v1932 = vsel %vm413, %v1927, 0
    %1934 = vmatprep.subr.mxu0 0.0
    %1935 = vmatpush1.msra.mxu0 0.0
    %1936 = vmatprep.subr.mxu0 0.0
    %1937 = vmatpush1.msra.mxu0 0.0
    %1938 = vmatprep.subr.mxu0 0.0
    %1939 = vmatpush1.msra.mxu0 0.0
    %1940 = vmatprep.subr.mxu0 0.0
    %1941 = vmatpush1.msra.mxu0 0.0
    %1942 = vmatprep.subr.mxu0 0.0
    %1943 = vmatpush1.msra.mxu0 0.0
    %1944 = vmatprep.subr.mxu0 0.0
    %1945 = vmatpush1.msra.mxu0 0.0
    %1946 = vmatprep.subr.mxu0 0.0
    %1947 = vmatpush1.msra.mxu0 0.0
    %1948 = vmatprep.subr.mxu0 0.0
    %1949 = vmatpush1.msra.mxu0 0.0
    %1950 = vmatprep.subr.mxu0 0.0
    %1951 = vmatpush1.msra.mxu0 0.0
    %1952 = vmatprep.subr.mxu0 0.0
    %1953 = vmatpush1.msra.mxu0 0.0
    %1954 = vmatprep.subr.mxu0 0.0
    %1955 = vmatpush1.msra.mxu0 0.0
    %1956 = vmatprep.subr.mxu0 0.0
    %1957 = vmatpush1.msra.mxu0 0.0
    %1958 = vmatprep.subr.mxu0 0.0
    %1959 = vmatpush1.msra.mxu0 0.0
    %1960 = vmatprep.subr.mxu0 0.0
    %1961 = vmatpush1.msra.mxu0 0.0
    %1962 = vmatprep.subr.mxu0 0.0
    %1963 = vmatpush1.msra.mxu0 0.0
    %1964 = vmatprep.subr.mxu0 0.0
    %1965 = vmatpush1.msra.mxu0 %v1929
    %1966 = vmatprep.subr.mxu0 0.0
    %1967 = vmatpush2.msra.mxu0 0.0
    %1968 = vmatprep.subr.mxu0 0.0
    %1969 = vmatpush2.msra.mxu0 0.0
    %1970 = vmatprep.subr.mxu0 0.0
    %1971 = vmatpush2.msra.mxu0 0.0
    %1972 = vmatprep.subr.mxu0 0.0
    %1973 = vmatpush2.msra.mxu0 0.0
    %1974 = vmatprep.subr.mxu0 0.0
    %1975 = vmatpush2.msra.mxu0 0.0
    %1976 = vmatprep.subr.mxu0 0.0
    %1977 = vmatpush2.msra.mxu0 0.0
    %1978 = vmatprep.subr.mxu0 0.0
    %1979 = vmatpush2.msra.mxu0 0.0
    %1980 = vmatprep.subr.mxu0 0.0
    %1981 = vmatpush2.msra.mxu0 0.0
    %1982 = vmatprep.subr.mxu0 0.0
    %1983 = vmatpush2.msra.mxu0 0.0
    %1984 = vmatprep.subr.mxu0 0.0
    %1985 = vmatpush2.msra.mxu0 0.0
    %1986 = vmatprep.subr.mxu0 0.0
    %1987 = vmatpush2.msra.mxu0 0.0
    %1988 = vmatprep.subr.mxu0 0.0
    %1989 = vmatpush2.msra.mxu0 0.0
    %1990 = vmatprep.subr.mxu0 0.0
    %1991 = vmatpush2.msra.mxu0 0.0
    %1992 = vmatprep.subr.mxu0 0.0
    %1993 = vmatpush2.msra.mxu0 0.0
    %1994 = vmatprep.subr.mxu0 0.0
    %1995 = vmatpush2.msra.mxu0 0.0
    %1996 = vmatprep.subr.mxu0 0.0
    %1997 = vmatpush2.msra.mxu0 0.0
    %1998 = vmatprep.mubr.f32.mxu0 0.0
    %1999 = vmatmul.mubr.f32.gmra.mxu0 %v1932
    %v2000 = vpop.f32.mrf.mxu0
    %v2001 = vadd.f32 0.0, %v2000
    %v2002 = vpop.f32.mrf.mxu0
    %2003 = vdwg.mxu0
    %2004 = vrot.lane.b32.xlu0 %v1497, 112
    %v2005 = vpop.permute.xlu0 %2004
    %2006 = vrot.lane.b32.xlu0 %v1497, 80
    %v2007 = vpop.permute.xlu0 %2006
    %v2008 = vsel %vm332, %v2005, 0
    %v2010 = vsel %vm332, %v2007, 0
    %2012 = vmatprep.subr.mxu0 0.0
    %2013 = vmatpush1.xpose.msra.mxu0 0.0
    %2014 = vmatprep.subr.mxu0 0.0
    %2015 = vmatpush1.xpose.msra.mxu0 0.0
    %2016 = vmatprep.subr.mxu0 0.0
    %2017 = vmatpush1.xpose.msra.mxu0 0.0
    %2018 = vmatprep.subr.mxu0 0.0
    %2019 = vmatpush1.xpose.msra.mxu0 0.0
    %2020 = vmatprep.subr.mxu0 0.0
    %2021 = vmatpush1.xpose.msra.mxu0 0.0
    %2022 = vmatprep.subr.mxu0 0.0
    %2023 = vmatpush1.xpose.msra.mxu0 0.0
    %2024 = vmatprep.subr.mxu0 0.0
    %2025 = vmatpush1.xpose.msra.mxu0 0.0
    %2026 = vmatprep.subr.mxu0 0.0
    %2027 = vmatpush1.xpose.msra.mxu0 0.0
    %2028 = vmatprep.subr.mxu0 0.0
    %2029 = vmatpush1.xpose.msra.mxu0 0.0
    %2030 = vmatprep.subr.mxu0 0.0
    %2031 = vmatpush1.xpose.msra.mxu0 0.0
    %2032 = vmatprep.subr.mxu0 0.0
    %2033 = vmatpush1.xpose.msra.mxu0 0.0
    %2034 = vmatprep.subr.mxu0 0.0
    %2035 = vmatpush1.xpose.msra.mxu0 0.0
    %2036 = vmatprep.subr.mxu0 0.0
    %2037 = vmatpush1.xpose.msra.mxu0 0.0
    %2038 = vmatprep.subr.mxu0 0.0
    %2039 = vmatpush1.xpose.msra.mxu0 0.0
    %2040 = vmatprep.subr.mxu0 0.0
    %2041 = vmatpush1.xpose.msra.mxu0 0.0
    %2042 = vmatprep.subr.mxu0 0.0
    %2043 = vmatpush1.xpose.msra.mxu0 %v2010
    %2044 = vmatprep.subr.mxu0 0.0
    %2045 = vmatpush2.xpose.msra.mxu0 0.0
    %2046 = vmatprep.subr.mxu0 0.0
    %2047 = vmatpush2.xpose.msra.mxu0 0.0
    %2048 = vmatprep.subr.mxu0 0.0
    %2049 = vmatpush2.xpose.msra.mxu0 0.0
    %2050 = vmatprep.subr.mxu0 0.0
    %2051 = vmatpush2.xpose.msra.mxu0 0.0
    %2052 = vmatprep.subr.mxu0 0.0
    %2053 = vmatpush2.xpose.msra.mxu0 0.0
    %2054 = vmatprep.subr.mxu0 0.0
    %2055 = vmatpush2.xpose.msra.mxu0 0.0
    %2056 = vmatprep.subr.mxu0 0.0
    %2057 = vmatpush2.xpose.msra.mxu0 0.0
    %2058 = vmatprep.subr.mxu0 0.0
    %2059 = vmatpush2.xpose.msra.mxu0 0.0
    %2060 = vmatprep.subr.mxu0 0.0
    %2061 = vmatpush2.xpose.msra.mxu0 0.0
    %2062 = vmatprep.subr.mxu0 0.0
    %2063 = vmatpush2.xpose.msra.mxu0 0.0
    %2064 = vmatprep.subr.mxu0 0.0
    %2065 = vmatpush2.xpose.msra.mxu0 0.0
    %2066 = vmatprep.subr.mxu0 0.0
    %2067 = vmatpush2.xpose.msra.mxu0 0.0
    %2068 = vmatprep.subr.mxu0 0.0
    %2069 = vmatpush2.xpose.msra.mxu0 0.0
    %2070 = vmatprep.subr.mxu0 0.0
    %2071 = vmatpush2.xpose.msra.mxu0 0.0
    %2072 = vmatprep.subr.mxu0 0.0
    %2073 = vmatpush2.xpose.msra.mxu0 0.0
    %2074 = vmatprep.subr.mxu0 0.0
    %2075 = vmatpush2.xpose.msra.mxu0 0.0
    %2076 = vmatprep.mubr.f32.mxu0 0.0
    %2077 = vmatmul.mubr.f32.gmra.mxu0 %v2008
    %v2078 = vpop.f32.mrf.mxu0
    %v2079 = vadd.f32 0.0, %v2078
    %v2080 = vpop.f32.mrf.mxu0
    %2081 = vdwg.mxu0
    %v2082 = vmul.f32 %v2079, 0.25
    %v2083 = vadd.f32 %v2082, %v754
    %v2084 = vsel %vm413, %v2083, -inf
    %2085 = vmax.xlane.f32.xlu0 %v2084
    %v2086 = vpop.xlane.xlu0 %2085
    %v2087 = vsub.f32 %v2083, %v2086
    %v2088 = vmul.f32 %v2087, 1.442695
    %v2089 = vpow.pop %v2088
    %v2090 = vsel %vm413, %v2089, 0.0
    %2091 = vadd.xlane.f32.xlu0 %v2090
    %v2092 = vpop.xlane.xlu0 %2091
    %v2093 = vrcp.pop %v2092
    %v2094 = vmul.f32 %v2089, %v2093
    %2095 = vrot.lane.b32.xlu0 %v1497, 48
    %v2096 = vpop.permute.xlu0 %2095
    %v2099 = vsel %vm413, %v2094, 0
    %2101 = vmatprep.subr.mxu0 0.0
    %2102 = vmatpush1.msra.mxu0 0.0
    %2103 = vmatprep.subr.mxu0 0.0
    %2104 = vmatpush1.msra.mxu0 0.0
    %2105 = vmatprep.subr.mxu0 0.0
    %2106 = vmatpush1.msra.mxu0 0.0
    %2107 = vmatprep.subr.mxu0 0.0
    %2108 = vmatpush1.msra.mxu0 0.0
    %2109 = vmatprep.subr.mxu0 0.0
    %2110 = vmatpush1.msra.mxu0 0.0
    %2111 = vmatprep.subr.mxu0 0.0
    %2112 = vmatpush1.msra.mxu0 0.0
    %2113 = vmatprep.subr.mxu0 0.0
    %2114 = vmatpush1.msra.mxu0 0.0
    %2115 = vmatprep.subr.mxu0 0.0
    %2116 = vmatpush1.msra.mxu0 0.0
    %2117 = vmatprep.subr.mxu0 0.0
    %2118 = vmatpush1.msra.mxu0 0.0
    %2119 = vmatprep.subr.mxu0 0.0
    %2120 = vmatpush1.msra.mxu0 0.0
    %2121 = vmatprep.subr.mxu0 0.0
    %2122 = vmatpush1.msra.mxu0 0.0
    %2123 = vmatprep.subr.mxu0 0.0
    %2124 = vmatpush1.msra.mxu0 0.0
    %2125 = vmatprep.subr.mxu0 0.0
    %2126 = vmatpush1.msra.mxu0 0.0
    %2127 = vmatprep.subr.mxu0 0.0
    %2128 = vmatpush1.msra.mxu0 0.0
    %2129 = vmatprep.subr.mxu0 0.0
    %2130 = vmatpush1.msra.mxu0 0.0
    %2131 = vmatprep.subr.mxu0 0.0
    %2132 = vmatpush1.msra.mxu0 %v2096
    %2133 = vmatprep.subr.mxu0 0.0
    %2134 = vmatpush2.msra.mxu0 0.0
    %2135 = vmatprep.subr.mxu0 0.0
    %2136 = vmatpush2.msra.mxu0 0.0
    %2137 = vmatprep.subr.mxu0 0.0
    %2138 = vmatpush2.msra.mxu0 0.0
    %2139 = vmatprep.subr.mxu0 0.0
    %2140 = vmatpush2.msra.mxu0 0.0
    %2141 = vmatprep.subr.mxu0 0.0
    %2142 = vmatpush2.msra.mxu0 0.0
    %2143 = vmatprep.subr.mxu0 0.0
    %2144 = vmatpush2.msra.mxu0 0.0
    %2145 = vmatprep.subr.mxu0 0.0
    %2146 = vmatpush2.msra.mxu0 0.0
    %2147 = vmatprep.subr.mxu0 0.0
    %2148 = vmatpush2.msra.mxu0 0.0
    %2149 = vmatprep.subr.mxu0 0.0
    %2150 = vmatpush2.msra.mxu0 0.0
    %2151 = vmatprep.subr.mxu0 0.0
    %2152 = vmatpush2.msra.mxu0 0.0
    %2153 = vmatprep.subr.mxu0 0.0
    %2154 = vmatpush2.msra.mxu0 0.0
    %2155 = vmatprep.subr.mxu0 0.0
    %2156 = vmatpush2.msra.mxu0 0.0
    %2157 = vmatprep.subr.mxu0 0.0
    %2158 = vmatpush2.msra.mxu0 0.0
    %2159 = vmatprep.subr.mxu0 0.0
    %2160 = vmatpush2.msra.mxu0 0.0
    %2161 = vmatprep.subr.mxu0 0.0
    %2162 = vmatpush2.msra.mxu0 0.0
    %2163 = vmatprep.subr.mxu0 0.0
    %2164 = vmatpush2.msra.mxu0 0.0
    %2165 = vmatprep.mubr.f32.mxu0 0.0
    %2166 = vmatmul.mubr.f32.gmra.mxu0 %v2099
    %v2167 = vpop.f32.mrf.mxu0
    %v2168 = vadd.f32 0.0, %v2167
    %v2169 = vpop.f32.mrf.mxu0
    %2170 = vdwg.mxu0
    %2172 = vrot.lane.b32.xlu0 %v2168, 16
    %v2173 = vpop.permute.xlu0 %2172
    %v2175 = vsel %vm332, %v2001, %v2173
    %s2176 = scalar_lea.vmem %s8, 32
    %v2177 = vld [vmem:[%s2176] sm:$0xff]
    %v2178 = vld [vmem:[%s2176 + $0x8] sm:$0xff]
    %v2179 = vld [vmem:[%s2176 + $0x10] sm:$0xff]
    %v2180 = vld [vmem:[%s2176 + $0x18] sm:$0xff]
    %s2181 = scalar_lea.vmem %s9, 1
    %v2182 = vld [vmem:[%s2181] sm:$0x1]
    %v2184 = vlaneseq
    %v2185 = vshrl.u32 %v2184, 7
    %v2186 = vsub.s32 0, %v2185
    %v2187 = vrot.slane %v2182, %v2186
    %v2190 = vsel %vm190, %v1837, 0
    %v2193 = vsel %vm190, %v2175, 0
    %2195 = vmatprep.subr.mxu0 0.0
    %2196 = vmatpush1.msra.mxu0 0.0
    %2197 = vmatprep.subr.mxu0 0.0
    %2198 = vmatpush1.msra.mxu0 0.0
    %2199 = vmatprep.subr.mxu0 0.0
    %2200 = vmatpush1.msra.mxu0 0.0
    %2201 = vmatprep.subr.mxu0 0.0
    %2202 = vmatpush1.msra.mxu0 0.0
    %2203 = vmatprep.subr.mxu0 0.0
    %2204 = vmatpush1.msra.mxu0 0.0
    %2205 = vmatprep.subr.mxu0 0.0
    %2206 = vmatpush1.msra.mxu0 0.0
    %2207 = vmatprep.subr.mxu0 0.0
    %2208 = vmatpush1.msra.mxu0 0.0
    %2209 = vmatprep.subr.mxu0 0.0
    %2210 = vmatpush1.msra.mxu0 0.0
    %2211 = vmatprep.subr.mxu0 0.0
    %2212 = vmatpush1.msra.mxu0 0.0
    %2213 = vmatprep.subr.mxu0 0.0
    %2214 = vmatpush1.msra.mxu0 0.0
    %2215 = vmatprep.subr.mxu0 0.0
    %2216 = vmatpush1.msra.mxu0 0.0
    %2217 = vmatprep.subr.mxu0 0.0
    %2218 = vmatpush1.msra.mxu0 0.0
    %2219 = vmatprep.subr.mxu0 0.0
    %2220 = vmatpush1.msra.mxu0 %v2180
    %2221 = vmatprep.subr.mxu0 0.0
    %2222 = vmatpush1.msra.mxu0 %v2179
    %2223 = vmatprep.subr.mxu0 0.0
    %2224 = vmatpush1.msra.mxu0 %v2178
    %2225 = vmatprep.subr.mxu0 0.0
    %2226 = vmatpush1.msra.mxu0 %v2177
    %2227 = vmatprep.subr.mxu0 0.0
    %2228 = vmatpush2.msra.mxu0 0.0
    %2229 = vmatprep.subr.mxu0 0.0
    %2230 = vmatpush2.msra.mxu0 0.0
    %2231 = vmatprep.subr.mxu0 0.0
    %2232 = vmatpush2.msra.mxu0 0.0
    %2233 = vmatprep.subr.mxu0 0.0
    %2234 = vmatpush2.msra.mxu0 0.0
    %2235 = vmatprep.subr.mxu0 0.0
    %2236 = vmatpush2.msra.mxu0 0.0
    %2237 = vmatprep.subr.mxu0 0.0
    %2238 = vmatpush2.msra.mxu0 0.0
    %2239 = vmatprep.subr.mxu0 0.0
    %2240 = vmatpush2.msra.mxu0 0.0
    %2241 = vmatprep.subr.mxu0 0.0
    %2242 = vmatpush2.msra.mxu0 0.0
    %2243 = vmatprep.subr.mxu0 0.0
    %2244 = vmatpush2.msra.mxu0 0.0
    %2245 = vmatprep.subr.mxu0 0.0
    %2246 = vmatpush2.msra.mxu0 0.0
    %2247 = vmatprep.subr.mxu0 0.0
    %2248 = vmatpush2.msra.mxu0 0.0
    %2249 = vmatprep.subr.mxu0 0.0
    %2250 = vmatpush2.msra.mxu0 0.0
    %2251 = vmatprep.subr.mxu0 0.0
    %2252 = vmatpush2.msra.mxu0 0.0
    %2253 = vmatprep.subr.mxu0 0.0
    %2254 = vmatpush2.msra.mxu0 0.0
    %2255 = vmatprep.subr.mxu0 0.0
    %2256 = vmatpush2.msra.mxu0 0.0
    %2257 = vmatprep.subr.mxu0 0.0
    %2258 = vmatpush2.msra.mxu0 0.0
    %2259 = vmatprep.mubr.f32.mxu0 0.0
    %2260 = vmatmul.mubr.f32.gmra.mxu0 %v2190
    %v2261 = vpop.f32.mrf.mxu0
    %v2262 = vadd.f32 %v2187, %v2261
    %v2263 = vpop.f32.mrf.mxu0
    %2264 = vmatprep.mubr.f32.mxu0 0.0
    %2265 = vmatmul.mubr.f32.gmra.mxu0 %v2193
    %v2266 = vpop.f32.mrf.mxu0
    %v2267 = vadd.f32 %v2187, %v2266
    %v2268 = vpop.f32.mrf.mxu0
    %2269 = vdwg.mxu0
    %v2270 = vadd.f32 %v1404, %v2262
    %v2271 = vadd.f32 %v1405, %v2267
    %s2272 = scalar_lea.vmem %s10, 1
    %v2273 = vld [vmem:[%s2272] sm:$0x1]
    %s2274 = scalar_lea.vmem %s11, 1
    %v2275 = vld [vmem:[%s2274] sm:$0x1]
    %v2276 = vsel %vm190, %v2270, 0.0
    %2277 = vadd.xlane.f32.xlu0 %v2276
    %v2278 = vpop.xlane.xlu0 %2277
    %v2279 = vsel %vm190, %v2271, 0.0
    %2280 = vadd.xlane.f32.xlu0 %v2279
    %v2281 = vpop.xlane.xlu0 %2280
    %v2282 = vmul.f32 %v2278, %v197
    %v2283 = vmul.f32 %v2281, %v197
    %v2284 = vsub.f32 %v2270, %v2282
    %v2285 = vsub.f32 %v2271, %v2283
    %v2286 = vmul.f32 %v2284, %v2284
    %v2287 = vmul.f32 %v2285, %v2285
    %v2288 = vsel %vm190, %v2286, 0.0
    %2289 = vadd.xlane.f32.xlu0 %v2288
    %v2290 = vpop.xlane.xlu0 %2289
    %v2291 = vsel %vm190, %v2287, 0.0
    %2292 = vadd.xlane.f32.xlu0 %v2291
    %v2293 = vpop.xlane.xlu0 %2292
    %v2294 = vmul.f32 %v2290, %v197
    %v2295 = vmul.f32 %v2293, %v197
    %v2296 = vadd.f32 %v2294, 1e-12
    %v2297 = vadd.f32 %v2295, 1e-12
    %v2298 = vrsqrt.pop %v2296
    %v2299 = vrsqrt.pop %v2297
    %v2300 = vmul.f32 %v2284, %v2298
    %v2301 = vmul.f32 %v2285, %v2299
    %v2303 = vlaneseq
    %v2304 = vshrl.u32 %v2303, 7
    %v2305 = vsub.s32 0, %v2304
    %v2306 = vrot.slane %v2273, %v2305
    %v2308 = vmul.f32 %v2300, %v2306
    %v2309 = vmul.f32 %v2301, %v2306
    %v2311 = vlaneseq
    %v2312 = vshrl.u32 %v2311, 7
    %v2313 = vsub.s32 0, %v2312
    %v2314 = vrot.slane %v2275, %v2313
    %v2316 = vadd.f32 %v2308, %v2314
    %v2317 = vadd.f32 %v2309, %v2314
    %s2318 = scalar_lea.vmem %s12, 32
    %v2319 = vld [vmem:[%s2318] sm:$0xff]
    %v2320 = vld [vmem:[%s2318 + $0x8] sm:$0xff]
    %v2321 = vld [vmem:[%s2318 + $0x10] sm:$0xff]
    %v2322 = vld [vmem:[%s2318 + $0x18] sm:$0xff]
    %s2323 = scalar_lea.vmem %s13, 1
    %v2324 = vld [vmem:[%s2323] sm:$0x1]
    %v2326 = vlaneseq
    %v2327 = vshrl.u32 %v2326, 7
    %v2328 = vsub.s32 0, %v2327
    %v2329 = vrot.slane %v2324, %v2328
    %v2332 = vsel %vm190, %v2316, 0
    %v2335 = vsel %vm190, %v2317, 0
    %2337 = vmatprep.subr.mxu0 0.0
    %2338 = vmatpush1.msra.mxu0 0.0
    %2339 = vmatprep.subr.mxu0 0.0
    %2340 = vmatpush1.msra.mxu0 0.0
    %2341 = vmatprep.subr.mxu0 0.0
    %2342 = vmatpush1.msra.mxu0 0.0
    %2343 = vmatprep.subr.mxu0 0.0
    %2344 = vmatpush1.msra.mxu0 0.0
    %2345 = vmatprep.subr.mxu0 0.0
    %2346 = vmatpush1.msra.mxu0 0.0
    %2347 = vmatprep.subr.mxu0 0.0
    %2348 = vmatpush1.msra.mxu0 0.0
    %2349 = vmatprep.subr.mxu0 0.0
    %2350 = vmatpush1.msra.mxu0 0.0
    %2351 = vmatprep.subr.mxu0 0.0
    %2352 = vmatpush1.msra.mxu0 0.0
    %2353 = vmatprep.subr.mxu0 0.0
    %2354 = vmatpush1.msra.mxu0 0.0
    %2355 = vmatprep.subr.mxu0 0.0
    %2356 = vmatpush1.msra.mxu0 0.0
    %2357 = vmatprep.subr.mxu0 0.0
    %2358 = vmatpush1.msra.mxu0 0.0
    %2359 = vmatprep.subr.mxu0 0.0
    %2360 = vmatpush1.msra.mxu0 0.0
    %2361 = vmatprep.subr.mxu0 0.0
    %2362 = vmatpush1.msra.mxu0 %v2322
    %2363 = vmatprep.subr.mxu0 0.0
    %2364 = vmatpush1.msra.mxu0 %v2321
    %2365 = vmatprep.subr.mxu0 0.0
    %2366 = vmatpush1.msra.mxu0 %v2320
    %2367 = vmatprep.subr.mxu0 0.0
    %2368 = vmatpush1.msra.mxu0 %v2319
    %2369 = vmatprep.subr.mxu0 0.0
    %2370 = vmatpush2.msra.mxu0 0.0
    %2371 = vmatprep.subr.mxu0 0.0
    %2372 = vmatpush2.msra.mxu0 0.0
    %2373 = vmatprep.subr.mxu0 0.0
    %2374 = vmatpush2.msra.mxu0 0.0
    %2375 = vmatprep.subr.mxu0 0.0
    %2376 = vmatpush2.msra.mxu0 0.0
    %2377 = vmatprep.subr.mxu0 0.0
    %2378 = vmatpush2.msra.mxu0 0.0
    %2379 = vmatprep.subr.mxu0 0.0
    %2380 = vmatpush2.msra.mxu0 0.0
    %2381 = vmatprep.subr.mxu0 0.0
    %2382 = vmatpush2.msra.mxu0 0.0
    %2383 = vmatprep.subr.mxu0 0.0
    %2384 = vmatpush2.msra.mxu0 0.0
    %2385 = vmatprep.subr.mxu0 0.0
    %2386 = vmatpush2.msra.mxu0 0.0
    %2387 = vmatprep.subr.mxu0 0.0
    %2388 = vmatpush2.msra.mxu0 0.0
    %2389 = vmatprep.subr.mxu0 0.0
    %2390 = vmatpush2.msra.mxu0 0.0
    %2391 = vmatprep.subr.mxu0 0.0
    %2392 = vmatpush2.msra.mxu0 0.0
    %2393 = vmatprep.subr.mxu0 0.0
    %2394 = vmatpush2.msra.mxu0 0.0
    %2395 = vmatprep.subr.mxu0 0.0
    %2396 = vmatpush2.msra.mxu0 0.0
    %2397 = vmatprep.subr.mxu0 0.0
    %2398 = vmatpush2.msra.mxu0 0.0
    %2399 = vmatprep.subr.mxu0 0.0
    %2400 = vmatpush2.msra.mxu0 0.0
    %2401 = vmatprep.mubr.f32.mxu0 0.0
    %2402 = vmatmul.mubr.f32.gmra.mxu0 %v2332
    %v2403 = vpop.f32.mrf.mxu0
    %v2404 = vadd.f32 %v2329, %v2403
    %v2405 = vpop.f32.mrf.mxu0
    %2406 = vmatprep.mubr.f32.mxu0 0.0
    %2407 = vmatmul.mubr.f32.gmra.mxu0 %v2335
    %v2408 = vpop.f32.mrf.mxu0
    %v2409 = vadd.f32 %v2329, %v2408
    %v2410 = vpop.f32.mrf.mxu0
    %2411 = vdwg.mxu0
    %v2412 = vmul.f32 %v2404, 0.5
    %v2413 = vmul.f32 %v2409, 0.5
    %v2414 = vmul.f32 %v2404, 0.044715
    %v2415 = vmul.f32 %v2409, 0.044715
    %v2416 = vmul.f32 %v2414, %v2404
    %v2417 = vmul.f32 %v2415, %v2409
    %v2418 = vmul.f32 %v2416, %v2404
    %v2419 = vmul.f32 %v2417, %v2409
    %v2420 = vadd.f32 %v2404, %v2418
    %v2421 = vadd.f32 %v2409, %v2419
    %v2422 = vmul.f32 %v2420, 0.7978846
    %v2423 = vmul.f32 %v2421, 0.7978846
    %v2424 = vtanh.pop %v2422
    %v2425 = vtanh.pop %v2423
    %v2426 = vadd.f32 %v2424, 1.0
    %v2427 = vadd.f32 %v2425, 1.0
    %v2428 = vmul.f32 %v2412, %v2426
    %v2429 = vmul.f32 %v2413, %v2427
    %s2430 = scalar_lea.vmem %s14, 64
    %v2431 = vld [vmem:[%s2430] sm:$0xff]
    %v2432 = vld [vmem:[%s2430 + $0x8] sm:$0xff]
    %v2433 = vld [vmem:[%s2430 + $0x10] sm:$0xff]
    %v2434 = vld [vmem:[%s2430 + $0x18] sm:$0xff]
    %v2435 = vld [vmem:[%s2430 + $0x20] sm:$0xff]
    %v2436 = vld [vmem:[%s2430 + $0x28] sm:$0xff]
    %v2437 = vld [vmem:[%s2430 + $0x30] sm:$0xff]
    %v2438 = vld [vmem:[%s2430 + $0x38] sm:$0xff]
    %s2439 = scalar_lea.vmem %s15, 1
    %v2440 = vld [vmem:[%s2439] sm:$0x1]
    %v2442 = vlaneseq
    %v2443 = vshrl.u32 %v2442, 7
    %v2444 = vsub.s32 0, %v2443
    %v2445 = vrot.slane %v2440, %v2444
    %v2448 = vsel %vm1278, %v2428, 0
    %v2451 = vsel %vm1278, %v2429, 0
    %2453 = vmatprep.subr.mxu0 0.0
    %2454 = vmatpush1.msra.mxu0 0.0
    %2455 = vmatprep.subr.mxu0 0.0
    %2456 = vmatpush1.msra.mxu0 0.0
    %2457 = vmatprep.subr.mxu0 0.0
    %2458 = vmatpush1.msra.mxu0 0.0
    %2459 = vmatprep.subr.mxu0 0.0
    %2460 = vmatpush1.msra.mxu0 0.0
    %2461 = vmatprep.subr.mxu0 0.0
    %2462 = vmatpush1.msra.mxu0 0.0
    %2463 = vmatprep.subr.mxu0 0.0
    %2464 = vmatpush1.msra.mxu0 0.0
    %2465 = vmatprep.subr.mxu0 0.0
    %2466 = vmatpush1.msra.mxu0 0.0
    %2467 = vmatprep.subr.mxu0 0.0
    %2468 = vmatpush1.msra.mxu0 0.0
    %2469 = vmatprep.subr.mxu0 0.0
    %2470 = vmatpush1.msra.mxu0 %v2438
    %2471 = vmatprep.subr.mxu0 0.0
    %2472 = vmatpush1.msra.mxu0 %v2437
    %2473 = vmatprep.subr.mxu0 0.0
    %2474 = vmatpush1.msra.mxu0 %v2436
    %2475 = vmatprep.subr.mxu0 0.0
    %2476 = vmatpush1.msra.mxu0 %v2435
    %2477 = vmatprep.subr.mxu0 0.0
    %2478 = vmatpush1.msra.mxu0 %v2434
    %2479 = vmatprep.subr.mxu0 0.0
    %2480 = vmatpush1.msra.mxu0 %v2433
    %2481 = vmatprep.subr.mxu0 0.0
    %2482 = vmatpush1.msra.mxu0 %v2432
    %2483 = vmatprep.subr.mxu0 0.0
    %2484 = vmatpush1.msra.mxu0 %v2431
    %2485 = vmatprep.subr.mxu0 0.0
    %2486 = vmatpush2.msra.mxu0 0.0
    %2487 = vmatprep.subr.mxu0 0.0
    %2488 = vmatpush2.msra.mxu0 0.0
    %2489 = vmatprep.subr.mxu0 0.0
    %2490 = vmatpush2.msra.mxu0 0.0
    %2491 = vmatprep.subr.mxu0 0.0
    %2492 = vmatpush2.msra.mxu0 0.0
    %2493 = vmatprep.subr.mxu0 0.0
    %2494 = vmatpush2.msra.mxu0 0.0
    %2495 = vmatprep.subr.mxu0 0.0
    %2496 = vmatpush2.msra.mxu0 0.0
    %2497 = vmatprep.subr.mxu0 0.0
    %2498 = vmatpush2.msra.mxu0 0.0
    %2499 = vmatprep.subr.mxu0 0.0
    %2500 = vmatpush2.msra.mxu0 0.0
    %2501 = vmatprep.subr.mxu0 0.0
    %2502 = vmatpush2.msra.mxu0 0.0
    %2503 = vmatprep.subr.mxu0 0.0
    %2504 = vmatpush2.msra.mxu0 0.0
    %2505 = vmatprep.subr.mxu0 0.0
    %2506 = vmatpush2.msra.mxu0 0.0
    %2507 = vmatprep.subr.mxu0 0.0
    %2508 = vmatpush2.msra.mxu0 0.0
    %2509 = vmatprep.subr.mxu0 0.0
    %2510 = vmatpush2.msra.mxu0 0.0
    %2511 = vmatprep.subr.mxu0 0.0
    %2512 = vmatpush2.msra.mxu0 0.0
    %2513 = vmatprep.subr.mxu0 0.0
    %2514 = vmatpush2.msra.mxu0 0.0
    %2515 = vmatprep.subr.mxu0 0.0
    %2516 = vmatpush2.msra.mxu0 0.0
    %2517 = vmatprep.mubr.f32.mxu0 0.0
    %2518 = vmatmul.mubr.f32.gmra.mxu0 %v2448
    %v2519 = vpop.f32.mrf.mxu0
    %v2520 = vadd.f32 %v2445, %v2519
    %v2521 = vpop.f32.mrf.mxu0
    %2522 = vmatprep.mubr.f32.mxu0 0.0
    %2523 = vmatmul.mubr.f32.gmra.mxu0 %v2451
    %v2524 = vpop.f32.mrf.mxu0
    %v2525 = vadd.f32 %v2445, %v2524
    %v2526 = vpop.f32.mrf.mxu0
    %2527 = vdwg.mxu0
    %v2528 = vadd.f32 %v2316, %v2520
    %v2529 = vadd.f32 %v2317, %v2525
    %s2530 = scalar_lea.vmem %s16, 1
    %v2531 = vld [vmem:[%s2530] sm:$0x1]
    %s2532 = scalar_lea.vmem %s17, 1
    %v2533 = vld [vmem:[%s2532] sm:$0x1]
    %v2534 = vsel %vm190, %v2528, 0.0
    %2535 = vadd.xlane.f32.xlu0 %v2534
    %v2536 = vpop.xlane.xlu0 %2535
    %v2537 = vsel %vm190, %v2529, 0.0
    %2538 = vadd.xlane.f32.xlu0 %v2537
    %v2539 = vpop.xlane.xlu0 %2538
    %v2540 = vmul.f32 %v2536, %v197
    %v2541 = vmul.f32 %v2539, %v197
    %v2542 = vsub.f32 %v2528, %v2540
    %v2543 = vsub.f32 %v2529, %v2541
    %v2544 = vmul.f32 %v2542, %v2542
    %v2545 = vmul.f32 %v2543, %v2543
    %v2546 = vsel %vm190, %v2544, 0.0
    %2547 = vadd.xlane.f32.xlu0 %v2546
    %v2548 = vpop.xlane.xlu0 %2547
    %v2549 = vsel %vm190, %v2545, 0.0
    %2550 = vadd.xlane.f32.xlu0 %v2549
    %v2551 = vpop.xlane.xlu0 %2550
    %v2552 = vmul.f32 %v2548, %v197
    %v2553 = vmul.f32 %v2551, %v197
    %v2554 = vadd.f32 %v2552, 1e-12
    %v2555 = vadd.f32 %v2553, 1e-12
    %v2556 = vrsqrt.pop %v2554
    %v2557 = vrsqrt.pop %v2555
    %v2558 = vmul.f32 %v2542, %v2556
    %v2559 = vmul.f32 %v2543, %v2557
    %v2561 = vlaneseq
    %v2562 = vshrl.u32 %v2561, 7
    %v2563 = vsub.s32 0, %v2562
    %v2564 = vrot.slane %v2531, %v2563
    %v2566 = vmul.f32 %v2558, %v2564
    %v2567 = vmul.f32 %v2559, %v2564
    %v2569 = vlaneseq
    %v2570 = vshrl.u32 %v2569, 7
    %v2571 = vsub.s32 0, %v2570
    %v2572 = vrot.slane %v2533, %v2571
    %v2574 = vadd.f32 %v2566, %v2572
    %v2575 = vadd.f32 %v2567, %v2572
    %v2577 = vrot.slane %v2575, 7
    %vm2579 = vcmask 1040384
    %v2580 = vsel %vm2579, %v2574, %v2577
    %v2581 = vld [vmem:[%s18] sm:$0xff]
    %v2582 = vld [vmem:[%s18 + $0x8] sm:$0xff]
    %v2583 = vld [vmem:[%s18 + $0x10] sm:$0xff]
    %v2584 = vld [vmem:[%s18 + $0x18] sm:$0xff]
    %v2585 = vld [vmem:[%s19] sm:$0x1]
    %v2587 = vlaneseq
    %v2588 = vshrl.u32 %v2587, 7
    %v2589 = vsub.s32 0, %v2588
    %v2590 = vrot.slane %v2585, %v2589
    %v2593 = vsel %vm190, %v2580, 0
    %2595 = vmatprep.subr.mxu0 0.0
    %2596 = vmatpush1.msra.mxu0 0.0
    %2597 = vmatprep.subr.mxu0 0.0
    %2598 = vmatpush1.msra.mxu0 0.0
    %2599 = vmatprep.subr.mxu0 0.0
    %2600 = vmatpush1.msra.mxu0 0.0
    %2601 = vmatprep.subr.mxu0 0.0
    %2602 = vmatpush1.msra.mxu0 0.0
    %2603 = vmatprep.subr.mxu0 0.0
    %2604 = vmatpush1.msra.mxu0 0.0
    %2605 = vmatprep.subr.mxu0 0.0
    %2606 = vmatpush1.msra.mxu0 0.0
    %2607 = vmatprep.subr.mxu0 0.0
    %2608 = vmatpush1.msra.mxu0 0.0
    %2609 = vmatprep.subr.mxu0 0.0
    %2610 = vmatpush1.msra.mxu0 0.0
    %2611 = vmatprep.subr.mxu0 0.0
    %2612 = vmatpush1.msra.mxu0 0.0
    %2613 = vmatprep.subr.mxu0 0.0
    %2614 = vmatpush1.msra.mxu0 0.0
    %2615 = vmatprep.subr.mxu0 0.0
    %2616 = vmatpush1.msra.mxu0 0.0
    %2617 = vmatprep.subr.mxu0 0.0
    %2618 = vmatpush1.msra.mxu0 0.0
    %2619 = vmatprep.subr.mxu0 0.0
    %2620 = vmatpush1.msra.mxu0 %v2584
    %2621 = vmatprep.subr.mxu0 0.0
    %2622 = vmatpush1.msra.mxu0 %v2583
    %2623 = vmatprep.subr.mxu0 0.0
    %2624 = vmatpush1.msra.mxu0 %v2582
    %2625 = vmatprep.subr.mxu0 0.0
    %2626 = vmatpush1.msra.mxu0 %v2581
    %2627 = vmatprep.subr.mxu0 0.0
    %2628 = vmatpush2.msra.mxu0 0.0
    %2629 = vmatprep.subr.mxu0 0.0
    %2630 = vmatpush2.msra.mxu0 0.0
    %2631 = vmatprep.subr.mxu0 0.0
    %2632 = vmatpush2.msra.mxu0 0.0
    %2633 = vmatprep.subr.mxu0 0.0
    %2634 = vmatpush2.msra.mxu0 0.0
    %2635 = vmatprep.subr.mxu0 0.0
    %2636 = vmatpush2.msra.mxu0 0.0
    %2637 = vmatprep.subr.mxu0 0.0
    %2638 = vmatpush2.msra.mxu0 0.0
    %2639 = vmatprep.subr.mxu0 0.0
    %2640 = vmatpush2.msra.mxu0 0.0
    %2641 = vmatprep.subr.mxu0 0.0
    %2642 = vmatpush2.msra.mxu0 0.0
    %2643 = vmatprep.subr.mxu0 0.0
    %2644 = vmatpush2.msra.mxu0 0.0
    %2645 = vmatprep.subr.mxu0 0.0
    %2646 = vmatpush2.msra.mxu0 0.0
    %2647 = vmatprep.subr.mxu0 0.0
    %2648 = vmatpush2.msra.mxu0 0.0
    %2649 = vmatprep.subr.mxu0 0.0
    %2650 = vmatpush2.msra.mxu0 0.0
    %2651 = vmatprep.subr.mxu0 0.0
    %2652 = vmatpush2.msra.mxu0 0.0
    %2653 = vmatprep.subr.mxu0 0.0
    %2654 = vmatpush2.msra.mxu0 0.0
    %2655 = vmatprep.subr.mxu0 0.0
    %2656 = vmatpush2.msra.mxu0 0.0
    %2657 = vmatprep.subr.mxu0 0.0
    %2658 = vmatpush2.msra.mxu0 0.0
    %2659 = vmatprep.mubr.f32.mxu0 0.0
    %2660 = vmatmul.mubr.f32.gmra.mxu0 %v2593
    %v2661 = vpop.f32.mrf.mxu0
    %v2662 = vadd.f32 %v2590, %v2661
    %v2663 = vpop.f32.mrf.mxu0
    %2664 = vdwg.mxu0
    %v2665 = vtanh.pop %v2662
    %v2666 = vld [vmem:[%s20] sm:$0xff]
    %v2667 = vld [vmem:[%s20 + $0x8] sm:$0xff]
    %v2668 = vld [vmem:[%s20 + $0x10] sm:$0xff]
    %v2669 = vld [vmem:[%s20 + $0x18] sm:$0xff]
    %v2670 = vld [vmem:[%s21] sm:$0x1]
    %v2672 = vlaneseq
    %v2673 = vshrl.u32 %v2672, 7
    %v2674 = vsub.s32 0, %v2673
    %v2675 = vrot.slane %v2670, %v2674
    %v2678 = vsel %vm190, %v2665, 0
    %2680 = vmatprep.subr.mxu0 0.0
    %2681 = vmatpush1.msra.mxu0 0.0
    %2682 = vmatprep.subr.mxu0 0.0
    %2683 = vmatpush1.msra.mxu0 0.0
    %2684 = vmatprep.subr.mxu0 0.0
    %2685 = vmatpush1.msra.mxu0 0.0
    %2686 = vmatprep.subr.mxu0 0.0
    %2687 = vmatpush1.msra.mxu0 0.0
    %2688 = vmatprep.subr.mxu0 0.0
    %2689 = vmatpush1.msra.mxu0 0.0
    %2690 = vmatprep.subr.mxu0 0.0
    %2691 = vmatpush1.msra.mxu0 0.0
    %2692 = vmatprep.subr.mxu0 0.0
    %2693 = vmatpush1.msra.mxu0 0.0
    %2694 = vmatprep.subr.mxu0 0.0
    %2695 = vmatpush1.msra.mxu0 0.0
    %2696 = vmatprep.subr.mxu0 0.0
    %2697 = vmatpush1.msra.mxu0 0.0
    %2698 = vmatprep.subr.mxu0 0.0
    %2699 = vmatpush1.msra.mxu0 0.0
    %2700 = vmatprep.subr.mxu0 0.0
    %2701 = vmatpush1.msra.mxu0 0.0
    %2702 = vmatprep.subr.mxu0 0.0
    %2703 = vmatpush1.msra.mxu0 0.0
    %2704 = vmatprep.subr.mxu0 0.0
    %2705 = vmatpush1.msra.mxu0 %v2669
    %2706 = vmatprep.subr.mxu0 0.0
    %2707 = vmatpush1.msra.mxu0 %v2668
    %2708 = vmatprep.subr.mxu0 0.0
    %2709 = vmatpush1.msra.mxu0 %v2667
    %2710 = vmatprep.subr.mxu0 0.0
    %2711 = vmatpush1.msra.mxu0 %v2666
    %2712 = vmatprep.subr.mxu0 0.0
    %2713 = vmatpush2.msra.mxu0 0.0
    %2714 = vmatprep.subr.mxu0 0.0
    %2715 = vmatpush2.msra.mxu0 0.0
    %2716 = vmatprep.subr.mxu0 0.0
    %2717 = vmatpush2.msra.mxu0 0.0
    %2718 = vmatprep.subr.mxu0 0.0
    %2719 = vmatpush2.msra.mxu0 0.0
    %2720 = vmatprep.subr.mxu0 0.0
    %2721 = vmatpush2.msra.mxu0 0.0
    %2722 = vmatprep.subr.mxu0 0.0
    %2723 = vmatpush2.msra.mxu0 0.0
    %2724 = vmatprep.subr.mxu0 0.0
    %2725 = vmatpush2.msra.mxu0 0.0
    %2726 = vmatprep.subr.mxu0 0.0
    %2727 = vmatpush2.msra.mxu0 0.0
    %2728 = vmatprep.subr.mxu0 0.0
    %2729 = vmatpush2.msra.mxu0 0.0
    %2730 = vmatprep.subr.mxu0 0.0
    %2731 = vmatpush2.msra.mxu0 0.0
    %2732 = vmatprep.subr.mxu0 0.0
    %2733 = vmatpush2.msra.mxu0 0.0
    %2734 = vmatprep.subr.mxu0 0.0
    %2735 = vmatpush2.msra.mxu0 0.0
    %2736 = vmatprep.subr.mxu0 0.0
    %2737 = vmatpush2.msra.mxu0 0.0
    %2738 = vmatprep.subr.mxu0 0.0
    %2739 = vmatpush2.msra.mxu0 0.0
    %2740 = vmatprep.subr.mxu0 0.0
    %2741 = vmatpush2.msra.mxu0 0.0
    %2742 = vmatprep.subr.mxu0 0.0
    %2743 = vmatpush2.msra.mxu0 0.0
    %2744 = vmatprep.mubr.f32.mxu0 0.0
    %2745 = vmatmul.mubr.f32.gmra.mxu0 %v2678
    %v2746 = vpop.f32.mrf.mxu0
    %v2747 = vadd.f32 %v2675, %v2746
    %v2748 = vpop.f32.mrf.mxu0
    %2749 = vdwg.mxu0
    %vm2750 = vcmask 17408
    %2751 = vst.msk [vmem:[#allocation2] sm:$0x3] %vm2750, %v2747
    // Predicated region
    $region90: #{tpu_custom_call.1} parent=1 // pred_check
      _
    $region91: #{tpu_custom_call.1} parent=1 // pred_check_branch
      %2753 = sbr.rel (0) target = $region93
    $region92: #{tpu_custom_call.1} parent=1 // pred_region
      %s2755 = ssub.s32 32, 32
      %2756 = vsyncadd [#allocation3], %s2755
      %s2758 = sshll.u32 [#allocation2], 4
      %s2759 = int_to_ptr.vmem [resolvable:$true] %s2758
      %2761 = dma.vmem_to_hbm [thread:$0]  %s2759, 32, %s22, [#allocation3]
    $region93: #{tpu_custom_call.1} parent=1 // pred_fallthru
      _
    // Predicated region
    $region94: #{tpu_custom_call.1} parent=1 // pred_check
      _
    $region95: #{tpu_custom_call.1} parent=1 // pred_check_branch
      %2763 = sbr.rel (0) target = $region97
    $region96: #{tpu_custom_call.1} parent=1 // pred_region
      %2764 = dma.done [#allocation3], 32
    $region97: #{tpu_custom_call.1} parent=1 // pred_fallthru
      _
    %2765 = vsyncpa [#allocation3], 1

</llo_original>
